<compile_context>
chip_gen: v7x
topology: tpu7x:2x2x1
jax: 0.10.0
libtpu: 0.0.40
codegen_flags: <defaults>
</compile_context>

<pallas_src>
import functools

import jax
import jax.numpy as jnp
from jax.experimental import pallas as pl
from jax.experimental.pallas import tpu as pltpu

NEG_SLOPE = 0.2    # PyG GATConv default negative_slope
LANE = 128         # lane width / feature padding
TM = 128           # target-node tile (bump to 256-512 rows for large graphs)
TS = 128           # source-node tile
VMEM_LIMIT = 32 * 1024 * 1024


def _round_up(x, m):
    return (x + m - 1) // m * m


# --------------------------------------------------------------------------- #
# Kernel 1: linear transform  xp = (relu?)(x) @ W   (bf16 MXU, f32 acc, bf16   #
# output so the attention kernel streams half the bytes)                       #
# --------------------------------------------------------------------------- #
def _transform_kernel(x_ref, w_ref, xp_ref, *, input_relu):
    x = x_ref[...]
    if input_relu:                       # fuse previous layer's ReLU
        x = jnp.maximum(x, 0.0)
    acc = jnp.dot(x.astype(jnp.bfloat16),
                  w_ref[...].astype(jnp.bfloat16),
                  preferred_element_type=jnp.float32)
    xp_ref[...] = acc.astype(jnp.bfloat16)


def _transform(x, w, *, input_relu):
    n_pad, fi_pad = x.shape
    fo_pad = w.shape[1]
    return pl.pallas_call(
        functools.partial(_transform_kernel, input_relu=input_relu),
        out_shape=jax.ShapeDtypeStruct((n_pad, fo_pad), jnp.bfloat16),
        grid_spec=pltpu.PrefetchScalarGridSpec(
            num_scalar_prefetch=0,
            grid=(n_pad // TM,),
            in_specs=[pl.BlockSpec((TM, fi_pad), lambda i: (i, 0)),
                      pl.BlockSpec((fi_pad, fo_pad), lambda i: (0, 0))],
            out_specs=pl.BlockSpec((TM, fo_pad), lambda i: (i, 0)),
        ),
        compiler_params=pltpu.CompilerParams(
            dimension_semantics=("parallel",),
            vmem_limit_bytes=VMEM_LIMIT),
    )(x, w)


# --------------------------------------------------------------------------- #
# Kernel 2: masked attention softmax + aggregation (online softmax over source #
# tiles; divide after aggregation; bias add fused)                             #
# --------------------------------------------------------------------------- #
def _gat_attention_kernel(xp_t_ref, xp_s_ref, adj_ref, att_ref, out_ref,
                          m_sc, l_sc, acc_sc):
    s = pl.program_id(1)

    @pl.when(s == 0)
    def _init():
        m_sc[...] = jnp.full(m_sc.shape, -1e30, jnp.float32)
        l_sc[...] = jnp.zeros(l_sc.shape, jnp.float32)
        acc_sc[...] = jnp.zeros(acc_sc.shape, jnp.float32)

    xp_t = xp_t_ref[...]                           # [TM, Fo] bf16 target-tile features
    xp_s = xp_s_ref[...]                           # [TS, Fo] bf16 source-tile features
    a_dst = att_ref[0:1, :]                        # [1, Fo] f32
    a_src = att_ref[1:2, :]                        # [1, Fo] f32

    # target logits: VPU multiply + lane reduce -> [TM, 1]  (f32 math; v5e has no bf16 VPU)
    adst = jnp.sum(xp_t.astype(jnp.float32) * a_dst, axis=-1, keepdims=True)
    # source logits produced lane-major [1, TS] (contracting einsum; no transpose)
    asrc = jnp.einsum("of,sf->os", a_src.astype(jnp.bfloat16), xp_s,
                      preferred_element_type=jnp.float32)

    e = adst + asrc                                # [TM, TS]
    e = jnp.where(e >= 0, e, NEG_SLOPE * e)        # leaky_relu(., 0.2)

    # online softmax; block max from unmasked logits (shift-invariant); masking is
    # the single multiply by the 0/1 adjacency block (self loops keep denom > 0).
    m_new = jnp.maximum(m_sc[...], jnp.max(e, axis=-1, keepdims=True))
    alpha = jnp.exp(m_sc[...] - m_new)
    p = jnp.exp(e - m_new) * adj_ref[...].astype(jnp.float32)
    l_sc[...] = alpha * l_sc[...] + jnp.sum(p, axis=-1, keepdims=True)
    # aggregation on the MXU with bf16 operands, f32 accumulation
    acc_sc[...] = alpha * acc_sc[...] + jnp.dot(p.astype(jnp.bfloat16), xp_s,
                                                preferred_element_type=jnp.float32)
    m_sc[...] = m_new

    @pl.when(s == pl.num_programs(1) - 1)
    def _finalize():
        bias = att_ref[2:3, :]
        out_ref[...] = acc_sc[...] * pl.reciprocal(l_sc[...], approx=True) + bias


def _gat_attention(xp, adj, att_pack):
    n_pad, fo_pad = xp.shape
    return pl.pallas_call(
        _gat_attention_kernel,
        out_shape=jax.ShapeDtypeStruct((n_pad, fo_pad), jnp.float32),
        grid_spec=pltpu.PrefetchScalarGridSpec(
            num_scalar_prefetch=0,
            grid=(n_pad // TM, n_pad // TS),
            in_specs=[
                pl.BlockSpec((TM, fo_pad), lambda t, s: (t, 0)),   # xp, target tile (bf16)
                pl.BlockSpec((TS, fo_pad), lambda t, s: (s, 0)),   # xp, source tile (bf16)
                pl.BlockSpec((TM, TS), lambda t, s: (t, s)),       # adjacency block (bf16)
                pl.BlockSpec((8, fo_pad), lambda t, s: (0, 0)),    # packed a_dst/a_src/bias
            ],
            out_specs=pl.BlockSpec((TM, fo_pad), lambda t, s: (t, 0)),
            scratch_shapes=[pltpu.VMEM((TM, 1), jnp.float32),        # running max
                            pltpu.VMEM((TM, 1), jnp.float32),        # running denom
                            pltpu.VMEM((TM, fo_pad), jnp.float32)],  # running acc
        ),
        compiler_params=pltpu.CompilerParams(
            dimension_semantics=("parallel", "arbitrary"),
            vmem_limit_bytes=VMEM_LIMIT),
    )(xp, xp, adj, att_pack)


def _gat_layer(x, adj, layer_params, *, input_relu):
    xp = _transform(x, layer_params["w"], input_relu=input_relu)
    return _gat_attention(xp, adj, layer_params["att"])


def graph_autoencoder(x_pad, adj_pad, params):
    """x_pad: [N_pad, 128] f32, adj_pad: [N_pad, N_pad] bf16 0/1 mask (adj[i,j]=1 iff edge j->i)."""
    x1 = _gat_layer(x_pad, adj_pad, params[0], input_relu=False)   # enc1
    h = _gat_layer(x1, adj_pad, params[1], input_relu=True)        # enc2 (ReLU of enc1 fused)
    x3 = _gat_layer(h, adj_pad, params[2], input_relu=True)        # dec1 (ReLU of h fused)
    out = _gat_layer(x3, adj_pad, params[3], input_relu=True)      # dec2 (no trailing activation)
    return out, h


# --------------------------------------------------------------------------- #
# Host-side glue: adjacency construction, parameter init/padding, reference    #
# --------------------------------------------------------------------------- #
def build_dense_adj(edge_index, num_nodes_pad):
    """edge_index: [2, E] int32 (row 0 = source, row 1 = target). Self loops on every
    (incl. padded) node: matches GATConv add_self_loops for real nodes and keeps the
    padded rows finite (they are masked out of every real row and sliced away)."""
    src, dst = edge_index[0], edge_index[1]
    adj = jnp.zeros((num_nodes_pad, num_nodes_pad), jnp.float32)
    adj = adj.at[dst, src].set(1.0)
    diag = jnp.arange(num_nodes_pad)
    adj = adj.at[diag, diag].set(1.0)
    return adj


def init_params(key, in_channels, hidden_channels):
    dims = [(in_channels, in_channels),        # enc1
            (in_channels, hidden_channels),    # enc2
            (hidden_channels, in_channels),    # dec1
            (in_channels, in_channels)]        # dec2
    params = []
    for li, (fi, fo) in enumerate(dims, start=1):
        kw, ks, kd = jax.random.split(jax.random.fold_in(key, li), 3)
        scale = 1.0 / jnp.sqrt(jnp.float32(fi))
        w = jax.random.normal(kw, (fi, fo), jnp.float32) * scale
        a_src = jax.random.normal(ks, (fo,), jnp.float32) * 0.5
        a_dst = jax.random.normal(kd, (fo,), jnp.float32) * 0.5
        b = jnp.zeros((fo,), jnp.float32)
        fi_pad, fo_pad = _round_up(fi, LANE), _round_up(fo, LANE)
        w_pad = jnp.zeros((fi_pad, fo_pad), jnp.float32).at[:fi, :fo].set(w)
        att = jnp.zeros((8, fo_pad), jnp.float32)
        att = att.at[0, :fo].set(a_dst).at[1, :fo].set(a_src).at[2, :fo].set(b)
        params.append({"w": w_pad, "att": att})
    return params


def _reference_layer(x, adj, w, a_dst, a_src, b):
    """Dense (non-tiled) version of the same math, for the correctness check."""
    xp = jnp.dot(x.astype(jnp.bfloat16), w.astype(jnp.bfloat16),
                 preferred_element_type=jnp.float32).astype(jnp.bfloat16)
    xp_f32 = xp.astype(jnp.float32)
    adst = jnp.sum(xp_f32 * a_dst, axis=-1, keepdims=True)
    asrc = jnp.sum(xp_f32 * a_src, axis=-1, keepdims=True)
    e = adst + asrc.T
    e = jnp.where(e >= 0, e, NEG_SLOPE * e)
    m = jnp.max(e, axis=-1, keepdims=True)      # unmasked max (softmax shift-invariant)
    p = jnp.exp(e - m) * adj
    denom = jnp.sum(p, axis=-1, keepdims=True)
    agg = jnp.dot(p.astype(jnp.bfloat16), xp, preferred_element_type=jnp.float32)
    return agg / denom + b


def reference_forward(x, adj, params):
    def rows(att):
        return att[0:1, :], att[1:2, :], att[2:3, :]
    a_d, a_s, b = rows(params[0]["att"])
    x1 = _reference_layer(x, adj, params[0]["w"], a_d, a_s, b)
    a_d, a_s, b = rows(params[1]["att"])
    h = _reference_layer(jnp.maximum(x1, 0.0), adj, params[1]["w"], a_d, a_s, b)
    a_d, a_s, b = rows(params[2]["att"])
    x3 = _reference_layer(jnp.maximum(h, 0.0), adj, params[2]["w"], a_d, a_s, b)
    a_d, a_s, b = rows(params[3]["att"])
    out = _reference_layer(jnp.maximum(x3, 0.0), adj, params[3]["w"], a_d, a_s, b)
    return out, h


if __name__ == "__main__":
    N = 200               # real nodes (pads to 256 -> 2x2 grid of 128-tiles)
    IN_CHANNELS = 8
    HIDDEN_CHANNELS = 4
    E = 600               # directed edges

    key = jax.random.PRNGKey(0)
    kx, ke, kp = jax.random.split(key, 3)

    n_pad = _round_up(max(N, TM), TM)
    x = jax.random.normal(kx, (N, IN_CHANNELS), jnp.float32)
    x_pad = jnp.zeros((n_pad, LANE), jnp.float32).at[:N, :IN_CHANNELS].set(x)

    edge_index = jax.random.randint(ke, (2, E), 0, N, dtype=jnp.int32)
    adj_f32 = build_dense_adj(edge_index, n_pad)      # f32 for the reference
    adj_bf16 = adj_f32.astype(jnp.bfloat16)           # bf16 0/1 mask for the kernels

    params = init_params(kp, IN_CHANNELS, HIDDEN_CHANNELS)

    fwd = jax.jit(graph_autoencoder)
    out_pad, h_pad = fwd(x_pad, adj_bf16, params)
    out_pad = jax.block_until_ready(out_pad)
    h_pad = jax.block_until_ready(h_pad)

    out = out_pad[:N, :IN_CHANNELS]
    h = h_pad[:N, :HIDDEN_CHANNELS]

    ref_out_pad, ref_h_pad = reference_forward(x_pad, adj_f32, params)
    ref_out = ref_out_pad[:N, :IN_CHANNELS]
    ref_h = ref_h_pad[:N, :HIDDEN_CHANNELS]

    assert out.shape == (N, IN_CHANNELS) and h.shape == (N, HIDDEN_CHANNELS)
    assert jnp.allclose(out, ref_out, atol=2e-2, rtol=2e-2), \
        float(jnp.max(jnp.abs(out - ref_out)))
    assert jnp.allclose(h, ref_h, atol=2e-2, rtol=2e-2), \
        float(jnp.max(jnp.abs(h - ref_h)))

    print("KERNEL_OK")
</pallas_src>

<mosaic_0001>
module attributes {stable_mosaic.version = 11 : i64} {
  func.func @_gat_attention_kernel(%arg0: i32, %arg1: i32, %arg2: memref<128x128xbf16, #tpu.memory_space<vmem>>, %arg3: memref<128x128xbf16, #tpu.memory_space<vmem>>, %arg4: memref<128x128xbf16, #tpu.memory_space<vmem>>, %arg5: memref<8x128xf32, #tpu.memory_space<vmem>>, %arg6: memref<128x128xf32, #tpu.memory_space<vmem>>, %arg7: memref<128x1xf32, #tpu.memory_space<vmem>>, %arg8: memref<128x1xf32, #tpu.memory_space<vmem>>, %arg9: memref<128x128xf32, #tpu.memory_space<vmem>>) attributes {dimension_semantics = [#tpu.dimension_semantics<parallel>, #tpu.dimension_semantics<arbitrary>], iteration_bounds = array<i64: 2, 2>, scalar_prefetch = 0 : i64, scratch_operands = 3 : i64, tpu.core_type = #tpu.core_type<tc>, window_params = [{transform_indices = @transform_0, window_bounds = array<i64: 128, 128>}, {transform_indices = @transform_1, window_bounds = array<i64: 128, 128>}, {transform_indices = @transform_2, window_bounds = array<i64: 128, 128>}, {pipeline_mode = #tpu.pipeline_mode<synchronous>, transform_indices = @transform_3, window_bounds = array<i64: 8, 128>}, {transform_indices = @transform_4, window_bounds = array<i64: 128, 128>}]} {
    %c0_i32 = arith.constant 0 : i32
    %0 = arith.cmpi eq, %arg1, %c0_i32 : i32
    %1 = arith.extui %0 : i1 to i32
    %c0_i32_0 = arith.constant 0 : i32
    %2 = arith.cmpi ne, %1, %c0_i32_0 : i32
    scf.if %2 {
      %cst_30 = arith.constant -1.000000e+30 : f32
      %52 = vector.broadcast %cst_30 : f32 to vector<128x1xf32>
      %c0_31 = arith.constant 0 : index
      %c0_32 = arith.constant 0 : index
      %53 = vector.load %arg7[%c0_31, %c0_32] : memref<128x1xf32, #tpu.memory_space<vmem>>, vector<128x1xf32>
      tpu.vector_store %arg7[%c0_31, %c0_32], %52 {strides = array<i32>} : memref<128x1xf32, #tpu.memory_space<vmem>>, vector<128x1xf32>,
      %cst_33 = arith.constant 0.000000e+00 : f32
      %54 = vector.broadcast %cst_33 : f32 to vector<128x1xf32>
      %c0_34 = arith.constant 0 : index
      %c0_35 = arith.constant 0 : index
      %55 = vector.load %arg8[%c0_34, %c0_35] : memref<128x1xf32, #tpu.memory_space<vmem>>, vector<128x1xf32>
      tpu.vector_store %arg8[%c0_34, %c0_35], %54 {strides = array<i32>} : memref<128x1xf32, #tpu.memory_space<vmem>>, vector<128x1xf32>,
      %cst_36 = arith.constant 0.000000e+00 : f32
      %56 = vector.broadcast %cst_36 : f32 to vector<128x128xf32>
      %c0_37 = arith.constant 0 : index
      %c0_38 = arith.constant 0 : index
      %57 = vector.load %arg9[%c0_37, %c0_38] : memref<128x128xf32, #tpu.memory_space<vmem>>, vector<128x128xf32>
      tpu.vector_store %arg9[%c0_37, %c0_38], %56 {strides = array<i32>} : memref<128x128xf32, #tpu.memory_space<vmem>>, vector<128x128xf32>,
    } else {
    }
    %c0 = arith.constant 0 : index
    %c0_1 = arith.constant 0 : index
    %3 = vector.load %arg2[%c0, %c0_1] : memref<128x128xbf16, #tpu.memory_space<vmem>>, vector<128x128xbf16>
    %c0_2 = arith.constant 0 : index
    %c0_3 = arith.constant 0 : index
    %4 = vector.load %arg3[%c0_2, %c0_3] : memref<128x128xbf16, #tpu.memory_space<vmem>>, vector<128x128xbf16>
    %c0_4 = arith.constant 0 : index
    %c0_5 = arith.constant 0 : index
    %5 = vector.load %arg5[%c0_4, %c0_5] : memref<8x128xf32, #tpu.memory_space<vmem>>, vector<1x128xf32>
    %c1 = arith.constant 1 : index
    %c0_6 = arith.constant 0 : index
    %6 = vector.load %arg5[%c1, %c0_6] : memref<8x128xf32, #tpu.memory_space<vmem>>, vector<1x128xf32>
    %7 = arith.extf %3 : vector<128x128xbf16> to vector<128x128xf32>
    %8 = vector.broadcast %5 : vector<1x128xf32> to vector<128x128xf32>
    %9 = arith.mulf %7, %8 : vector<128x128xf32>
    %cst = arith.constant dense<0.000000e+00> : vector<128xf32>
    %10 = vector.multi_reduction <add>, %9, %cst [1] : vector<128x128xf32> to vector<128xf32>
    %11 = vector.shape_cast %10 : vector<128xf32> to vector<128x1xf32>
    %12 = arith.truncf %6 : vector<1x128xf32> to vector<1x128xbf16>
    "tpu.trace_start"() <{level = 10 : i32, message = "of,sf->os"}> : () -> ()
    %cst_7 = arith.constant dense<0.000000e+00> : vector<1x128xf32>
    %13 = tpu.matmul %12, %4, %cst_7 {dimension_numbers = #tpu.dot_dimension_numbers<[1], [1], [0], [0], [0, 0, 1, 0], [], []>} : vector<1x128xbf16>, vector<128x128xbf16>, vector<1x128xf32> -> vector<1x128xf32>
    "tpu.trace_stop"() : () -> ()
    %14 = vector.broadcast %11 : vector<128x1xf32> to vector<128x128xf32>
    %15 = vector.broadcast %13 : vector<1x128xf32> to vector<128x128xf32>
    %16 = arith.addf %14, %15 : vector<128x128xf32>
    %cst_8 = arith.constant 0.000000e+00 : f32
    %17 = vector.broadcast %cst_8 : f32 to vector<128x128xf32>
    %18 = arith.cmpf oge, %16, %17 : vector<128x128xf32>
    %cst_9 = arith.constant 2.000000e-01 : f32
    %19 = vector.broadcast %cst_9 : f32 to vector<128x128xf32>
    %20 = arith.mulf %19, %16 : vector<128x128xf32>
    %21 = arith.select %18, %16, %20 : vector<128x128xi1>, vector<128x128xf32>
    %c0_10 = arith.constant 0 : index
    %c0_11 = arith.constant 0 : index
    %22 = vector.load %arg7[%c0_10, %c0_11] : memref<128x1xf32, #tpu.memory_space<vmem>>, vector<128x1xf32>
    %cst_12 = arith.constant dense<0xFF800000> : vector<128xf32>
    %23 = vector.multi_reduction <maximumf>, %21, %cst_12 [1] : vector<128x128xf32> to vector<128xf32>
    %24 = vector.shape_cast %23 : vector<128xf32> to vector<128x1xf32>
    %25 = arith.maximumf %22, %24 : vector<128x1xf32>
    %c0_13 = arith.constant 0 : index
    %c0_14 = arith.constant 0 : index
    %26 = vector.load %arg7[%c0_13, %c0_14] : memref<128x1xf32, #tpu.memory_space<vmem>>, vector<128x1xf32>
    %27 = arith.subf %26, %25 : vector<128x1xf32>
    %28 = math.exp %27 : vector<128x1xf32>
    %29 = vector.broadcast %25 : vector<128x1xf32> to vector<128x128xf32>
    %30 = arith.subf %21, %29 : vector<128x128xf32>
    %31 = math.exp %30 : vector<128x128xf32>
    %c0_15 = arith.constant 0 : index
    %c0_16 = arith.constant 0 : index
    %32 = vector.load %arg4[%c0_15, %c0_16] : memref<128x128xbf16, #tpu.memory_space<vmem>>, vector<128x128xbf16>
    %33 = arith.extf %32 : vector<128x128xbf16> to vector<128x128xf32>
    %34 = arith.mulf %31, %33 : vector<128x128xf32>
    %c0_17 = arith.constant 0 : index
    %c0_18 = arith.constant 0 : index
    %35 = vector.load %arg8[%c0_17, %c0_18] : memref<128x1xf32, #tpu.memory_space<vmem>>, vector<128x1xf32>
    %36 = arith.mulf %28, %35 : vector<128x1xf32>
    %cst_19 = arith.constant dense<0.000000e+00> : vector<128xf32>
    %37 = vector.multi_reduction <add>, %34, %cst_19 [1] : vector<128x128xf32> to vector<128xf32>
    %38 = vector.shape_cast %37 : vector<128xf32> to vector<128x1xf32>
    %39 = arith.addf %36, %38 : vector<128x1xf32>
    %c0_20 = arith.constant 0 : index
    %c0_21 = arith.constant 0 : index
    %40 = vector.load %arg8[%c0_20, %c0_21] : memref<128x1xf32, #tpu.memory_space<vmem>>, vector<128x1xf32>
    tpu.vector_store %arg8[%c0_20, %c0_21], %39 {strides = array<i32>} : memref<128x1xf32, #tpu.memory_space<vmem>>, vector<128x1xf32>,
    %c0_22 = arith.constant 0 : index
    %c0_23 = arith.constant 0 : index
    %41 = vector.load %arg9[%c0_22, %c0_23] : memref<128x128xf32, #tpu.memory_space<vmem>>, vector<128x128xf32>
    %42 = vector.broadcast %28 : vector<128x1xf32> to vector<128x128xf32>
    %43 = arith.mulf %42, %41 : vector<128x128xf32>
    %44 = arith.truncf %34 : vector<128x128xf32> to vector<128x128xbf16>
    %cst_24 = arith.constant dense<0.000000e+00> : vector<128x128xf32>
    %45 = tpu.matmul %44, %4, %cst_24 {dimension_numbers = #tpu.dot_dimension_numbers<[1], [0], [0], [1], [0, 0, 1, 1], [], []>} : vector<128x128xbf16>, vector<128x128xbf16>, vector<128x128xf32> -> vector<128x128xf32>
    %46 = arith.addf %43, %45 : vector<128x128xf32>
    %c0_25 = arith.constant 0 : index
    %c0_26 = arith.constant 0 : index
    %47 = vector.load %arg9[%c0_25, %c0_26] : memref<128x128xf32, #tpu.memory_space<vmem>>, vector<128x128xf32>
    tpu.vector_store %arg9[%c0_25, %c0_26], %46 {strides = array<i32>} : memref<128x128xf32, #tpu.memory_space<vmem>>, vector<128x128xf32>,
    %c0_27 = arith.constant 0 : index
    %c0_28 = arith.constant 0 : index
    %48 = vector.load %arg7[%c0_27, %c0_28] : memref<128x1xf32, #tpu.memory_space<vmem>>, vector<128x1xf32>
    tpu.vector_store %arg7[%c0_27, %c0_28], %25 {strides = array<i32>} : memref<128x1xf32, #tpu.memory_space<vmem>>, vector<128x1xf32>,
    %c1_i32 = arith.constant 1 : i32
    %49 = arith.cmpi eq, %arg1, %c1_i32 : i32
    %50 = arith.extui %49 : i1 to i32
    %c0_i32_29 = arith.constant 0 : i32
    %51 = arith.cmpi ne, %50, %c0_i32_29 : i32
    scf.if %51 {
      %c2 = arith.constant 2 : index
      %c0_30 = arith.constant 0 : index
      %52 = vector.load %arg5[%c2, %c0_30] : memref<8x128xf32, #tpu.memory_space<vmem>>, vector<1x128xf32>
      %c0_31 = arith.constant 0 : index
      %c0_32 = arith.constant 0 : index
      %53 = vector.load %arg9[%c0_31, %c0_32] : memref<128x128xf32, #tpu.memory_space<vmem>>, vector<128x128xf32>
      %c0_33 = arith.constant 0 : index
      %c0_34 = arith.constant 0 : index
      %54 = vector.load %arg8[%c0_33, %c0_34] : memref<128x1xf32, #tpu.memory_space<vmem>>, vector<128x1xf32>
      %55 = tpu.reciprocal %54 {approx = true} : vector<128x1xf32> -> vector<128x1xf32>
      %56 = vector.broadcast %55 : vector<128x1xf32> to vector<128x128xf32>
      %57 = arith.mulf %53, %56 : vector<128x128xf32>
      %58 = vector.broadcast %52 : vector<1x128xf32> to vector<128x128xf32>
      %59 = arith.addf %57, %58 : vector<128x128xf32>
      %c0_35 = arith.constant 0 : index
      %c0_36 = arith.constant 0 : index
      %60 = vector.load %arg6[%c0_35, %c0_36] : memref<128x128xf32, #tpu.memory_space<vmem>>, vector<128x128xf32>
      tpu.vector_store %arg6[%c0_35, %c0_36], %59 {strides = array<i32>} : memref<128x128xf32, #tpu.memory_space<vmem>>, vector<128x128xf32>,
    } else {
    }
    return
  }
  func.func @transform_0(%arg0: i32, %arg1: i32) -> (i32, i32) {
    %c0_i32 = arith.constant 0 : i32
    %c0_i32_0 = arith.constant 0 : i32
    return %arg0, %c0_i32 : i32, i32
  }
  func.func @transform_1(%arg0: i32, %arg1: i32) -> (i32, i32) {
    %c0_i32 = arith.constant 0 : i32
    %c0_i32_0 = arith.constant 0 : i32
    return %arg1, %c0_i32 : i32, i32
  }
  func.func @transform_2(%arg0: i32, %arg1: i32) -> (i32, i32) {
    %c0_i32 = arith.constant 0 : i32
    return %arg0, %arg1 : i32, i32
  }
  func.func @transform_3(%arg0: i32, %arg1: i32) -> (i32, i32) {
    %c0_i32 = arith.constant 0 : i32
    %c0_i32_0 = arith.constant 0 : i32
    %c0_i32_1 = arith.constant 0 : i32
    return %c0_i32, %c0_i32_0 : i32, i32
  }
  func.func @transform_4(%arg0: i32, %arg1: i32) -> (i32, i32) {
    %c0_i32 = arith.constant 0 : i32
    %c0_i32_0 = arith.constant 0 : i32
    return %arg0, %c0_i32 : i32, i32
  }
}

module attributes {stable_mosaic.version = 11 : i64} {
  func.func @_transform_kernel(%arg0: i32, %arg1: memref<128x128xf32, #tpu.memory_space<vmem>>, %arg2: memref<128x128xf32, #tpu.memory_space<vmem>>, %arg3: memref<128x128xbf16, #tpu.memory_space<vmem>>) attributes {dimension_semantics = [#tpu.dimension_semantics<parallel>], iteration_bounds = array<i64: 2>, scalar_prefetch = 0 : i64, scratch_operands = 0 : i64, tpu.core_type = #tpu.core_type<tc>, window_params = [{transform_indices = @transform_0, window_bounds = array<i64: 128, 128>}, {pipeline_mode = #tpu.pipeline_mode<synchronous>, transform_indices = @transform_1, window_bounds = array<i64: 128, 128>}, {transform_indices = @transform_2, window_bounds = array<i64: 128, 128>}]} {
    %c0 = arith.constant 0 : index
    %c0_0 = arith.constant 0 : index
    %0 = vector.load %arg1[%c0, %c0_0] : memref<128x128xf32, #tpu.memory_space<vmem>>, vector<128x128xf32>
    %1 = arith.truncf %0 : vector<128x128xf32> to vector<128x128xbf16>
    %c0_1 = arith.constant 0 : index
    %c0_2 = arith.constant 0 : index
    %2 = vector.load %arg2[%c0_1, %c0_2] : memref<128x128xf32, #tpu.memory_space<vmem>>, vector<128x128xf32>
    %3 = arith.truncf %2 : vector<128x128xf32> to vector<128x128xbf16>
    %cst = arith.constant dense<0.000000e+00> : vector<128x128xf32>
    %4 = tpu.matmul %1, %3, %cst {dimension_numbers = #tpu.dot_dimension_numbers<[1], [0], [0], [1], [0, 0, 1, 1], [], []>} : vector<128x128xbf16>, vector<128x128xbf16>, vector<128x128xf32> -> vector<128x128xf32>
    %5 = arith.truncf %4 : vector<128x128xf32> to vector<128x128xbf16>
    %c0_3 = arith.constant 0 : index
    %c0_4 = arith.constant 0 : index
    %6 = vector.load %arg3[%c0_3, %c0_4] : memref<128x128xbf16, #tpu.memory_space<vmem>>, vector<128x128xbf16>
    tpu.vector_store %arg3[%c0_3, %c0_4], %5 {strides = array<i32>} : memref<128x128xbf16, #tpu.memory_space<vmem>>, vector<128x128xbf16>,
    return
  }
  func.func @transform_0(%arg0: i32) -> (i32, i32) {
    %c0_i32 = arith.constant 0 : i32
    %c0_i32_0 = arith.constant 0 : i32
    return %arg0, %c0_i32 : i32, i32
  }
  func.func @transform_1(%arg0: i32) -> (i32, i32) {
    %c0_i32 = arith.constant 0 : i32
    %c0_i32_0 = arith.constant 0 : i32
    %c0_i32_1 = arith.constant 0 : i32
    return %c0_i32, %c0_i32_0 : i32, i32
  }
  func.func @transform_2(%arg0: i32) -> (i32, i32) {
    %c0_i32 = arith.constant 0 : i32
    %c0_i32_0 = arith.constant 0 : i32
    return %arg0, %c0_i32 : i32, i32
  }
}

module attributes {stable_mosaic.version = 11 : i64} {
  func.func @_transform_kernel(%arg0: i32, %arg1: memref<128x128xf32, #tpu.memory_space<vmem>>, %arg2: memref<128x128xf32, #tpu.memory_space<vmem>>, %arg3: memref<128x128xbf16, #tpu.memory_space<vmem>>) attributes {dimension_semantics = [#tpu.dimension_semantics<parallel>], iteration_bounds = array<i64: 2>, scalar_prefetch = 0 : i64, scratch_operands = 0 : i64, tpu.core_type = #tpu.core_type<tc>, window_params = [{transform_indices = @transform_0, window_bounds = array<i64: 128, 128>}, {pipeline_mode = #tpu.pipeline_mode<synchronous>, transform_indices = @transform_1, window_bounds = array<i64: 128, 128>}, {transform_indices = @transform_2, window_bounds = array<i64: 128, 128>}]} {
    %c0 = arith.constant 0 : index
    %c0_0 = arith.constant 0 : index
    %0 = vector.load %arg1[%c0, %c0_0] : memref<128x128xf32, #tpu.memory_space<vmem>>, vector<128x128xf32>
    %cst = arith.constant 0.000000e+00 : f32
    %1 = vector.broadcast %cst : f32 to vector<128x128xf32>
    %2 = arith.maximumf %0, %1 : vector<128x128xf32>
    %3 = arith.truncf %2 : vector<128x128xf32> to vector<128x128xbf16>
    %c0_1 = arith.constant 0 : index
    %c0_2 = arith.constant 0 : index
    %4 = vector.load %arg2[%c0_1, %c0_2] : memref<128x128xf32, #tpu.memory_space<vmem>>, vector<128x128xf32>
    %5 = arith.truncf %4 : vector<128x128xf32> to vector<128x128xbf16>
    %cst_3 = arith.constant dense<0.000000e+00> : vector<128x128xf32>
    %6 = tpu.matmul %3, %5, %cst_3 {dimension_numbers = #tpu.dot_dimension_numbers<[1], [0], [0], [1], [0, 0, 1, 1], [], []>} : vector<128x128xbf16>, vector<128x128xbf16>, vector<128x128xf32> -> vector<128x128xf32>
    %7 = arith.truncf %6 : vector<128x128xf32> to vector<128x128xbf16>
    %c0_4 = arith.constant 0 : index
    %c0_5 = arith.constant 0 : index
    %8 = vector.load %arg3[%c0_4, %c0_5] : memref<128x128xbf16, #tpu.memory_space<vmem>>, vector<128x128xbf16>
    tpu.vector_store %arg3[%c0_4, %c0_5], %7 {strides = array<i32>} : memref<128x128xbf16, #tpu.memory_space<vmem>>, vector<128x128xbf16>,
    return
  }
  func.func @transform_0(%arg0: i32) -> (i32, i32) {
    %c0_i32 = arith.constant 0 : i32
    %c0_i32_0 = arith.constant 0 : i32
    return %arg0, %c0_i32 : i32, i32
  }
  func.func @transform_1(%arg0: i32) -> (i32, i32) {
    %c0_i32 = arith.constant 0 : i32
    %c0_i32_0 = arith.constant 0 : i32
    %c0_i32_1 = arith.constant 0 : i32
    return %c0_i32, %c0_i32_0 : i32, i32
  }
  func.func @transform_2(%arg0: i32) -> (i32, i32) {
    %c0_i32 = arith.constant 0 : i32
    %c0_i32_0 = arith.constant 0 : i32
    return %arg0, %c0_i32 : i32, i32
  }
}

module attributes {stable_mosaic.version = 11 : i64} {
  func.func @_gat_attention_kernel(%arg0: i32, %arg1: i32, %arg2: memref<128x128xbf16, #tpu.memory_space<vmem>>, %arg3: memref<128x128xbf16, #tpu.memory_space<vmem>>, %arg4: memref<128x128xbf16, #tpu.memory_space<vmem>>, %arg5: memref<8x128xf32, #tpu.memory_space<vmem>>, %arg6: memref<128x128xf32, #tpu.memory_space<vmem>>, %arg7: memref<128x1xf32, #tpu.memory_space<vmem>>, %arg8: memref<128x1xf32, #tpu.memory_space<vmem>>, %arg9: memref<128x128xf32, #tpu.memory_space<vmem>>) attributes {dimension_semantics = [#tpu.dimension_semantics<parallel>, #tpu.dimension_semantics<arbitrary>], iteration_bounds = array<i64: 2, 2>, scalar_prefetch = 0 : i64, scratch_operands = 3 : i64, tpu.core_type = #tpu.core_type<tc>, window_params = [{transform_indices = @transform_0, window_bounds = array<i64: 128, 128>}, {transform_indices = @transform_1, window_bounds = array<i64: 128, 128>}, {transform_indices = @transform_2, window_bounds = array<i64: 128, 128>}, {pipeline_mode = #tpu.pipeline_mode<synchronous>, transform_indices = @transform_3, window_bounds = array<i64: 8, 128>}, {transform_indices = @transform_4, window_bounds = array<i64: 128, 128>}]} {
    %c0_i32 = arith.constant 0 : i32
    %0 = arith.cmpi eq, %arg1, %c0_i32 : i32
    %1 = arith.extui %0 : i1 to i32
    %c0_i32_0 = arith.constant 0 : i32
    %2 = arith.cmpi ne, %1, %c0_i32_0 : i32
    scf.if %2 {
      %cst_30 = arith.constant -1.000000e+30 : f32
      %52 = vector.broadcast %cst_30 : f32 to vector<128x1xf32>
      %c0_31 = arith.constant 0 : index
      %c0_32 = arith.constant 0 : index
      %53 = vector.load %arg7[%c0_31, %c0_32] : memref<128x1xf32, #tpu.memory_space<vmem>>, vector<128x1xf32>
      tpu.vector_store %arg7[%c0_31, %c0_32], %52 {strides = array<i32>} : memref<128x1xf32, #tpu.memory_space<vmem>>, vector<128x1xf32>,
      %cst_33 = arith.constant 0.000000e+00 : f32
      %54 = vector.broadcast %cst_33 : f32 to vector<128x1xf32>
      %c0_34 = arith.constant 0 : index
      %c0_35 = arith.constant 0 : index
      %55 = vector.load %arg8[%c0_34, %c0_35] : memref<128x1xf32, #tpu.memory_space<vmem>>, vector<128x1xf32>
      tpu.vector_store %arg8[%c0_34, %c0_35], %54 {strides = array<i32>} : memref<128x1xf32, #tpu.memory_space<vmem>>, vector<128x1xf32>,
      %cst_36 = arith.constant 0.000000e+00 : f32
      %56 = vector.broadcast %cst_36 : f32 to vector<128x128xf32>
      %c0_37 = arith.constant 0 : index
      %c0_38 = arith.constant 0 : index
      %57 = vector.load %arg9[%c0_37, %c0_38] : memref<128x128xf32, #tpu.memory_space<vmem>>, vector<128x128xf32>
      tpu.vector_store %arg9[%c0_37, %c0_38], %56 {strides = array<i32>} : memref<128x128xf32, #tpu.memory_space<vmem>>, vector<128x128xf32>,
    } else {
    }
    %c0 = arith.constant 0 : index
    %c0_1 = arith.constant 0 : index
    %3 = vector.load %arg2[%c0, %c0_1] : memref<128x128xbf16, #tpu.memory_space<vmem>>, vector<128x128xbf16>
    %c0_2 = arith.constant 0 : index
    %c0_3 = arith.constant 0 : index
    %4 = vector.load %arg3[%c0_2, %c0_3] : memref<128x128xbf16, #tpu.memory_space<vmem>>, vector<128x128xbf16>
    %c0_4 = arith.constant 0 : index
    %c0_5 = arith.constant 0 : index
    %5 = vector.load %arg5[%c0_4, %c0_5] : memref<8x128xf32, #tpu.memory_space<vmem>>, vector<1x128xf32>
    %c1 = arith.constant 1 : index
    %c0_6 = arith.constant 0 : index
    %6 = vector.load %arg5[%c1, %c0_6] : memref<8x128xf32, #tpu.memory_space<vmem>>, vector<1x128xf32>
    %7 = arith.extf %3 : vector<128x128xbf16> to vector<128x128xf32>
    %8 = vector.broadcast %5 : vector<1x128xf32> to vector<128x128xf32>
    %9 = arith.mulf %7, %8 : vector<128x128xf32>
    %cst = arith.constant dense<0.000000e+00> : vector<128xf32>
    %10 = vector.multi_reduction <add>, %9, %cst [1] : vector<128x128xf32> to vector<128xf32>
    %11 = vector.shape_cast %10 : vector<128xf32> to vector<128x1xf32>
    %12 = arith.truncf %6 : vector<1x128xf32> to vector<1x128xbf16>
    "tpu.trace_start"() <{level = 10 : i32, message = "of,sf->os"}> : () -> ()
    %cst_7 = arith.constant dense<0.000000e+00> : vector<1x128xf32>
    %13 = tpu.matmul %12, %4, %cst_7 {dimension_numbers = #tpu.dot_dimension_numbers<[1], [1], [0], [0], [0, 0, 1, 0], [], []>} : vector<1x128xbf16>, vector<128x128xbf16>, vector<1x128xf32> -> vector<1x128xf32>
    "tpu.trace_stop"() : () -> ()
    %14 = vector.broadcast %11 : vector<128x1xf32> to vector<128x128xf32>
    %15 = vector.broadcast %13 : vector<1x128xf32> to vector<128x128xf32>
    %16 = arith.addf %14, %15 : vector<128x128xf32>
    %cst_8 = arith.constant 0.000000e+00 : f32
    %17 = vector.broadcast %cst_8 : f32 to vector<128x128xf32>
    %18 = arith.cmpf oge, %16, %17 : vector<128x128xf32>
    %cst_9 = arith.constant 2.000000e-01 : f32
    %19 = vector.broadcast %cst_9 : f32 to vector<128x128xf32>
    %20 = arith.mulf %19, %16 : vector<128x128xf32>
    %21 = arith.select %18, %16, %20 : vector<128x128xi1>, vector<128x128xf32>
    %c0_10 = arith.constant 0 : index
    %c0_11 = arith.constant 0 : index
    %22 = vector.load %arg7[%c0_10, %c0_11] : memref<128x1xf32, #tpu.memory_space<vmem>>, vector<128x1xf32>
    %cst_12 = arith.constant dense<0xFF800000> : vector<128xf32>
    %23 = vector.multi_reduction <maximumf>, %21, %cst_12 [1] : vector<128x128xf32> to vector<128xf32>
    %24 = vector.shape_cast %23 : vector<128xf32> to vector<128x1xf32>
    %25 = arith.maximumf %22, %24 : vector<128x1xf32>
    %c0_13 = arith.constant 0 : index
    %c0_14 = arith.constant 0 : index
    %26 = vector.load %arg7[%c0_13, %c0_14] : memref<128x1xf32, #tpu.memory_space<vmem>>, vector<128x1xf32>
    %27 = arith.subf %26, %25 : vector<128x1xf32>
    %28 = math.exp %27 : vector<128x1xf32>
    %29 = vector.broadcast %25 : vector<128x1xf32> to vector<128x128xf32>
    %30 = arith.subf %21, %29 : vector<128x128xf32>
    %31 = math.exp %30 : vector<128x128xf32>
    %c0_15 = arith.constant 0 : index
    %c0_16 = arith.constant 0 : index
    %32 = vector.load %arg4[%c0_15, %c0_16] : memref<128x128xbf16, #tpu.memory_space<vmem>>, vector<128x128xbf16>
    %33 = arith.extf %32 : vector<128x128xbf16> to vector<128x128xf32>
    %34 = arith.mulf %31, %33 : vector<128x128xf32>
    %c0_17 = arith.constant 0 : index
    %c0_18 = arith.constant 0 : index
    %35 = vector.load %arg8[%c0_17, %c0_18] : memref<128x1xf32, #tpu.memory_space<vmem>>, vector<128x1xf32>
    %36 = arith.mulf %28, %35 : vector<128x1xf32>
    %cst_19 = arith.constant dense<0.000000e+00> : vector<128xf32>
    %37 = vector.multi_reduction <add>, %34, %cst_19 [1] : vector<128x128xf32> to vector<128xf32>
    %38 = vector.shape_cast %37 : vector<128xf32> to vector<128x1xf32>
    %39 = arith.addf %36, %38 : vector<128x1xf32>
    %c0_20 = arith.constant 0 : index
    %c0_21 = arith.constant 0 : index
    %40 = vector.load %arg8[%c0_20, %c0_21] : memref<128x1xf32, #tpu.memory_space<vmem>>, vector<128x1xf32>
    tpu.vector_store %arg8[%c0_20, %c0_21], %39 {strides = array<i32>} : memref<128x1xf32, #tpu.memory_space<vmem>>, vector<128x1xf32>,
    %c0_22 = arith.constant 0 : index
    %c0_23 = arith.constant 0 : index
    %41 = vector.load %arg9[%c0_22, %c0_23] : memref<128x128xf32, #tpu.memory_space<vmem>>, vector<128x128xf32>
    %42 = vector.broadcast %28 : vector<128x1xf32> to vector<128x128xf32>
    %43 = arith.mulf %42, %41 : vector<128x128xf32>
    %44 = arith.truncf %34 : vector<128x128xf32> to vector<128x128xbf16>
    %cst_24 = arith.constant dense<0.000000e+00> : vector<128x128xf32>
    %45 = tpu.matmul %44, %4, %cst_24 {dimension_numbers = #tpu.dot_dimension_numbers<[1], [0], [0], [1], [0, 0, 1, 1], [], []>} : vector<128x128xbf16>, vector<128x128xbf16>, vector<128x128xf32> -> vector<128x128xf32>
    %46 = arith.addf %43, %45 : vector<128x128xf32>
    %c0_25 = arith.constant 0 : index
    %c0_26 = arith.constant 0 : index
    %47 = vector.load %arg9[%c0_25, %c0_26] : memref<128x128xf32, #tpu.memory_space<vmem>>, vector<128x128xf32>
    tpu.vector_store %arg9[%c0_25, %c0_26], %46 {strides = array<i32>} : memref<128x128xf32, #tpu.memory_space<vmem>>, vector<128x128xf32>,
    %c0_27 = arith.constant 0 : index
    %c0_28 = arith.constant 0 : index
    %48 = vector.load %arg7[%c0_27, %c0_28] : memref<128x1xf32, #tpu.memory_space<vmem>>, vector<128x1xf32>
    tpu.vector_store %arg7[%c0_27, %c0_28], %25 {strides = array<i32>} : memref<128x1xf32, #tpu.memory_space<vmem>>, vector<128x1xf32>,
    %c1_i32 = arith.constant 1 : i32
    %49 = arith.cmpi eq, %arg1, %c1_i32 : i32
    %50 = arith.extui %49 : i1 to i32
    %c0_i32_29 = arith.constant 0 : i32
    %51 = arith.cmpi ne, %50, %c0_i32_29 : i32
    scf.if %51 {
      %c2 = arith.constant 2 : index
      %c0_30 = arith.constant 0 : index
      %52 = vector.load %arg5[%c2, %c0_30] : memref<8x128xf32, #tpu.memory_space<vmem>>, vector<1x128xf32>
      %c0_31 = arith.constant 0 : index
      %c0_32 = arith.constant 0 : index
      %53 = vector.load %arg9[%c0_31, %c0_32] : memref<128x128xf32, #tpu.memory_space<vmem>>, vector<128x128xf32>
      %c0_33 = arith.constant 0 : index
      %c0_34 = arith.constant 0 : index
      %54 = vector.load %arg8[%c0_33, %c0_34] : memref<128x1xf32, #tpu.memory_space<vmem>>, vector<128x1xf32>
      %55 = tpu.reciprocal %54 {approx = true} : vector<128x1xf32> -> vector<128x1xf32>
      %56 = vector.broadcast %55 : vector<128x1xf32> to vector<128x128xf32>
      %57 = arith.mulf %53, %56 : vector<128x128xf32>
      %58 = vector.broadcast %52 : vector<1x128xf32> to vector<128x128xf32>
      %59 = arith.addf %57, %58 : vector<128x128xf32>
      %c0_35 = arith.constant 0 : index
      %c0_36 = arith.constant 0 : index
      %60 = vector.load %arg6[%c0_35, %c0_36] : memref<128x128xf32, #tpu.memory_space<vmem>>, vector<128x128xf32>
      tpu.vector_store %arg6[%c0_35, %c0_36], %59 {strides = array<i32>} : memref<128x128xf32, #tpu.memory_space<vmem>>, vector<128x128xf32>,
    } else {
    }
    return
  }
  func.func @transform_0(%arg0: i32, %arg1: i32) -> (i32, i32) {
    %c0_i32 = arith.constant 0 : i32
    %c0_i32_0 = arith.constant 0 : i32
    return %arg0, %c0_i32 : i32, i32
  }
  func.func @transform_1(%arg0: i32, %arg1: i32) -> (i32, i32) {
    %c0_i32 = arith.constant 0 : i32
    %c0_i32_0 = arith.constant 0 : i32
    return %arg1, %c0_i32 : i32, i32
  }
  func.func @transform_2(%arg0: i32, %arg1: i32) -> (i32, i32) {
    %c0_i32 = arith.constant 0 : i32
    return %arg0, %arg1 : i32, i32
  }
  func.func @transform_3(%arg0: i32, %arg1: i32) -> (i32, i32) {
    %c0_i32 = arith.constant 0 : i32
    %c0_i32_0 = arith.constant 0 : i32
    %c0_i32_1 = arith.constant 0 : i32
    return %c0_i32, %c0_i32_0 : i32, i32
  }
  func.func @transform_4(%arg0: i32, %arg1: i32) -> (i32, i32) {
    %c0_i32 = arith.constant 0 : i32
    %c0_i32_0 = arith.constant 0 : i32
    return %arg0, %c0_i32 : i32, i32
  }
}

</mosaic_0001>

<llo_original>
// kernel: graph_autoencoder.10
$region0: #{graph_autoencoder.10}
  #allocation0 [shape = 'u32[]', space=smem, size = 0x4, offset = 0x4, fixed_abs, tag = 'smem constant byte address 0x4 - core index']
  #allocation1 [shape = 'u32[144,128]{1,0:T(1,128)}', space=vmem, size = 0x12000, scoped, tag = 'internal scratch']
  %s0 = inlined_call_operand.vmem [shape: f32[256,128], index: 0, kind: input, shape index: {}]
  %s1 = inlined_call_operand.vmem [shape: f32[128,128], index: 1, kind: input, shape index: {}]
  %s2 = inlined_call_operand.vmem [shape: bf16[256,128], index: 2, kind: output, shape index: {}]
  %s3 = sld [smem:[#allocation0]]
  $region41: #{graph_autoencoder.10} parent=0
    _
  %s5 = ssub.s32 1, %s3
  %s6 = scalar_select 0, %s5, %s3
  loop: start=0, step=1, limit=4
  $region2: #{graph_autoencoder.10} parent=0 // loop_pre_header
    _
  $region3: #{graph_autoencoder.10} parent=0 // loop_header
    %s8 = sphi 0, %s12
    %p9 = scmp.ge.s32.totalorder %s8, 4
    %s18 = sphi 0, %s20
    %s21 = sphi 0, %s18
    %s22 = sphi 0, %s21
    %s38 = sphi 0, %s22
    %s42 = sphi 0, %s42
    %s44 = sphi 0, %s42
    %s45 = sphi 0, %s44
    %s59 = sphi 0, %s45
    %s65 = sphi 0, %s67
    %s68 = sphi 0, %s65
    %s69 = sphi 0, %s68
    %s85 = sphi 0, %s69
  $region4: #{graph_autoencoder.10} parent=0 // loop_header_branch
    %11 = sbr.rel (%p9) target = $region8
  $region5: #{graph_autoencoder.10} parent=0 // loop_body
    %s13 = ssub.s32 %s8, 1
    %s14 = ssub.s32 %s8, 2
    %s15 = sadd.s32 %s8, 1
    %s16 = ssub.s32 %s8, %s15
    %p17 = scmp.eq.s32.totalorder %s16, 0
    %s19 = sadd.s32 %s18, 1
    %s20 = scalar_select %p17, %s18, %s19
    %p23 = pneg %p17
    %p24 = scmp.eq.s32.totalorder %s8, 1
    %p25 = por %p23, %p24
    %p26 = scmp.ne.s32.totalorder %s18, %s21
    %p27 = scmp.eq.s32.totalorder %s8, 0
    %p28 = por %p26, %p27
    %p29 = scmp.ne.s32.totalorder %s18, %s21
    %p30 = scmp.eq.s32.totalorder %s13, 1
    %p31 = por %p29, %p30
    %p32 = scmp.ne.s32.totalorder %s21, %s22
    %p33 = scmp.eq.s32.totalorder %s13, 0
    %p34 = por %p32, %p33
    %p35 = scmp.ne.s32.totalorder %s21, %s22
    %p36 = scmp.eq.s32.totalorder %s14, 1
    %p37 = por %p35, %p36
    %p39 = scmp.ne.s32.totalorder %s22, %s38
    %p40 = scmp.eq.s32.totalorder %s14, 0
    %p41 = por %p39, %p40
    %s43 = sadd.s32 %s42, 1
    %p46 = scmp.eq.s32.totalorder %s8, 1
    %p47 = scmp.ne.s32.totalorder %s42, %s44
    %p48 = scmp.eq.s32.totalorder %s8, 0
    %p49 = por %p47, %p48
    %p50 = scmp.ne.s32.totalorder %s42, %s44
    %p51 = scmp.eq.s32.totalorder %s13, 1
    %p52 = por %p50, %p51
    %p53 = scmp.ne.s32.totalorder %s44, %s45
    %p54 = scmp.eq.s32.totalorder %s13, 0
    %p55 = por %p53, %p54
    %p56 = scmp.ne.s32.totalorder %s44, %s45
    %p57 = scmp.eq.s32.totalorder %s14, 1
    %p58 = por %p56, %p57
    %p60 = scmp.ne.s32.totalorder %s45, %s59
    %p61 = scmp.eq.s32.totalorder %s14, 0
    %p62 = por %p60, %p61
    %s63 = ssub.s32 %s8, %s15
    %p64 = scmp.eq.s32.totalorder %s63, 0
    %s66 = sadd.s32 %s65, 1
    %s67 = scalar_select %p64, %s65, %s66
    %p70 = pneg %p64
    %p71 = scmp.eq.s32.totalorder %s8, 1
    %p72 = por %p70, %p71
    %p73 = scmp.ne.s32.totalorder %s65, %s68
    %p74 = scmp.eq.s32.totalorder %s8, 0
    %p75 = por %p73, %p74
    %p76 = scmp.ne.s32.totalorder %s65, %s68
    %p77 = scmp.eq.s32.totalorder %s13, 1
    %p78 = por %p76, %p77
    %p79 = scmp.ne.s32.totalorder %s68, %s69
    %p80 = scmp.eq.s32.totalorder %s13, 0
    %p81 = por %p79, %p80
    %p82 = scmp.ne.s32.totalorder %s68, %s69
    %p83 = scmp.eq.s32.totalorder %s14, 1
    %p84 = por %p82, %p83
    %p86 = scmp.ne.s32.totalorder %s69, %s85
    %p87 = scmp.eq.s32.totalorder %s14, 0
    %p88 = por %p86, %p87
    %p89 = scmp.le.s32.totalorder 1, %s8
    %p90 = scmp.lt.s32.totalorder %s8, 3
    %p91 = pnand %p89, %p90
    %p92 = pneg %p91
    // Predicated region
    $region9: #{graph_autoencoder.10} parent=5 // pred_check
      _
    $region10: #{graph_autoencoder.10} parent=5 // pred_check_branch
      %94 = sbr.rel (%p91) target = $region12
    $region11: #{graph_autoencoder.10} parent=5 // pred_region
      %s95 = ssub.s32 %s8, 1
      // Predicated region
      $region13: #{graph_autoencoder.10} parent=11 // pred_check
        %p96 = pneg %p55
      $region14: #{graph_autoencoder.10} parent=11 // pred_check_branch
        %98 = sbr.rel (%p96) target = $region16
      $region15: #{graph_autoencoder.10} parent=11 // pred_region
        _
      $region16: #{graph_autoencoder.10} parent=11 // pred_fallthru
        _
    $region12: #{graph_autoencoder.10} parent=5 // pred_fallthru
      _
    %p99 = scmp.lt.s32.totalorder %s8, 2
    // Predicated region
    $region17: #{graph_autoencoder.10} parent=5 // pred_check
      %p100 = pneg %p99
    $region18: #{graph_autoencoder.10} parent=5 // pred_check_branch
      %102 = sbr.rel (%p100) target = $region20
    $region19: #{graph_autoencoder.10} parent=5 // pred_region
      // Predicated region
      $region21: #{graph_autoencoder.10} parent=19 // pred_check
        %p103 = pneg %p28
      $region22: #{graph_autoencoder.10} parent=19 // pred_check_branch
        %105 = sbr.rel (%p103) target = $region24
      $region23: #{graph_autoencoder.10} parent=19 // pred_region
        %s106 = smul.u32 16, %s8
        %p107 = scmp.lt.s32.totalorder %s106, 31
        %s108 = scalar_select %p107, %s106, 31
        %s109 = smul.addr %s108, 8
        %s110 = scalar_lea.vmem %s0, %s109
        %s111 = smul.u32 16, %s8
      $region24: #{graph_autoencoder.10} parent=19 // pred_fallthru
        _
    $region20: #{graph_autoencoder.10} parent=5 // pred_fallthru
      _
    %p112 = scmp.le.s32.totalorder 1, %s8
    %p113 = scmp.lt.s32.totalorder %s8, 3
    %p114 = pnand %p112, %p113
    %p115 = pneg %p114
    // Predicated region
    $region25: #{graph_autoencoder.10} parent=5 // pred_check
      _
    $region26: #{graph_autoencoder.10} parent=5 // pred_check_branch
      %117 = sbr.rel (%p114) target = $region28
    $region27: #{graph_autoencoder.10} parent=5 // pred_region
      %s118 = ssub.s32 %s8, 1
      %s119 = smul.u32 16, %s13
      %p120 = scmp.lt.s32.totalorder %s119, 31
      %s121 = scalar_select %p120, %s119, 31
      %s122 = smul.addr %s121, 8
      %s123 = scalar_lea.vmem %s0, %s122
      %p124 = pneg %p34
      %p125 = pneg %p31
      %p126 = pneg %p55
      %p127 = pneg %p52
      %p128 = pneg %p81
      %p129 = pneg %p78
      %s130 = smul.u32 16, %s13
      %p131 = scmp.lt.s32.totalorder %s130, 31
      %s132 = scalar_select %p131, %s130, 31
      %s133 = smul.addr %s132, 4
      %s134 = scalar_lea.vmem %s2, %s133
      %s135 = smul.u32 16, %s13
      %p136 = scmp.lt.s32.totalorder %s135, 31
      %s137 = scalar_select %p136, %s135, 31
      %s138 = smul.addr %s137, 8
      %s139 = scalar_lea.vmem %s0, %s138
      %s140 = smul.u32 16, %s13
      %s141 = smul.u32 16, %s13
      %p142 = scmp.lt.s32.totalorder %s141, 31
      %s143 = scalar_select %p142, %s141, 31
      %s144 = smul.addr %s143, 4
      %s145 = scalar_lea.vmem %s2, %s144
      %s146 = smul.u32 16, %s13
      %v148 = vld [vmem:[%s139] sm:$0xff]
      %v149 = vld [vmem:[%s139 + $0x8] sm:$0xff]
      %v150 = vld [vmem:[%s139 + $0x10] sm:$0xff]
      %v151 = vld [vmem:[%s139 + $0x18] sm:$0xff]
      %v152 = vld [vmem:[%s139 + $0x20] sm:$0xff]
      %v153 = vld [vmem:[%s139 + $0x28] sm:$0xff]
      %v154 = vld [vmem:[%s139 + $0x30] sm:$0xff]
      %v155 = vld [vmem:[%s139 + $0x38] sm:$0xff]
      %v156 = vld [vmem:[%s139 + $0x40] sm:$0xff]
      %v157 = vld [vmem:[%s139 + $0x48] sm:$0xff]
      %v158 = vld [vmem:[%s139 + $0x50] sm:$0xff]
      %v159 = vld [vmem:[%s139 + $0x58] sm:$0xff]
      %v160 = vld [vmem:[%s139 + $0x60] sm:$0xff]
      %v161 = vld [vmem:[%s139 + $0x68] sm:$0xff]
      %v162 = vld [vmem:[%s139 + $0x70] sm:$0xff]
      %v163 = vld [vmem:[%s139 + $0x78] sm:$0xff]
      %v164 = vmax.f32 %v148, 0.0
      %v165 = vmax.f32 %v149, 0.0
      %v166 = vmax.f32 %v150, 0.0
      %v167 = vmax.f32 %v151, 0.0
      %v168 = vmax.f32 %v152, 0.0
      %v169 = vmax.f32 %v153, 0.0
      %v170 = vmax.f32 %v154, 0.0
      %v171 = vmax.f32 %v155, 0.0
      %v172 = vmax.f32 %v156, 0.0
      %v173 = vmax.f32 %v157, 0.0
      %v174 = vmax.f32 %v158, 0.0
      %v175 = vmax.f32 %v159, 0.0
      %v176 = vmax.f32 %v160, 0.0
      %v177 = vmax.f32 %v161, 0.0
      %v178 = vmax.f32 %v162, 0.0
      %v179 = vmax.f32 %v163, 0.0
      %v180 = vpack.c.bf16 %v165, %v164
      %v181 = vpack.c.bf16 %v167, %v166
      %v182 = vpack.c.bf16 %v169, %v168
      %v183 = vpack.c.bf16 %v171, %v170
      %v184 = vpack.c.bf16 %v173, %v172
      %v185 = vpack.c.bf16 %v175, %v174
      %v186 = vpack.c.bf16 %v177, %v176
      %v187 = vpack.c.bf16 %v179, %v178
      %v188 = vld [vmem:[%s1] sm:$0xff]
      %v189 = vld [vmem:[%s1 + $0x8] sm:$0xff]
      %v190 = vld [vmem:[%s1 + $0x10] sm:$0xff]
      %v191 = vld [vmem:[%s1 + $0x18] sm:$0xff]
      %v192 = vld [vmem:[%s1 + $0x20] sm:$0xff]
      %v193 = vld [vmem:[%s1 + $0x28] sm:$0xff]
      %v194 = vld [vmem:[%s1 + $0x30] sm:$0xff]
      %v195 = vld [vmem:[%s1 + $0x38] sm:$0xff]
      %v196 = vld [vmem:[%s1 + $0x40] sm:$0xff]
      %v197 = vld [vmem:[%s1 + $0x48] sm:$0xff]
      %v198 = vld [vmem:[%s1 + $0x50] sm:$0xff]
      %v199 = vld [vmem:[%s1 + $0x58] sm:$0xff]
      %v200 = vld [vmem:[%s1 + $0x60] sm:$0xff]
      %v201 = vld [vmem:[%s1 + $0x68] sm:$0xff]
      %v202 = vld [vmem:[%s1 + $0x70] sm:$0xff]
      %v203 = vld [vmem:[%s1 + $0x78] sm:$0xff]
      %v204 = vpack.c.bf16 %v189, %v188
      %v205 = vpack.c.bf16 %v191, %v190
      %v206 = vpack.c.bf16 %v193, %v192
      %v207 = vpack.c.bf16 %v195, %v194
      %v208 = vpack.c.bf16 %v197, %v196
      %v209 = vpack.c.bf16 %v199, %v198
      %v210 = vpack.c.bf16 %v201, %v200
      %v211 = vpack.c.bf16 %v203, %v202
      %212 = vmatprep.subr.bf16.mxu0 0
      %213 = vmatpush1.bf16.msra.mxu0 %v204
      %214 = vmatprep.subr.bf16.mxu0 0
      %215 = vmatpush1.bf16.msra.mxu0 %v205
      %216 = vmatprep.subr.bf16.mxu0 0
      %217 = vmatpush1.bf16.msra.mxu0 %v206
      %218 = vmatprep.subr.bf16.mxu0 0
      %219 = vmatpush1.bf16.msra.mxu0 %v207
      %220 = vmatprep.subr.bf16.mxu0 0
      %221 = vmatpush1.bf16.msra.mxu0 %v208
      %222 = vmatprep.subr.bf16.mxu0 0
      %223 = vmatpush1.bf16.msra.mxu0 %v209
      %224 = vmatprep.subr.bf16.mxu0 0
      %225 = vmatpush1.bf16.msra.mxu0 %v210
      %226 = vmatprep.subr.bf16.mxu0 0
      %227 = vmatpush1.bf16.msra.mxu0 %v211
      %228 = vmatprep.subr.bf16.mxu0 0
      %229 = vmatpush1.bf16.msra.mxu0 0
      %230 = vmatprep.subr.bf16.mxu0 0
      %231 = vmatpush1.bf16.msra.mxu0 0
      %232 = vmatprep.subr.bf16.mxu0 0
      %233 = vmatpush1.bf16.msra.mxu0 0
      %234 = vmatprep.subr.bf16.mxu0 0
      %235 = vmatpush1.bf16.msra.mxu0 0
      %236 = vmatprep.subr.bf16.mxu0 0
      %237 = vmatpush1.bf16.msra.mxu0 0
      %238 = vmatprep.subr.bf16.mxu0 0
      %239 = vmatpush1.bf16.msra.mxu0 0
      %240 = vmatprep.subr.bf16.mxu0 0
      %241 = vmatpush1.bf16.msra.mxu0 0
      %242 = vmatprep.subr.bf16.mxu0 0
      %243 = vmatpush1.bf16.msra.mxu0 0
      %244 = vmatprep.mubr.bf16.mxu0 0
      %245 = vmatmul.mubr.bf16.gmra.mrb[0].mxu0 %v180
      %v246 = vpop.f32.mrb[0].mxu0
      %v247 = vadd.f32 0.0, %v246
      %v248 = vpop.f32.mrb[0].mxu0
      %v249 = vpop.f32.mrb[0].mxu0
      %v250 = vadd.f32 0.0, %v249
      %v251 = vpop.f32.mrb[0].mxu0
      %252 = vmatprep.mubr.bf16.mxu0 0
      %253 = vmatmul.mubr.bf16.gmra.mrb[0].mxu0 %v181
      %v254 = vpop.f32.mrb[0].mxu0
      %v255 = vadd.f32 0.0, %v254
      %v256 = vpop.f32.mrb[0].mxu0
      %v257 = vpop.f32.mrb[0].mxu0
      %v258 = vadd.f32 0.0, %v257
      %v259 = vpop.f32.mrb[0].mxu0
      %260 = vmatprep.mubr.bf16.mxu0 0
      %261 = vmatmul.mubr.bf16.gmra.mrb[0].mxu0 %v182
      %v262 = vpop.f32.mrb[0].mxu0
      %v263 = vadd.f32 0.0, %v262
      %v264 = vpop.f32.mrb[0].mxu0
      %v265 = vpop.f32.mrb[0].mxu0
      %v266 = vadd.f32 0.0, %v265
      %v267 = vpop.f32.mrb[0].mxu0
      %268 = vmatprep.mubr.bf16.mxu0 0
      %269 = vmatmul.mubr.bf16.gmra.mrb[0].mxu0 %v183
      %v270 = vpop.f32.mrb[0].mxu0
      %v271 = vadd.f32 0.0, %v270
      %v272 = vpop.f32.mrb[0].mxu0
      %v273 = vpop.f32.mrb[0].mxu0
      %v274 = vadd.f32 0.0, %v273
      %v275 = vpop.f32.mrb[0].mxu0
      %276 = vmatprep.mubr.bf16.mxu0 0
      %277 = vmatmul.mubr.bf16.gmra.mrb[0].mxu0 %v184
      %v278 = vpop.f32.mrb[0].mxu0
      %v279 = vadd.f32 0.0, %v278
      %v280 = vpop.f32.mrb[0].mxu0
      %v281 = vpop.f32.mrb[0].mxu0
      %v282 = vadd.f32 0.0, %v281
      %v283 = vpop.f32.mrb[0].mxu0
      %284 = vmatprep.mubr.bf16.mxu0 0
      %285 = vmatmul.mubr.bf16.gmra.mrb[0].mxu0 %v185
      %v286 = vpop.f32.mrb[0].mxu0
      %v287 = vadd.f32 0.0, %v286
      %v288 = vpop.f32.mrb[0].mxu0
      %v289 = vpop.f32.mrb[0].mxu0
      %v290 = vadd.f32 0.0, %v289
      %v291 = vpop.f32.mrb[0].mxu0
      %292 = vmatprep.mubr.bf16.mxu0 0
      %293 = vmatmul.mubr.bf16.gmra.mrb[0].mxu0 %v186
      %v294 = vpop.f32.mrb[0].mxu0
      %v295 = vadd.f32 0.0, %v294
      %v296 = vpop.f32.mrb[0].mxu0
      %v297 = vpop.f32.mrb[0].mxu0
      %v298 = vadd.f32 0.0, %v297
      %v299 = vpop.f32.mrb[0].mxu0
      %300 = vmatprep.mubr.bf16.mxu0 0
      %301 = vmatmul.mubr.bf16.gmra.mrb[0].mxu0 %v187
      %v302 = vpop.f32.mrb[0].mxu0
      %v303 = vadd.f32 0.0, %v302
      %v304 = vpop.f32.mrb[0].mxu0
      %v305 = vpop.f32.mrb[0].mxu0
      %v306 = vadd.f32 0.0, %v305
      %v307 = vpop.f32.mrb[0].mxu0
      %308 = vdwg.mxu0
      %v309 = vpack.c.bf16 %v250, %v247
      %v310 = vpack.c.bf16 %v258, %v255
      %v311 = vpack.c.bf16 %v266, %v263
      %v312 = vpack.c.bf16 %v274, %v271
      %v313 = vpack.c.bf16 %v282, %v279
      %v314 = vpack.c.bf16 %v290, %v287
      %v315 = vpack.c.bf16 %v298, %v295
      %v316 = vpack.c.bf16 %v306, %v303
      %v325 = vunpack.c.l.b16 %v309
      %v326 = vunpack.c.h.b16 %v309
      %v327 = vunpack.c.l.b16 %v310
      %v328 = vunpack.c.h.b16 %v310
      %v329 = vunpack.c.l.b16 %v311
      %v330 = vunpack.c.h.b16 %v311
      %v331 = vunpack.c.l.b16 %v312
      %v332 = vunpack.c.h.b16 %v312
      %v333 = vunpack.c.l.b16 %v313
      %v334 = vunpack.c.h.b16 %v313
      %v335 = vunpack.c.l.b16 %v314
      %v336 = vunpack.c.h.b16 %v314
      %v337 = vunpack.c.l.b16 %v315
      %v338 = vunpack.c.h.b16 %v315
      %v339 = vunpack.c.l.b16 %v316
      %v340 = vunpack.c.h.b16 %v316
      %v341 = vpack.c.b16 %v325, %v325
      %v342 = vpack.c.b16 %v326, %v326
      %v343 = vpack.c.b16 %v327, %v327
      %v344 = vpack.c.b16 %v328, %v328
      %v345 = vpack.c.b16 %v329, %v329
      %v346 = vpack.c.b16 %v330, %v330
      %v347 = vpack.c.b16 %v331, %v331
      %v348 = vpack.c.b16 %v332, %v332
      %v349 = vpack.c.b16 %v333, %v333
      %v350 = vpack.c.b16 %v334, %v334
      %v351 = vpack.c.b16 %v335, %v335
      %v352 = vpack.c.b16 %v336, %v336
      %v353 = vpack.c.b16 %v337, %v337
      %v354 = vpack.c.b16 %v338, %v338
      %v355 = vpack.c.b16 %v339, %v339
      %v356 = vpack.c.b16 %v340, %v340
      %373 = vst [vmem:[%s145] sm:$0xf] %v341
      %374 = vst [vmem:[%s145 + $0x4] sm:$0xf] %v342
      %375 = vst [vmem:[%s145 + $0x8] sm:$0xf] %v343
      %376 = vst [vmem:[%s145 + $0xc] sm:$0xf] %v344
      %377 = vst [vmem:[%s145 + $0x10] sm:$0xf] %v345
      %378 = vst [vmem:[%s145 + $0x14] sm:$0xf] %v346
      %379 = vst [vmem:[%s145 + $0x18] sm:$0xf] %v347
      %380 = vst [vmem:[%s145 + $0x1c] sm:$0xf] %v348
      %381 = vst [vmem:[%s145 + $0x20] sm:$0xf] %v349
      %382 = vst [vmem:[%s145 + $0x24] sm:$0xf] %v350
      %383 = vst [vmem:[%s145 + $0x28] sm:$0xf] %v351
      %384 = vst [vmem:[%s145 + $0x2c] sm:$0xf] %v352
      %385 = vst [vmem:[%s145 + $0x30] sm:$0xf] %v353
      %386 = vst [vmem:[%s145 + $0x34] sm:$0xf] %v354
      %387 = vst [vmem:[%s145 + $0x38] sm:$0xf] %v355
      %388 = vst [vmem:[%s145 + $0x3c] sm:$0xf] %v356
      %s389 = smul.u32 16, %s13
      %p390 = scmp.lt.s32.totalorder %s389, 31
      %s391 = scalar_select %p390, %s389, 31
      %s392 = smul.addr %s391, 4
      %s393 = scalar_lea.vmem %s2, %s392
      // Predicated region
      $region29: #{graph_autoencoder.10} parent=27 // pred_check
        %p394 = pneg %p78
      $region30: #{graph_autoencoder.10} parent=27 // pred_check_branch
        %396 = sbr.rel (%p394) target = $region32
      $region31: #{graph_autoencoder.10} parent=27 // pred_region
        %s397 = smul.u32 16, %s13
      $region32: #{graph_autoencoder.10} parent=27 // pred_fallthru
        _
    $region28: #{graph_autoencoder.10} parent=5 // pred_fallthru
      _
    %p398 = scmp.le.s32.totalorder 2, %s8
    // Predicated region
    $region33: #{graph_autoencoder.10} parent=5 // pred_check
      %p399 = pneg %p398
    $region34: #{graph_autoencoder.10} parent=5 // pred_check_branch
      %401 = sbr.rel (%p399) target = $region36
    $region35: #{graph_autoencoder.10} parent=5 // pred_region
      %s402 = ssub.s32 %s8, 2
      // Predicated region
      $region37: #{graph_autoencoder.10} parent=35 // pred_check
        %p403 = pneg %p84
      $region38: #{graph_autoencoder.10} parent=35 // pred_check_branch
        %405 = sbr.rel (%p403) target = $region40
      $region39: #{graph_autoencoder.10} parent=35 // pred_region
        %s406 = smul.u32 16, %s14
        %p407 = scmp.lt.s32.totalorder %s406, 31
        %s408 = scalar_select %p407, %s406, 31
        %s409 = smul.addr %s408, 4
        %s410 = scalar_lea.vmem %s2, %s409
      $region40: #{graph_autoencoder.10} parent=35 // pred_fallthru
        _
    $region36: #{graph_autoencoder.10} parent=5 // pred_fallthru
      _
  $region6: #{graph_autoencoder.10} parent=0 // loop_footer
    %s12 = sadd.s32 1, %s8
  $region7: #{graph_autoencoder.10} parent=0 // loop_footer_branch
    %7 = sbr.rel target = $region3
  $region8: #{graph_autoencoder.10} parent=0 // loop_exit
    _

// kernel: graph_autoencoder.8
$region0: #{graph_autoencoder.8}
  #allocation0 [shape = 'u32[]', space=smem, size = 0x4, offset = 0x4, fixed_abs, tag = 'smem constant byte address 0x4 - core index']
  #allocation1 [shape = 'u32[144,128]{1,0:T(1,128)}', space=vmem, size = 0x12000, scoped, tag = 'internal scratch']
  %s0 = inlined_call_operand.hbm [shape: f32[256,128], index: 0, kind: input, shape index: {}]
  %s1 = inlined_call_operand.hbm [shape: f32[128,128], index: 1, kind: input, shape index: {}]
  %s2 = inlined_call_operand.vmem [shape: bf16[256,128], index: 2, kind: output, shape index: {}]
  %s3 = sld [smem:[#allocation0]]
  $region49: #{graph_autoencoder.8} parent=0
    _
  %s5 = ssub.s32 1, %s3
  %s6 = scalar_select 0, %s5, %s3
  $region1: #{graph_autoencoder.8} parent=0
    #allocation2 [shape = 'u8[131072]{0}', space=vmem, size = 0x20000, scoped, tag = 'input window, operand 0']
    #allocation3 [shape = 's32[2]{0}', space=sflag, size = 0x8, scoped, tag = 'scoped memory for graph_autoencoder.8']
    #allocation4 [shape = 'u8[65536]{0}', space=vmem, size = 0x10000, scoped, tag = 'input window, operand 1, single buffered']
    #allocation5 [shape = 's32[1]{0}', space=sflag, size = 0x4, scoped, tag = 'scoped memory for graph_autoencoder.8']
    %7 = vsyncpa [#allocation3], 0
    %s8 = scalar_lea.sflag [#allocation3], 1
    %9 = vsyncpa %s8, 0
    %10 = vsyncpa [#allocation5], 0
    loop: start=0, step=1, limit=4
    $region2: #{graph_autoencoder.8} parent=1 // loop_pre_header
      _
    $region3: #{graph_autoencoder.8} parent=1 // loop_header
      %s12 = sphi 0, %s16
      %p13 = scmp.ge.s32.totalorder %s12, 4
      %s22 = sphi 0, %s24
      %s25 = sphi 0, %s22
      %s26 = sphi 0, %s25
      %s42 = sphi 0, %s26
      %s46 = sphi 0, %s46
      %s48 = sphi 0, %s46
      %s49 = sphi 0, %s48
      %s63 = sphi 0, %s49
      %s69 = sphi 0, %s71
      %s72 = sphi 0, %s69
      %s73 = sphi 0, %s72
      %s89 = sphi 0, %s73
    $region4: #{graph_autoencoder.8} parent=1 // loop_header_branch
      %15 = sbr.rel (%p13) target = $region8
    $region5: #{graph_autoencoder.8} parent=1 // loop_body
      %s17 = ssub.s32 %s12, 1
      %s18 = ssub.s32 %s12, 2
      %s19 = sadd.s32 %s12, 1
      %s20 = ssub.s32 %s12, %s19
      %p21 = scmp.eq.s32.totalorder %s20, 0
      %s23 = sadd.s32 %s22, 1
      %s24 = scalar_select %p21, %s22, %s23
      %p27 = pneg %p21
      %p28 = scmp.eq.s32.totalorder %s12, 1
      %p29 = por %p27, %p28
      %p30 = scmp.ne.s32.totalorder %s22, %s25
      %p31 = scmp.eq.s32.totalorder %s12, 0
      %p32 = por %p30, %p31
      %p33 = scmp.ne.s32.totalorder %s22, %s25
      %p34 = scmp.eq.s32.totalorder %s17, 1
      %p35 = por %p33, %p34
      %p36 = scmp.ne.s32.totalorder %s25, %s26
      %p37 = scmp.eq.s32.totalorder %s17, 0
      %p38 = por %p36, %p37
      %p39 = scmp.ne.s32.totalorder %s25, %s26
      %p40 = scmp.eq.s32.totalorder %s18, 1
      %p41 = por %p39, %p40
      %p43 = scmp.ne.s32.totalorder %s26, %s42
      %p44 = scmp.eq.s32.totalorder %s18, 0
      %p45 = por %p43, %p44
      %s47 = sadd.s32 %s46, 1
      %p50 = scmp.eq.s32.totalorder %s12, 1
      %p51 = scmp.ne.s32.totalorder %s46, %s48
      %p52 = scmp.eq.s32.totalorder %s12, 0
      %p53 = por %p51, %p52
      %p54 = scmp.ne.s32.totalorder %s46, %s48
      %p55 = scmp.eq.s32.totalorder %s17, 1
      %p56 = por %p54, %p55
      %p57 = scmp.ne.s32.totalorder %s48, %s49
      %p58 = scmp.eq.s32.totalorder %s17, 0
      %p59 = por %p57, %p58
      %p60 = scmp.ne.s32.totalorder %s48, %s49
      %p61 = scmp.eq.s32.totalorder %s18, 1
      %p62 = por %p60, %p61
      %p64 = scmp.ne.s32.totalorder %s49, %s63
      %p65 = scmp.eq.s32.totalorder %s18, 0
      %p66 = por %p64, %p65
      %s67 = ssub.s32 %s12, %s19
      %p68 = scmp.eq.s32.totalorder %s67, 0
      %s70 = sadd.s32 %s69, 1
      %s71 = scalar_select %p68, %s69, %s70
      %p74 = pneg %p68
      %p75 = scmp.eq.s32.totalorder %s12, 1
      %p76 = por %p74, %p75
      %p77 = scmp.ne.s32.totalorder %s69, %s72
      %p78 = scmp.eq.s32.totalorder %s12, 0
      %p79 = por %p77, %p78
      %p80 = scmp.ne.s32.totalorder %s69, %s72
      %p81 = scmp.eq.s32.totalorder %s17, 1
      %p82 = por %p80, %p81
      %p83 = scmp.ne.s32.totalorder %s72, %s73
      %p84 = scmp.eq.s32.totalorder %s17, 0
      %p85 = por %p83, %p84
      %p86 = scmp.ne.s32.totalorder %s72, %s73
      %p87 = scmp.eq.s32.totalorder %s18, 1
      %p88 = por %p86, %p87
      %p90 = scmp.ne.s32.totalorder %s73, %s89
      %p91 = scmp.eq.s32.totalorder %s18, 0
      %p92 = por %p90, %p91
      %p93 = scmp.le.s32.totalorder 1, %s12
      %p94 = scmp.lt.s32.totalorder %s12, 3
      %p95 = pnand %p93, %p94
      %p96 = pneg %p95
      // Predicated region
      $region9: #{graph_autoencoder.8} parent=5 // pred_check
        _
      $region10: #{graph_autoencoder.8} parent=5 // pred_check_branch
        %98 = sbr.rel (%p95) target = $region12
      $region11: #{graph_autoencoder.8} parent=5 // pred_region
        %s99 = ssub.s32 %s12, 1
        // Predicated region
        $region13: #{graph_autoencoder.8} parent=11 // pred_check
          %p100 = pneg %p59
        $region14: #{graph_autoencoder.8} parent=11 // pred_check_branch
          %102 = sbr.rel (%p100) target = $region16
        $region15: #{graph_autoencoder.8} parent=11 // pred_region
          %s104 = ssub.s32 2048, 2048
          %105 = vsyncadd [#allocation5], %s104
          %s106 = sshll.u32 [#allocation4], 4
          %s107 = int_to_ptr.vmem [resolvable:$true] %s106
          %112 = dma.hbm_to_vmem [thread:$0]  %s1, 2048, %s107, [#allocation5], 128, 128, 8
        $region16: #{graph_autoencoder.8} parent=11 // pred_fallthru
          _
      $region12: #{graph_autoencoder.8} parent=5 // pred_fallthru
        _
      %p113 = scmp.lt.s32.totalorder %s12, 2
      // Predicated region
      $region17: #{graph_autoencoder.8} parent=5 // pred_check
        %p114 = pneg %p113
      $region18: #{graph_autoencoder.8} parent=5 // pred_check_branch
        %116 = sbr.rel (%p114) target = $region20
      $region19: #{graph_autoencoder.8} parent=5 // pred_region
        // Predicated region
        $region21: #{graph_autoencoder.8} parent=19 // pred_check
          %p117 = pneg %p32
        $region22: #{graph_autoencoder.8} parent=19 // pred_check_branch
          %119 = sbr.rel (%p117) target = $region24
        $region23: #{graph_autoencoder.8} parent=19 // pred_region
          %s120 = sand.u32 %s22, 1
          %s121 = scalar_lea.sflag [#allocation3], %s120
          %s122 = sand.u32 %s22, 1
          %s123 = smul.addr %s122, 128
          %s124 = scalar_lea.vmem [#allocation2], %s123
          %s125 = smul.u32 16, %s12
          %s127 = ssub.s32 2048, 2048
          %128 = vsyncadd %s121, %s127
          %s129 = smul.addr %s125, 128
          %s130 = scalar_lea.hbm %s0, %s129
          %s131 = sshll.u32 %s124, 4
          %s132 = int_to_ptr.vmem [resolvable:$true] %s131
          %137 = dma.hbm_to_vmem [thread:$0]  %s130, 2048, %s132, %s121, 128, 128, 8
        $region24: #{graph_autoencoder.8} parent=19 // pred_fallthru
          _
      $region20: #{graph_autoencoder.8} parent=5 // pred_fallthru
        _
      %p138 = scmp.le.s32.totalorder 1, %s12
      %p139 = scmp.lt.s32.totalorder %s12, 3
      %p140 = pnand %p138, %p139
      %p141 = pneg %p140
      // Predicated region
      $region25: #{graph_autoencoder.8} parent=5 // pred_check
        _
      $region26: #{graph_autoencoder.8} parent=5 // pred_check_branch
        %143 = sbr.rel (%p140) target = $region28
      $region27: #{graph_autoencoder.8} parent=5 // pred_region
        %s144 = ssub.s32 %s12, 1
        %s145 = sand.u32 %s25, 1
        %s146 = scalar_lea.sflag [#allocation3], %s145
        %s147 = sand.u32 %s25, 1
        %s148 = smul.addr %s147, 128
        %s149 = scalar_lea.vmem [#allocation2], %s148
        // Predicated region
        $region29: #{graph_autoencoder.8} parent=27 // pred_check
          %p150 = pneg %p38
        $region30: #{graph_autoencoder.8} parent=27 // pred_check_branch
          %152 = sbr.rel (%p150) target = $region32
        $region31: #{graph_autoencoder.8} parent=27 // pred_region
          %153 = dma.done %s146, 2048
        $region32: #{graph_autoencoder.8} parent=27 // pred_fallthru
          _
        // Predicated region
        $region33: #{graph_autoencoder.8} parent=27 // pred_check
          %p154 = pneg %p59
        $region34: #{graph_autoencoder.8} parent=27 // pred_check_branch
          %156 = sbr.rel (%p154) target = $region36
        $region35: #{graph_autoencoder.8} parent=27 // pred_region
          %157 = dma.done [#allocation5], 2048
        $region36: #{graph_autoencoder.8} parent=27 // pred_fallthru
          _
        %s158 = sand.u32 %s25, 1
        %s159 = scalar_lea.sflag [#allocation3], %s158
        %s160 = sand.u32 %s25, 1
        %s161 = smul.addr %s160, 128
        %s162 = scalar_lea.vmem [#allocation2], %s161
        %p163 = pneg %p38
        %p164 = pneg %p35
        %p165 = pneg %p59
        %p166 = pneg %p56
        %p167 = pneg %p85
        %p168 = pneg %p82
        %s169 = smul.u32 16, %s17
        %p170 = scmp.lt.s32.totalorder %s169, 31
        %s171 = scalar_select %p170, %s169, 31
        %s172 = smul.addr %s171, 4
        %s173 = scalar_lea.vmem %s2, %s172
        %s174 = smul.u32 16, %s17
        %s175 = smul.u32 16, %s17
        %p176 = scmp.lt.s32.totalorder %s175, 31
        %s177 = scalar_select %p176, %s175, 31
        %s178 = smul.addr %s177, 4
        %s179 = scalar_lea.vmem %s2, %s178
        %s180 = smul.u32 16, %s17
        %v182 = vld [vmem:[%s149] sm:$0xff]
        %v183 = vld [vmem:[%s149 + $0x8] sm:$0xff]
        %v184 = vld [vmem:[%s149 + $0x10] sm:$0xff]
        %v185 = vld [vmem:[%s149 + $0x18] sm:$0xff]
        %v186 = vld [vmem:[%s149 + $0x20] sm:$0xff]
        %v187 = vld [vmem:[%s149 + $0x28] sm:$0xff]
        %v188 = vld [vmem:[%s149 + $0x30] sm:$0xff]
        %v189 = vld [vmem:[%s149 + $0x38] sm:$0xff]
        %v190 = vld [vmem:[%s149 + $0x40] sm:$0xff]
        %v191 = vld [vmem:[%s149 + $0x48] sm:$0xff]
        %v192 = vld [vmem:[%s149 + $0x50] sm:$0xff]
        %v193 = vld [vmem:[%s149 + $0x58] sm:$0xff]
        %v194 = vld [vmem:[%s149 + $0x60] sm:$0xff]
        %v195 = vld [vmem:[%s149 + $0x68] sm:$0xff]
        %v196 = vld [vmem:[%s149 + $0x70] sm:$0xff]
        %v197 = vld [vmem:[%s149 + $0x78] sm:$0xff]
        %v198 = vpack.c.bf16 %v183, %v182
        %v199 = vpack.c.bf16 %v185, %v184
        %v200 = vpack.c.bf16 %v187, %v186
        %v201 = vpack.c.bf16 %v189, %v188
        %v202 = vpack.c.bf16 %v191, %v190
        %v203 = vpack.c.bf16 %v193, %v192
        %v204 = vpack.c.bf16 %v195, %v194
        %v205 = vpack.c.bf16 %v197, %v196
        %v206 = vld [vmem:[#allocation4] sm:$0xff]
        %v207 = vld [vmem:[#allocation4 + $0x8] sm:$0xff]
        %v208 = vld [vmem:[#allocation4 + $0x10] sm:$0xff]
        %v209 = vld [vmem:[#allocation4 + $0x18] sm:$0xff]
        %v210 = vld [vmem:[#allocation4 + $0x20] sm:$0xff]
        %v211 = vld [vmem:[#allocation4 + $0x28] sm:$0xff]
        %v212 = vld [vmem:[#allocation4 + $0x30] sm:$0xff]
        %v213 = vld [vmem:[#allocation4 + $0x38] sm:$0xff]
        %v214 = vld [vmem:[#allocation4 + $0x40] sm:$0xff]
        %v215 = vld [vmem:[#allocation4 + $0x48] sm:$0xff]
        %v216 = vld [vmem:[#allocation4 + $0x50] sm:$0xff]
        %v217 = vld [vmem:[#allocation4 + $0x58] sm:$0xff]
        %v218 = vld [vmem:[#allocation4 + $0x60] sm:$0xff]
        %v219 = vld [vmem:[#allocation4 + $0x68] sm:$0xff]
        %v220 = vld [vmem:[#allocation4 + $0x70] sm:$0xff]
        %v221 = vld [vmem:[#allocation4 + $0x78] sm:$0xff]
        %v222 = vpack.c.bf16 %v207, %v206
        %v223 = vpack.c.bf16 %v209, %v208
        %v224 = vpack.c.bf16 %v211, %v210
        %v225 = vpack.c.bf16 %v213, %v212
        %v226 = vpack.c.bf16 %v215, %v214
        %v227 = vpack.c.bf16 %v217, %v216
        %v228 = vpack.c.bf16 %v219, %v218
        %v229 = vpack.c.bf16 %v221, %v220
        %230 = vmatprep.subr.bf16.mxu0 0
        %231 = vmatpush1.bf16.msra.mxu0 %v222
        %232 = vmatprep.subr.bf16.mxu0 0
        %233 = vmatpush1.bf16.msra.mxu0 %v223
        %234 = vmatprep.subr.bf16.mxu0 0
        %235 = vmatpush1.bf16.msra.mxu0 %v224
        %236 = vmatprep.subr.bf16.mxu0 0
        %237 = vmatpush1.bf16.msra.mxu0 %v225
        %238 = vmatprep.subr.bf16.mxu0 0
        %239 = vmatpush1.bf16.msra.mxu0 %v226
        %240 = vmatprep.subr.bf16.mxu0 0
        %241 = vmatpush1.bf16.msra.mxu0 %v227
        %242 = vmatprep.subr.bf16.mxu0 0
        %243 = vmatpush1.bf16.msra.mxu0 %v228
        %244 = vmatprep.subr.bf16.mxu0 0
        %245 = vmatpush1.bf16.msra.mxu0 %v229
        %246 = vmatprep.subr.bf16.mxu0 0
        %247 = vmatpush1.bf16.msra.mxu0 0
        %248 = vmatprep.subr.bf16.mxu0 0
        %249 = vmatpush1.bf16.msra.mxu0 0
        %250 = vmatprep.subr.bf16.mxu0 0
        %251 = vmatpush1.bf16.msra.mxu0 0
        %252 = vmatprep.subr.bf16.mxu0 0
        %253 = vmatpush1.bf16.msra.mxu0 0
        %254 = vmatprep.subr.bf16.mxu0 0
        %255 = vmatpush1.bf16.msra.mxu0 0
        %256 = vmatprep.subr.bf16.mxu0 0
        %257 = vmatpush1.bf16.msra.mxu0 0
        %258 = vmatprep.subr.bf16.mxu0 0
        %259 = vmatpush1.bf16.msra.mxu0 0
        %260 = vmatprep.subr.bf16.mxu0 0
        %261 = vmatpush1.bf16.msra.mxu0 0
        %262 = vmatprep.mubr.bf16.mxu0 0
        %263 = vmatmul.mubr.bf16.gmra.mrb[0].mxu0 %v198
        %v264 = vpop.f32.mrb[0].mxu0
        %v265 = vadd.f32 0.0, %v264
        %v266 = vpop.f32.mrb[0].mxu0
        %v267 = vpop.f32.mrb[0].mxu0
        %v268 = vadd.f32 0.0, %v267
        %v269 = vpop.f32.mrb[0].mxu0
        %270 = vmatprep.mubr.bf16.mxu0 0
        %271 = vmatmul.mubr.bf16.gmra.mrb[0].mxu0 %v199
        %v272 = vpop.f32.mrb[0].mxu0
        %v273 = vadd.f32 0.0, %v272
        %v274 = vpop.f32.mrb[0].mxu0
        %v275 = vpop.f32.mrb[0].mxu0
        %v276 = vadd.f32 0.0, %v275
        %v277 = vpop.f32.mrb[0].mxu0
        %278 = vmatprep.mubr.bf16.mxu0 0
        %279 = vmatmul.mubr.bf16.gmra.mrb[0].mxu0 %v200
        %v280 = vpop.f32.mrb[0].mxu0
        %v281 = vadd.f32 0.0, %v280
        %v282 = vpop.f32.mrb[0].mxu0
        %v283 = vpop.f32.mrb[0].mxu0
        %v284 = vadd.f32 0.0, %v283
        %v285 = vpop.f32.mrb[0].mxu0
        %286 = vmatprep.mubr.bf16.mxu0 0
        %287 = vmatmul.mubr.bf16.gmra.mrb[0].mxu0 %v201
        %v288 = vpop.f32.mrb[0].mxu0
        %v289 = vadd.f32 0.0, %v288
        %v290 = vpop.f32.mrb[0].mxu0
        %v291 = vpop.f32.mrb[0].mxu0
        %v292 = vadd.f32 0.0, %v291
        %v293 = vpop.f32.mrb[0].mxu0
        %294 = vmatprep.mubr.bf16.mxu0 0
        %295 = vmatmul.mubr.bf16.gmra.mrb[0].mxu0 %v202
        %v296 = vpop.f32.mrb[0].mxu0
        %v297 = vadd.f32 0.0, %v296
        %v298 = vpop.f32.mrb[0].mxu0
        %v299 = vpop.f32.mrb[0].mxu0
        %v300 = vadd.f32 0.0, %v299
        %v301 = vpop.f32.mrb[0].mxu0
        %302 = vmatprep.mubr.bf16.mxu0 0
        %303 = vmatmul.mubr.bf16.gmra.mrb[0].mxu0 %v203
        %v304 = vpop.f32.mrb[0].mxu0
        %v305 = vadd.f32 0.0, %v304
        %v306 = vpop.f32.mrb[0].mxu0
        %v307 = vpop.f32.mrb[0].mxu0
        %v308 = vadd.f32 0.0, %v307
        %v309 = vpop.f32.mrb[0].mxu0
        %310 = vmatprep.mubr.bf16.mxu0 0
        %311 = vmatmul.mubr.bf16.gmra.mrb[0].mxu0 %v204
        %v312 = vpop.f32.mrb[0].mxu0
        %v313 = vadd.f32 0.0, %v312
        %v314 = vpop.f32.mrb[0].mxu0
        %v315 = vpop.f32.mrb[0].mxu0
        %v316 = vadd.f32 0.0, %v315
        %v317 = vpop.f32.mrb[0].mxu0
        %318 = vmatprep.mubr.bf16.mxu0 0
        %319 = vmatmul.mubr.bf16.gmra.mrb[0].mxu0 %v205
        %v320 = vpop.f32.mrb[0].mxu0
        %v321 = vadd.f32 0.0, %v320
        %v322 = vpop.f32.mrb[0].mxu0
        %v323 = vpop.f32.mrb[0].mxu0
        %v324 = vadd.f32 0.0, %v323
        %v325 = vpop.f32.mrb[0].mxu0
        %326 = vdwg.mxu0
        %v327 = vpack.c.bf16 %v268, %v265
        %v328 = vpack.c.bf16 %v276, %v273
        %v329 = vpack.c.bf16 %v284, %v281
        %v330 = vpack.c.bf16 %v292, %v289
        %v331 = vpack.c.bf16 %v300, %v297
        %v332 = vpack.c.bf16 %v308, %v305
        %v333 = vpack.c.bf16 %v316, %v313
        %v334 = vpack.c.bf16 %v324, %v321
        %v343 = vunpack.c.l.b16 %v327
        %v344 = vunpack.c.h.b16 %v327
        %v345 = vunpack.c.l.b16 %v328
        %v346 = vunpack.c.h.b16 %v328
        %v347 = vunpack.c.l.b16 %v329
        %v348 = vunpack.c.h.b16 %v329
        %v349 = vunpack.c.l.b16 %v330
        %v350 = vunpack.c.h.b16 %v330
        %v351 = vunpack.c.l.b16 %v331
        %v352 = vunpack.c.h.b16 %v331
        %v353 = vunpack.c.l.b16 %v332
        %v354 = vunpack.c.h.b16 %v332
        %v355 = vunpack.c.l.b16 %v333
        %v356 = vunpack.c.h.b16 %v333
        %v357 = vunpack.c.l.b16 %v334
        %v358 = vunpack.c.h.b16 %v334
        %v359 = vpack.c.b16 %v343, %v343
        %v360 = vpack.c.b16 %v344, %v344
        %v361 = vpack.c.b16 %v345, %v345
        %v362 = vpack.c.b16 %v346, %v346
        %v363 = vpack.c.b16 %v347, %v347
        %v364 = vpack.c.b16 %v348, %v348
        %v365 = vpack.c.b16 %v349, %v349
        %v366 = vpack.c.b16 %v350, %v350
        %v367 = vpack.c.b16 %v351, %v351
        %v368 = vpack.c.b16 %v352, %v352
        %v369 = vpack.c.b16 %v353, %v353
        %v370 = vpack.c.b16 %v354, %v354
        %v371 = vpack.c.b16 %v355, %v355
        %v372 = vpack.c.b16 %v356, %v356
        %v373 = vpack.c.b16 %v357, %v357
        %v374 = vpack.c.b16 %v358, %v358
        %391 = vst [vmem:[%s179] sm:$0xf] %v359
        %392 = vst [vmem:[%s179 + $0x4] sm:$0xf] %v360
        %393 = vst [vmem:[%s179 + $0x8] sm:$0xf] %v361
        %394 = vst [vmem:[%s179 + $0xc] sm:$0xf] %v362
        %395 = vst [vmem:[%s179 + $0x10] sm:$0xf] %v363
        %396 = vst [vmem:[%s179 + $0x14] sm:$0xf] %v364
        %397 = vst [vmem:[%s179 + $0x18] sm:$0xf] %v365
        %398 = vst [vmem:[%s179 + $0x1c] sm:$0xf] %v366
        %399 = vst [vmem:[%s179 + $0x20] sm:$0xf] %v367
        %400 = vst [vmem:[%s179 + $0x24] sm:$0xf] %v368
        %401 = vst [vmem:[%s179 + $0x28] sm:$0xf] %v369
        %402 = vst [vmem:[%s179 + $0x2c] sm:$0xf] %v370
        %403 = vst [vmem:[%s179 + $0x30] sm:$0xf] %v371
        %404 = vst [vmem:[%s179 + $0x34] sm:$0xf] %v372
        %405 = vst [vmem:[%s179 + $0x38] sm:$0xf] %v373
        %406 = vst [vmem:[%s179 + $0x3c] sm:$0xf] %v374
        %s407 = smul.u32 16, %s17
        %p408 = scmp.lt.s32.totalorder %s407, 31
        %s409 = scalar_select %p408, %s407, 31
        %s410 = smul.addr %s409, 4
        %s411 = scalar_lea.vmem %s2, %s410
        // Predicated region
        $region37: #{graph_autoencoder.8} parent=27 // pred_check
          %p412 = pneg %p82
        $region38: #{graph_autoencoder.8} parent=27 // pred_check_branch
          %414 = sbr.rel (%p412) target = $region40
        $region39: #{graph_autoencoder.8} parent=27 // pred_region
          %s415 = smul.u32 16, %s17
        $region40: #{graph_autoencoder.8} parent=27 // pred_fallthru
          _
      $region28: #{graph_autoencoder.8} parent=5 // pred_fallthru
        _
      %p416 = scmp.le.s32.totalorder 2, %s12
      // Predicated region
      $region41: #{graph_autoencoder.8} parent=5 // pred_check
        %p417 = pneg %p416
      $region42: #{graph_autoencoder.8} parent=5 // pred_check_branch
        %419 = sbr.rel (%p417) target = $region44
      $region43: #{graph_autoencoder.8} parent=5 // pred_region
        %s420 = ssub.s32 %s12, 2
        // Predicated region
        $region45: #{graph_autoencoder.8} parent=43 // pred_check
          %p421 = pneg %p88
        $region46: #{graph_autoencoder.8} parent=43 // pred_check_branch
          %423 = sbr.rel (%p421) target = $region48
        $region47: #{graph_autoencoder.8} parent=43 // pred_region
          %s424 = smul.u32 16, %s18
          %p425 = scmp.lt.s32.totalorder %s424, 31
          %s426 = scalar_select %p425, %s424, 31
          %s427 = smul.addr %s426, 4
          %s428 = scalar_lea.vmem %s2, %s427
        $region48: #{graph_autoencoder.8} parent=43 // pred_fallthru
          _
      $region44: #{graph_autoencoder.8} parent=5 // pred_fallthru
        _
    $region6: #{graph_autoencoder.8} parent=1 // loop_footer
      %s16 = sadd.s32 1, %s12
    $region7: #{graph_autoencoder.8} parent=1 // loop_footer_branch
      %11 = sbr.rel target = $region3
    $region8: #{graph_autoencoder.8} parent=1 // loop_exit
      _
    %429 = vsyncpa [#allocation3], 1
    %s430 = scalar_lea.sflag [#allocation3], 1
    %431 = vsyncpa %s430, 1
    %432 = vsyncpa [#allocation5], 1

// kernel: graph_autoencoder.9
$region0: #{graph_autoencoder.9}
  #allocation0 [shape = 'u32[]', space=smem, size = 0x4, offset = 0x4, fixed_abs, tag = 'smem constant byte address 0x4 - core index']
  #allocation1 [shape = 'u32[144,128]{1,0:T(1,128)}', space=vmem, size = 0x12000, scoped, tag = 'internal scratch']
  #allocation2 [shape = 'f32[128,1]{1,0:T(8,128)}', space=vmem, size = 0x10000, scoped, tag = 'scratch operand']
  #allocation3 [shape = 'f32[128,1]{1,0:T(8,128)}', space=vmem, size = 0x10000, scoped, tag = 'scratch operand']
  #allocation4 [shape = 'f32[128,128]{1,0:T(8,128)}', space=vmem, size = 0x10000, scoped, tag = 'scratch operand']
  %s0 = inlined_call_operand.vmem [shape: bf16[256,128], index: 0, kind: input, shape index: {}, may-alias: {0,1}]
  %s1 = inlined_call_operand.vmem [shape: bf16[256,128], index: 1, kind: input, shape index: {}, may-alias: {0,1}]
  %s2 = inlined_call_operand.vmem [shape: bf16[256,256], index: 2, kind: input, shape index: {}]
  %s3 = inlined_call_operand.vmem [shape: f32[8,128], index: 3, kind: input, shape index: {}]
  %s4 = inlined_call_operand.vmem [shape: f32[256,128], index: 4, kind: output, shape index: {}]
  %s5 = sld [smem:[#allocation0]]
  $region98: #{graph_autoencoder.9} parent=0
    _
  %s7 = ssub.s32 1, %s5
  %s8 = scalar_select 0, %s7, %s5
  $region1: #{graph_autoencoder.9} parent=0
    #allocation5 [shape = 'u8[65536]{0}', space=vmem, size = 0x10000, scoped, tag = 'input window, operand 2']
    loop: start=0, step=1, limit=6
    $region2: #{graph_autoencoder.9} parent=1 // loop_pre_header
      _
    $region3: #{graph_autoencoder.9} parent=1 // loop_header
      %s10 = sphi 0, %s14
      %p11 = scmp.ge.s32.totalorder %s10, 6
      %s17 = sphi 0, %s29
      %s18 = sphi 0, %s25
      %s19 = sphi 0, %s17
      %s20 = sphi 0, %s18
      %s21 = sphi 0, %s19
      %s22 = sphi 0, %s20
      %s32 = sphi 0, %s34
      %s35 = sphi 0, %s32
      %s36 = sphi 0, %s35
      %s52 = sphi 0, %s36
      %s58 = sphi 0, %s60
      %s61 = sphi 0, %s58
      %s62 = sphi 0, %s61
      %s78 = sphi 0, %s62
      %s86 = sphi 0, %s88
      %s89 = sphi 0, %s86
      %s90 = sphi 0, %s89
      %s106 = sphi 0, %s90
      %s110 = sphi 0, %s110
      %s112 = sphi 0, %s110
      %s113 = sphi 0, %s112
      %s127 = sphi 0, %s113
      %s133 = sphi 0, %s135
      %s136 = sphi 0, %s133
      %s137 = sphi 0, %s136
      %s153 = sphi 0, %s137
    $region4: #{graph_autoencoder.9} parent=1 // loop_header_branch
      %13 = sbr.rel (%p11) target = $region8
    $region5: #{graph_autoencoder.9} parent=1 // loop_body
      %s15 = ssub.s32 %s10, 1
      %s16 = ssub.s32 %s10, 2
      %s23 = sadd.s32 1, %s18
      %p24 = scmp.ge.s32.totalorder %s23, 2
      %s25 = scalar_select %p24, 0, %s23
      %s26 = sadd.s32 1, %s17
      %s27 = scalar_select %p24, %s26, %s17
      %p28 = scmp.ge.s32.totalorder %s27, 2
      %s29 = scalar_select %p28, 0, %s27
      %s30 = ssub.s32 %s17, %s29
      %p31 = scmp.eq.s32.totalorder %s30, 0
      %s33 = sadd.s32 %s32, 1
      %s34 = scalar_select %p31, %s32, %s33
      %p37 = pneg %p31
      %p38 = scmp.eq.s32.totalorder %s10, 3
      %p39 = por %p37, %p38
      %p40 = scmp.ne.s32.totalorder %s32, %s35
      %p41 = scmp.eq.s32.totalorder %s10, 0
      %p42 = por %p40, %p41
      %p43 = scmp.ne.s32.totalorder %s32, %s35
      %p44 = scmp.eq.s32.totalorder %s15, 3
      %p45 = por %p43, %p44
      %p46 = scmp.ne.s32.totalorder %s35, %s36
      %p47 = scmp.eq.s32.totalorder %s15, 0
      %p48 = por %p46, %p47
      %p49 = scmp.ne.s32.totalorder %s35, %s36
      %p50 = scmp.eq.s32.totalorder %s16, 3
      %p51 = por %p49, %p50
      %p53 = scmp.ne.s32.totalorder %s36, %s52
      %p54 = scmp.eq.s32.totalorder %s16, 0
      %p55 = por %p53, %p54
      %s56 = ssub.s32 %s18, %s25
      %p57 = scmp.eq.s32.totalorder %s56, 0
      %s59 = sadd.s32 %s58, 1
      %s60 = scalar_select %p57, %s58, %s59
      %p63 = pneg %p57
      %p64 = scmp.eq.s32.totalorder %s10, 3
      %p65 = por %p63, %p64
      %p66 = scmp.ne.s32.totalorder %s58, %s61
      %p67 = scmp.eq.s32.totalorder %s10, 0
      %p68 = por %p66, %p67
      %p69 = scmp.ne.s32.totalorder %s58, %s61
      %p70 = scmp.eq.s32.totalorder %s15, 3
      %p71 = por %p69, %p70
      %p72 = scmp.ne.s32.totalorder %s61, %s62
      %p73 = scmp.eq.s32.totalorder %s15, 0
      %p74 = por %p72, %p73
      %p75 = scmp.ne.s32.totalorder %s61, %s62
      %p76 = scmp.eq.s32.totalorder %s16, 3
      %p77 = por %p75, %p76
      %p79 = scmp.ne.s32.totalorder %s62, %s78
      %p80 = scmp.eq.s32.totalorder %s16, 0
      %p81 = por %p79, %p80
      %s82 = ssub.s32 %s17, %s29
      %s83 = ssub.s32 %s18, %s25
      %s84 = sor.u32 %s82, %s83
      %p85 = scmp.eq.s32.totalorder %s84, 0
      %s87 = sadd.s32 %s86, 1
      %s88 = scalar_select %p85, %s86, %s87
      %p91 = pneg %p85
      %p92 = scmp.eq.s32.totalorder %s10, 3
      %p93 = por %p91, %p92
      %p94 = scmp.ne.s32.totalorder %s86, %s89
      %p95 = scmp.eq.s32.totalorder %s10, 0
      %p96 = por %p94, %p95
      %p97 = scmp.ne.s32.totalorder %s86, %s89
      %p98 = scmp.eq.s32.totalorder %s15, 3
      %p99 = por %p97, %p98
      %p100 = scmp.ne.s32.totalorder %s89, %s90
      %p101 = scmp.eq.s32.totalorder %s15, 0
      %p102 = por %p100, %p101
      %p103 = scmp.ne.s32.totalorder %s89, %s90
      %p104 = scmp.eq.s32.totalorder %s16, 3
      %p105 = por %p103, %p104
      %p107 = scmp.ne.s32.totalorder %s90, %s106
      %p108 = scmp.eq.s32.totalorder %s16, 0
      %p109 = por %p107, %p108
      %s111 = sadd.s32 %s110, 1
      %p114 = scmp.eq.s32.totalorder %s10, 3
      %p115 = scmp.ne.s32.totalorder %s110, %s112
      %p116 = scmp.eq.s32.totalorder %s10, 0
      %p117 = por %p115, %p116
      %p118 = scmp.ne.s32.totalorder %s110, %s112
      %p119 = scmp.eq.s32.totalorder %s15, 3
      %p120 = por %p118, %p119
      %p121 = scmp.ne.s32.totalorder %s112, %s113
      %p122 = scmp.eq.s32.totalorder %s15, 0
      %p123 = por %p121, %p122
      %p124 = scmp.ne.s32.totalorder %s112, %s113
      %p125 = scmp.eq.s32.totalorder %s16, 3
      %p126 = por %p124, %p125
      %p128 = scmp.ne.s32.totalorder %s113, %s127
      %p129 = scmp.eq.s32.totalorder %s16, 0
      %p130 = por %p128, %p129
      %s131 = ssub.s32 %s17, %s29
      %p132 = scmp.eq.s32.totalorder %s131, 0
      %s134 = sadd.s32 %s133, 1
      %s135 = scalar_select %p132, %s133, %s134
      %p138 = pneg %p132
      %p139 = scmp.eq.s32.totalorder %s10, 3
      %p140 = por %p138, %p139
      %p141 = scmp.ne.s32.totalorder %s133, %s136
      %p142 = scmp.eq.s32.totalorder %s10, 0
      %p143 = por %p141, %p142
      %p144 = scmp.ne.s32.totalorder %s133, %s136
      %p145 = scmp.eq.s32.totalorder %s15, 3
      %p146 = por %p144, %p145
      %p147 = scmp.ne.s32.totalorder %s136, %s137
      %p148 = scmp.eq.s32.totalorder %s15, 0
      %p149 = por %p147, %p148
      %p150 = scmp.ne.s32.totalorder %s136, %s137
      %p151 = scmp.eq.s32.totalorder %s16, 3
      %p152 = por %p150, %p151
      %p154 = scmp.ne.s32.totalorder %s137, %s153
      %p155 = scmp.eq.s32.totalorder %s16, 0
      %p156 = por %p154, %p155
      %p157 = scmp.le.s32.totalorder 1, %s10
      %p158 = scmp.lt.s32.totalorder %s10, 5
      %p159 = pnand %p157, %p158
      %p160 = pneg %p159
      // Predicated region
      $region9: #{graph_autoencoder.9} parent=5 // pred_check
        _
      $region10: #{graph_autoencoder.9} parent=5 // pred_check_branch
        %162 = sbr.rel (%p159) target = $region12
      $region11: #{graph_autoencoder.9} parent=5 // pred_region
        %s163 = ssub.s32 %s10, 1
        // Predicated region
        $region13: #{graph_autoencoder.9} parent=11 // pred_check
          %p164 = pneg %p123
        $region14: #{graph_autoencoder.9} parent=11 // pred_check_branch
          %166 = sbr.rel (%p164) target = $region16
        $region15: #{graph_autoencoder.9} parent=11 // pred_region
          _
        $region16: #{graph_autoencoder.9} parent=11 // pred_fallthru
          _
      $region12: #{graph_autoencoder.9} parent=5 // pred_fallthru
        _
      %p167 = scmp.lt.s32.totalorder %s10, 4
      // Predicated region
      $region17: #{graph_autoencoder.9} parent=5 // pred_check
        %p168 = pneg %p167
      $region18: #{graph_autoencoder.9} parent=5 // pred_check_branch
        %170 = sbr.rel (%p168) target = $region20
      $region19: #{graph_autoencoder.9} parent=5 // pred_region
        // Predicated region
        $region21: #{graph_autoencoder.9} parent=19 // pred_check
          %p171 = pneg %p42
        $region22: #{graph_autoencoder.9} parent=19 // pred_check_branch
          %173 = sbr.rel (%p171) target = $region24
        $region23: #{graph_autoencoder.9} parent=19 // pred_region
          %s174 = smul.u32 16, %s17
          %p175 = scmp.lt.s32.totalorder %s174, 31
          %s176 = scalar_select %p175, %s174, 31
          %s177 = smul.addr %s176, 4
          %s178 = scalar_lea.vmem %s0, %s177
          %s179 = smul.u32 16, %s17
        $region24: #{graph_autoencoder.9} parent=19 // pred_fallthru
          _
        // Predicated region
        $region25: #{graph_autoencoder.9} parent=19 // pred_check
          %p180 = pneg %p68
        $region26: #{graph_autoencoder.9} parent=19 // pred_check_branch
          %182 = sbr.rel (%p180) target = $region28
        $region27: #{graph_autoencoder.9} parent=19 // pred_region
          %s183 = smul.u32 16, %s18
          %p184 = scmp.lt.s32.totalorder %s183, 31
          %s185 = scalar_select %p184, %s183, 31
          %s186 = smul.addr %s185, 4
          %s187 = scalar_lea.vmem %s1, %s186
          %s188 = smul.u32 16, %s18
        $region28: #{graph_autoencoder.9} parent=19 // pred_fallthru
          _
        // Predicated region
        $region29: #{graph_autoencoder.9} parent=19 // pred_check
          %p189 = pneg %p96
        $region30: #{graph_autoencoder.9} parent=19 // pred_check_branch
          %191 = sbr.rel (%p189) target = $region32
        $region31: #{graph_autoencoder.9} parent=19 // pred_region
          %s192 = sand.u32 %s86, 1
          %s193 = sand.u32 %s86, 1
          %s194 = smul.addr %s193, 64
          %s195 = scalar_lea.vmem [#allocation5], %s194
          %s196 = smul.u32 16, %s17
          %s197 = smul.addr %s196, 2
          %s198 = sadd.s32 %s18, %s197
          %s199 = smul.addr %s198, 4
          %s200 = scalar_lea.vmem %s2, %s199
          // Predicated region
          $region33: #{graph_autoencoder.9} parent=31 // pred_check
            _
          $region34: #{graph_autoencoder.9} parent=31 // pred_check_branch
            %202 = sbr.rel (0) target = $region36
          $region35: #{graph_autoencoder.9} parent=31 // pred_region
            // Predicated region
            $region37: #{graph_autoencoder.9} parent=35 // pred_check
              _
            $region38: #{graph_autoencoder.9} parent=35 // pred_check_branch
              %204 = sbr.rel target = $region40
            $region39: #{graph_autoencoder.9} parent=35 // pred_region
              // Predicated region
              $region52: #{graph_autoencoder.9} parent=39 // pred_check
                _
              $region53: #{graph_autoencoder.9} parent=39 // pred_check_branch
                %249 = sbr.rel (0) target = $region55
              $region54: #{graph_autoencoder.9} parent=39 // pred_region
                loop: start=0, step=1, limit=1
                $region56: #{graph_autoencoder.9} parent=54 // loop_pre_header
                  _
                $region57: #{graph_autoencoder.9} parent=54 // loop_header
                  %s251 = sphi 0, %s255
                  %p252 = scmp.ge.s32.totalorder %s251, 1
                  %s256 = sphi %s200, %s200
                  %s257 = sphi %s195, %s195
                $region58: #{graph_autoencoder.9} parent=54 // loop_header_branch
                  %254 = sbr.rel (%p252) target = $region62
                $region59: #{graph_autoencoder.9} parent=54 // loop_body
                  _
                $region60: #{graph_autoencoder.9} parent=54 // loop_footer
                  %s255 = sadd.s32 1, %s251
                $region61: #{graph_autoencoder.9} parent=54 // loop_footer_branch
                  %250 = sbr.rel target = $region57
                $region62: #{graph_autoencoder.9} parent=54 // loop_exit
                  _
                loop: start=0, step=1, limit=1
                $region63: #{graph_autoencoder.9} parent=54 // loop_pre_header
                  _
                $region64: #{graph_autoencoder.9} parent=54 // loop_header
                  %s260 = sphi 0, %s264
                  %p261 = scmp.ge.s32.totalorder %s260, 1
                  %s265 = sphi %s200, %s200
                  %s266 = sphi %s195, %s195
                $region65: #{graph_autoencoder.9} parent=54 // loop_header_branch
                  %263 = sbr.rel (%p261) target = $region69
                $region66: #{graph_autoencoder.9} parent=54 // loop_body
                  %v267 = vld [vmem:[%s265] sm:$0xf]
                  %268 = vst [vmem:[%s266] sm:$0xf] %v267
                  %v269 = vld [vmem:[%s265 + $0x8] sm:$0xf]
                  %270 = vst [vmem:[%s266 + $0x4] sm:$0xf] %v269
                  %v271 = vld [vmem:[%s265 + $0x10] sm:$0xf]
                  %272 = vst [vmem:[%s266 + $0x8] sm:$0xf] %v271
                  %v273 = vld [vmem:[%s265 + $0x18] sm:$0xf]
                  %274 = vst [vmem:[%s266 + $0xc] sm:$0xf] %v273
                  %v275 = vld [vmem:[%s265 + $0x20] sm:$0xf]
                  %276 = vst [vmem:[%s266 + $0x10] sm:$0xf] %v275
                  %v277 = vld [vmem:[%s265 + $0x28] sm:$0xf]
                  %278 = vst [vmem:[%s266 + $0x14] sm:$0xf] %v277
                  %v279 = vld [vmem:[%s265 + $0x30] sm:$0xf]
                  %280 = vst [vmem:[%s266 + $0x18] sm:$0xf] %v279
                  %v281 = vld [vmem:[%s265 + $0x38] sm:$0xf]
                  %282 = vst [vmem:[%s266 + $0x1c] sm:$0xf] %v281
                  %v283 = vld [vmem:[%s265 + $0x40] sm:$0xf]
                  %284 = vst [vmem:[%s266 + $0x20] sm:$0xf] %v283
                  %v285 = vld [vmem:[%s265 + $0x48] sm:$0xf]
                  %286 = vst [vmem:[%s266 + $0x24] sm:$0xf] %v285
                  %v287 = vld [vmem:[%s265 + $0x50] sm:$0xf]
                  %288 = vst [vmem:[%s266 + $0x28] sm:$0xf] %v287
                  %v289 = vld [vmem:[%s265 + $0x58] sm:$0xf]
                  %290 = vst [vmem:[%s266 + $0x2c] sm:$0xf] %v289
                  %v291 = vld [vmem:[%s265 + $0x60] sm:$0xf]
                  %292 = vst [vmem:[%s266 + $0x30] sm:$0xf] %v291
                  %v293 = vld [vmem:[%s265 + $0x68] sm:$0xf]
                  %294 = vst [vmem:[%s266 + $0x34] sm:$0xf] %v293
                  %v295 = vld [vmem:[%s265 + $0x70] sm:$0xf]
                  %296 = vst [vmem:[%s266 + $0x38] sm:$0xf] %v295
                  %v297 = vld [vmem:[%s265 + $0x78] sm:$0xf]
                  %298 = vst [vmem:[%s266 + $0x3c] sm:$0xf] %v297
                $region67: #{graph_autoencoder.9} parent=54 // loop_footer
                  %s264 = sadd.s32 1, %s260
                $region68: #{graph_autoencoder.9} parent=54 // loop_footer_branch
                  %259 = sbr.rel target = $region64
                $region69: #{graph_autoencoder.9} parent=54 // loop_exit
                  _
              $region55: #{graph_autoencoder.9} parent=39 // pred_fallthru
                _
            $region40: #{graph_autoencoder.9} parent=35 // pred_fallthru
              _
            // Predicated region
            $region41: #{graph_autoencoder.9} parent=35 // pred_check
              _
            $region42: #{graph_autoencoder.9} parent=35 // pred_check_branch
              %206 = sbr.rel (0) target = $region44
            $region43: #{graph_autoencoder.9} parent=35 // pred_region
              loop: start=0, step=1, limit=1
              $region45: #{graph_autoencoder.9} parent=43 // loop_pre_header
                _
              $region46: #{graph_autoencoder.9} parent=43 // loop_header
                %s209 = sphi 0, %s213
                %p210 = scmp.ge.s32.totalorder %s209, 1
                %s214 = sphi %s200, %s200
                %s215 = sphi %s195, %s195
              $region47: #{graph_autoencoder.9} parent=43 // loop_header_branch
                %212 = sbr.rel (%p210) target = $region51
              $region48: #{graph_autoencoder.9} parent=43 // loop_body
                %v216 = vld [vmem:[%s214] sm:$0xf]
                %217 = vst [vmem:[%s215] sm:$0xf] %v216
                %v218 = vld [vmem:[%s214 + $0x8] sm:$0xf]
                %219 = vst [vmem:[%s215 + $0x4] sm:$0xf] %v218
                %v220 = vld [vmem:[%s214 + $0x10] sm:$0xf]
                %221 = vst [vmem:[%s215 + $0x8] sm:$0xf] %v220
                %v222 = vld [vmem:[%s214 + $0x18] sm:$0xf]
                %223 = vst [vmem:[%s215 + $0xc] sm:$0xf] %v222
                %v224 = vld [vmem:[%s214 + $0x20] sm:$0xf]
                %225 = vst [vmem:[%s215 + $0x10] sm:$0xf] %v224
                %v226 = vld [vmem:[%s214 + $0x28] sm:$0xf]
                %227 = vst [vmem:[%s215 + $0x14] sm:$0xf] %v226
                %v228 = vld [vmem:[%s214 + $0x30] sm:$0xf]
                %229 = vst [vmem:[%s215 + $0x18] sm:$0xf] %v228
                %v230 = vld [vmem:[%s214 + $0x38] sm:$0xf]
                %231 = vst [vmem:[%s215 + $0x1c] sm:$0xf] %v230
                %v232 = vld [vmem:[%s214 + $0x40] sm:$0xf]
                %233 = vst [vmem:[%s215 + $0x20] sm:$0xf] %v232
                %v234 = vld [vmem:[%s214 + $0x48] sm:$0xf]
                %235 = vst [vmem:[%s215 + $0x24] sm:$0xf] %v234
                %v236 = vld [vmem:[%s214 + $0x50] sm:$0xf]
                %237 = vst [vmem:[%s215 + $0x28] sm:$0xf] %v236
                %v238 = vld [vmem:[%s214 + $0x58] sm:$0xf]
                %239 = vst [vmem:[%s215 + $0x2c] sm:$0xf] %v238
                %v240 = vld [vmem:[%s214 + $0x60] sm:$0xf]
                %241 = vst [vmem:[%s215 + $0x30] sm:$0xf] %v240
                %v242 = vld [vmem:[%s214 + $0x68] sm:$0xf]
                %243 = vst [vmem:[%s215 + $0x34] sm:$0xf] %v242
                %v244 = vld [vmem:[%s214 + $0x70] sm:$0xf]
                %245 = vst [vmem:[%s215 + $0x38] sm:$0xf] %v244
                %v246 = vld [vmem:[%s214 + $0x78] sm:$0xf]
                %247 = vst [vmem:[%s215 + $0x3c] sm:$0xf] %v246
              $region49: #{graph_autoencoder.9} parent=43 // loop_footer
                %s213 = sadd.s32 1, %s209
              $region50: #{graph_autoencoder.9} parent=43 // loop_footer_branch
                %208 = sbr.rel target = $region46
              $region51: #{graph_autoencoder.9} parent=43 // loop_exit
                _
            $region44: #{graph_autoencoder.9} parent=35 // pred_fallthru
              _
          $region36: #{graph_autoencoder.9} parent=31 // pred_fallthru
            _
          %299 = vnop
        $region32: #{graph_autoencoder.9} parent=19 // pred_fallthru
          _
      $region20: #{graph_autoencoder.9} parent=5 // pred_fallthru
        _
      %p300 = scmp.le.s32.totalorder 1, %s10
      %p301 = scmp.lt.s32.totalorder %s10, 5
      %p302 = pnand %p300, %p301
      %p303 = pneg %p302
      // Predicated region
      $region70: #{graph_autoencoder.9} parent=5 // pred_check
        _
      $region71: #{graph_autoencoder.9} parent=5 // pred_check_branch
        %305 = sbr.rel (%p302) target = $region73
      $region72: #{graph_autoencoder.9} parent=5 // pred_region
        %s306 = ssub.s32 %s10, 1
        %s307 = sand.u32 %s89, 1
        %s308 = sand.u32 %s89, 1
        %s309 = smul.addr %s308, 64
        %s310 = scalar_lea.vmem [#allocation5], %s309
        // Predicated region
        $region74: #{graph_autoencoder.9} parent=72 // pred_check
          %p311 = pneg %p102
        $region75: #{graph_autoencoder.9} parent=72 // pred_check_branch
          %313 = sbr.rel (%p311) target = $region77
        $region76: #{graph_autoencoder.9} parent=72 // pred_region
          _
        $region77: #{graph_autoencoder.9} parent=72 // pred_fallthru
          _
        %s314 = smul.u32 16, %s19
        %p315 = scmp.lt.s32.totalorder %s314, 31
        %s316 = scalar_select %p315, %s314, 31
        %s317 = smul.addr %s316, 4
        %s318 = scalar_lea.vmem %s0, %s317
        %p319 = pneg %p48
        %p320 = pneg %p45
        %s321 = smul.u32 16, %s20
        %p322 = scmp.lt.s32.totalorder %s321, 31
        %s323 = scalar_select %p322, %s321, 31
        %s324 = smul.addr %s323, 4
        %s325 = scalar_lea.vmem %s1, %s324
        %p326 = pneg %p74
        %p327 = pneg %p71
        %s328 = sand.u32 %s89, 1
        %s329 = sand.u32 %s89, 1
        %s330 = smul.addr %s329, 64
        %s331 = scalar_lea.vmem [#allocation5], %s330
        %p332 = pneg %p102
        %p333 = pneg %p99
        %p334 = pneg %p123
        %p335 = pneg %p120
        %p336 = pneg %p149
        %p337 = pneg %p146
        %s338 = smul.u32 16, %s19
        %p339 = scmp.lt.s32.totalorder %s338, 31
        %s340 = scalar_select %p339, %s338, 31
        %s341 = smul.addr %s340, 8
        %s342 = scalar_lea.vmem %s4, %s341
        %s343 = smul.u32 16, %s19
        %p344 = scmp.lt.s32.totalorder %s343, 31
        %s345 = scalar_select %p344, %s343, 31
        %s346 = smul.addr %s345, 4
        %s347 = scalar_lea.vmem %s0, %s346
        %s348 = smul.u32 16, %s19
        %s349 = smul.u32 16, %s20
        %p350 = scmp.lt.s32.totalorder %s349, 31
        %s351 = scalar_select %p350, %s349, 31
        %s352 = smul.addr %s351, 4
        %s353 = scalar_lea.vmem %s1, %s352
        %s354 = smul.u32 16, %s20
        %s355 = smul.u32 16, %s19
        %s356 = smul.u32 16, %s19
        %p357 = scmp.lt.s32.totalorder %s356, 31
        %s358 = scalar_select %p357, %s356, 31
        %s359 = smul.addr %s358, 8
        %s360 = scalar_lea.vmem %s4, %s359
        %s361 = smul.u32 16, %s19
        %p363 = scmp.eq.s32.totalorder %s20, 0
        // Predicated region
        $region78: #{graph_autoencoder.9} parent=72 // pred_check
          %p364 = pneg %p363
        $region79: #{graph_autoencoder.9} parent=72 // pred_check_branch
          %366 = sbr.rel (%p364) target = $region81
        $region80: #{graph_autoencoder.9} parent=72 // pred_region
          %vm367 = vcmask 7168
          %368 = vst.msk [vmem:[#allocation2] sm:$0xff] %vm367, -1e+30
          %369 = vst.msk [vmem:[#allocation2 + $0x8] sm:$0xff] %vm367, -1e+30
          %370 = vst.msk [vmem:[#allocation2 + $0x10] sm:$0xff] %vm367, -1e+30
          %371 = vst.msk [vmem:[#allocation2 + $0x18] sm:$0xff] %vm367, -1e+30
          %372 = vst.msk [vmem:[#allocation2 + $0x20] sm:$0xff] %vm367, -1e+30
          %373 = vst.msk [vmem:[#allocation2 + $0x28] sm:$0xff] %vm367, -1e+30
          %374 = vst.msk [vmem:[#allocation2 + $0x30] sm:$0xff] %vm367, -1e+30
          %375 = vst.msk [vmem:[#allocation2 + $0x38] sm:$0xff] %vm367, -1e+30
          %376 = vst.msk [vmem:[#allocation2 + $0x40] sm:$0xff] %vm367, -1e+30
          %377 = vst.msk [vmem:[#allocation2 + $0x48] sm:$0xff] %vm367, -1e+30
          %378 = vst.msk [vmem:[#allocation2 + $0x50] sm:$0xff] %vm367, -1e+30
          %379 = vst.msk [vmem:[#allocation2 + $0x58] sm:$0xff] %vm367, -1e+30
          %380 = vst.msk [vmem:[#allocation2 + $0x60] sm:$0xff] %vm367, -1e+30
          %381 = vst.msk [vmem:[#allocation2 + $0x68] sm:$0xff] %vm367, -1e+30
          %382 = vst.msk [vmem:[#allocation2 + $0x70] sm:$0xff] %vm367, -1e+30
          %383 = vst.msk [vmem:[#allocation2 + $0x78] sm:$0xff] %vm367, -1e+30
          %384 = vst.msk [vmem:[#allocation3] sm:$0xff] %vm367, 0.0
          %385 = vst.msk [vmem:[#allocation3 + $0x8] sm:$0xff] %vm367, 0.0
          %386 = vst.msk [vmem:[#allocation3 + $0x10] sm:$0xff] %vm367, 0.0
          %387 = vst.msk [vmem:[#allocation3 + $0x18] sm:$0xff] %vm367, 0.0
          %388 = vst.msk [vmem:[#allocation3 + $0x20] sm:$0xff] %vm367, 0.0
          %389 = vst.msk [vmem:[#allocation3 + $0x28] sm:$0xff] %vm367, 0.0
          %390 = vst.msk [vmem:[#allocation3 + $0x30] sm:$0xff] %vm367, 0.0
          %391 = vst.msk [vmem:[#allocation3 + $0x38] sm:$0xff] %vm367, 0.0
          %392 = vst.msk [vmem:[#allocation3 + $0x40] sm:$0xff] %vm367, 0.0
          %393 = vst.msk [vmem:[#allocation3 + $0x48] sm:$0xff] %vm367, 0.0
          %394 = vst.msk [vmem:[#allocation3 + $0x50] sm:$0xff] %vm367, 0.0
          %395 = vst.msk [vmem:[#allocation3 + $0x58] sm:$0xff] %vm367, 0.0
          %396 = vst.msk [vmem:[#allocation3 + $0x60] sm:$0xff] %vm367, 0.0
          %397 = vst.msk [vmem:[#allocation3 + $0x68] sm:$0xff] %vm367, 0.0
          %398 = vst.msk [vmem:[#allocation3 + $0x70] sm:$0xff] %vm367, 0.0
          %399 = vst.msk [vmem:[#allocation3 + $0x78] sm:$0xff] %vm367, 0.0
          %400 = vst [vmem:[#allocation4] sm:$0xff] 0.0
          %401 = vst [vmem:[#allocation4 + $0x8] sm:$0xff] 0.0
          %402 = vst [vmem:[#allocation4 + $0x10] sm:$0xff] 0.0
          %403 = vst [vmem:[#allocation4 + $0x18] sm:$0xff] 0.0
          %404 = vst [vmem:[#allocation4 + $0x20] sm:$0xff] 0.0
          %405 = vst [vmem:[#allocation4 + $0x28] sm:$0xff] 0.0
          %406 = vst [vmem:[#allocation4 + $0x30] sm:$0xff] 0.0
          %407 = vst [vmem:[#allocation4 + $0x38] sm:$0xff] 0.0
          %408 = vst [vmem:[#allocation4 + $0x40] sm:$0xff] 0.0
          %409 = vst [vmem:[#allocation4 + $0x48] sm:$0xff] 0.0
          %410 = vst [vmem:[#allocation4 + $0x50] sm:$0xff] 0.0
          %411 = vst [vmem:[#allocation4 + $0x58] sm:$0xff] 0.0
          %412 = vst [vmem:[#allocation4 + $0x60] sm:$0xff] 0.0
          %413 = vst [vmem:[#allocation4 + $0x68] sm:$0xff] 0.0
          %414 = vst [vmem:[#allocation4 + $0x70] sm:$0xff] 0.0
          %415 = vst [vmem:[#allocation4 + $0x78] sm:$0xff] 0.0
        $region81: #{graph_autoencoder.9} parent=72 // pred_fallthru
          _
        %v416 = vld [vmem:[%s347] sm:$0xf]
        %v417 = vld [vmem:[%s347 + $0x4] sm:$0xf]
        %v418 = vld [vmem:[%s347 + $0x8] sm:$0xf]
        %v419 = vld [vmem:[%s347 + $0xc] sm:$0xf]
        %v420 = vld [vmem:[%s347 + $0x10] sm:$0xf]
        %v421 = vld [vmem:[%s347 + $0x14] sm:$0xf]
        %v422 = vld [vmem:[%s347 + $0x18] sm:$0xf]
        %v423 = vld [vmem:[%s347 + $0x1c] sm:$0xf]
        %v424 = vld [vmem:[%s347 + $0x20] sm:$0xf]
        %v425 = vld [vmem:[%s347 + $0x24] sm:$0xf]
        %v426 = vld [vmem:[%s347 + $0x28] sm:$0xf]
        %v427 = vld [vmem:[%s347 + $0x2c] sm:$0xf]
        %v428 = vld [vmem:[%s347 + $0x30] sm:$0xf]
        %v429 = vld [vmem:[%s347 + $0x34] sm:$0xf]
        %v430 = vld [vmem:[%s347 + $0x38] sm:$0xf]
        %v431 = vld [vmem:[%s347 + $0x3c] sm:$0xf]
        %v432 = vld [vmem:[%s353] sm:$0xf]
        %v433 = vld [vmem:[%s353 + $0x4] sm:$0xf]
        %v434 = vld [vmem:[%s353 + $0x8] sm:$0xf]
        %v435 = vld [vmem:[%s353 + $0xc] sm:$0xf]
        %v436 = vld [vmem:[%s353 + $0x10] sm:$0xf]
        %v437 = vld [vmem:[%s353 + $0x14] sm:$0xf]
        %v438 = vld [vmem:[%s353 + $0x18] sm:$0xf]
        %v439 = vld [vmem:[%s353 + $0x1c] sm:$0xf]
        %v440 = vld [vmem:[%s353 + $0x20] sm:$0xf]
        %v441 = vld [vmem:[%s353 + $0x24] sm:$0xf]
        %v442 = vld [vmem:[%s353 + $0x28] sm:$0xf]
        %v443 = vld [vmem:[%s353 + $0x2c] sm:$0xf]
        %v444 = vld [vmem:[%s353 + $0x30] sm:$0xf]
        %v445 = vld [vmem:[%s353 + $0x34] sm:$0xf]
        %v446 = vld [vmem:[%s353 + $0x38] sm:$0xf]
        %v447 = vld [vmem:[%s353 + $0x3c] sm:$0xf]
        %v448 = vld [vmem:[%s3] sm:$0x1]
        %v449 = vld [vmem:[%s3 + $0x1] sm:$0x1]
        %v450 = vunpack.c.l.bf16 %v416
        %v451 = vunpack.c.l.bf16 %v417
        %v452 = vunpack.c.l.bf16 %v418
        %v453 = vunpack.c.l.bf16 %v419
        %v454 = vunpack.c.l.bf16 %v420
        %v455 = vunpack.c.l.bf16 %v421
        %v456 = vunpack.c.l.bf16 %v422
        %v457 = vunpack.c.l.bf16 %v423
        %v458 = vunpack.c.l.bf16 %v424
        %v459 = vunpack.c.l.bf16 %v425
        %v460 = vunpack.c.l.bf16 %v426
        %v461 = vunpack.c.l.bf16 %v427
        %v462 = vunpack.c.l.bf16 %v428
        %v463 = vunpack.c.l.bf16 %v429
        %v464 = vunpack.c.l.bf16 %v430
        %v465 = vunpack.c.l.bf16 %v431
        %v466 = vlaneseq
        %v467 = vshrl.u32 %v466, 7
        %v468 = vsub.s32 0, %v467
        %v469 = vrot.slane %v448, %v468
        %v470 = vmul.f32 %v450, %v469
        %v471 = vmul.f32 %v451, %v469
        %v472 = vmul.f32 %v452, %v469
        %v473 = vmul.f32 %v453, %v469
        %v474 = vmul.f32 %v454, %v469
        %v475 = vmul.f32 %v455, %v469
        %v476 = vmul.f32 %v456, %v469
        %v477 = vmul.f32 %v457, %v469
        %v478 = vmul.f32 %v458, %v469
        %v479 = vmul.f32 %v459, %v469
        %v480 = vmul.f32 %v460, %v469
        %v481 = vmul.f32 %v461, %v469
        %v482 = vmul.f32 %v462, %v469
        %v483 = vmul.f32 %v463, %v469
        %v484 = vmul.f32 %v464, %v469
        %v485 = vmul.f32 %v465, %v469
        %486 = vadd.xlane.f32.xlu0 %v470
        %v487 = vpop.xlane.xlu0 %486
        %488 = vadd.xlane.f32.xlu0 %v471
        %v489 = vpop.xlane.xlu0 %488
        %490 = vadd.xlane.f32.xlu0 %v472
        %v491 = vpop.xlane.xlu0 %490
        %492 = vadd.xlane.f32.xlu0 %v473
        %v493 = vpop.xlane.xlu0 %492
        %494 = vadd.xlane.f32.xlu0 %v474
        %v495 = vpop.xlane.xlu0 %494
        %496 = vadd.xlane.f32.xlu0 %v475
        %v497 = vpop.xlane.xlu0 %496
        %498 = vadd.xlane.f32.xlu0 %v476
        %v499 = vpop.xlane.xlu0 %498
        %500 = vadd.xlane.f32.xlu0 %v477
        %v501 = vpop.xlane.xlu0 %500
        %502 = vadd.xlane.f32.xlu0 %v478
        %v503 = vpop.xlane.xlu0 %502
        %504 = vadd.xlane.f32.xlu0 %v479
        %v505 = vpop.xlane.xlu0 %504
        %506 = vadd.xlane.f32.xlu0 %v480
        %v507 = vpop.xlane.xlu0 %506
        %508 = vadd.xlane.f32.xlu0 %v481
        %v509 = vpop.xlane.xlu0 %508
        %510 = vadd.xlane.f32.xlu0 %v482
        %v511 = vpop.xlane.xlu0 %510
        %512 = vadd.xlane.f32.xlu0 %v483
        %v513 = vpop.xlane.xlu0 %512
        %514 = vadd.xlane.f32.xlu0 %v484
        %v515 = vpop.xlane.xlu0 %514
        %516 = vadd.xlane.f32.xlu0 %v485
        %v517 = vpop.xlane.xlu0 %516
        %v518 = vpack.c.bf16 %v449, %v449
        %v535 = vunpack.c.l.b16 %v432
        %v536 = vunpack.c.l.b16 %v433
        %v537 = vunpack.c.l.b16 %v434
        %v538 = vunpack.c.l.b16 %v435
        %v539 = vunpack.c.l.b16 %v436
        %v540 = vunpack.c.l.b16 %v437
        %v541 = vunpack.c.l.b16 %v438
        %v542 = vunpack.c.l.b16 %v439
        %v543 = vunpack.c.l.b16 %v440
        %v544 = vunpack.c.l.b16 %v441
        %v545 = vunpack.c.l.b16 %v442
        %v546 = vunpack.c.l.b16 %v443
        %v547 = vunpack.c.l.b16 %v444
        %v548 = vunpack.c.l.b16 %v445
        %v549 = vunpack.c.l.b16 %v446
        %v550 = vunpack.c.l.b16 %v447
        %v551 = vpack.c.b16 %v536, %v535
        %v552 = vpack.c.b16 %v538, %v537
        %v553 = vpack.c.b16 %v540, %v539
        %v554 = vpack.c.b16 %v542, %v541
        %v555 = vpack.c.b16 %v544, %v543
        %v556 = vpack.c.b16 %v546, %v545
        %v557 = vpack.c.b16 %v548, %v547
        %v558 = vpack.c.b16 %v550, %v549
        %567 = vmatprep.subr.bf16.mxu0 0
        %568 = vmatpush1.bf16.xpose.msra.mxu0 %v551
        %569 = vmatprep.subr.bf16.mxu0 0
        %570 = vmatpush1.bf16.xpose.msra.mxu0 %v552
        %571 = vmatprep.subr.bf16.mxu0 0
        %572 = vmatpush1.bf16.xpose.msra.mxu0 %v553
        %573 = vmatprep.subr.bf16.mxu0 0
        %574 = vmatpush1.bf16.xpose.msra.mxu0 %v554
        %575 = vmatprep.subr.bf16.mxu0 0
        %576 = vmatpush1.bf16.xpose.msra.mxu0 %v555
        %577 = vmatprep.subr.bf16.mxu0 0
        %578 = vmatpush1.bf16.xpose.msra.mxu0 %v556
        %579 = vmatprep.subr.bf16.mxu0 0
        %580 = vmatpush1.bf16.xpose.msra.mxu0 %v557
        %581 = vmatprep.subr.bf16.mxu0 0
        %582 = vmatpush1.bf16.xpose.msra.mxu0 %v558
        %583 = vmatprep.subr.bf16.mxu0 0
        %584 = vmatpush1.bf16.xpose.msra.mxu0 0
        %585 = vmatprep.subr.bf16.mxu0 0
        %586 = vmatpush1.bf16.xpose.msra.mxu0 0
        %587 = vmatprep.subr.bf16.mxu0 0
        %588 = vmatpush1.bf16.xpose.msra.mxu0 0
        %589 = vmatprep.subr.bf16.mxu0 0
        %590 = vmatpush1.bf16.xpose.msra.mxu0 0
        %591 = vmatprep.subr.bf16.mxu0 0
        %592 = vmatpush1.bf16.xpose.msra.mxu0 0
        %593 = vmatprep.subr.bf16.mxu0 0
        %594 = vmatpush1.bf16.xpose.msra.mxu0 0
        %595 = vmatprep.subr.bf16.mxu0 0
        %596 = vmatpush1.bf16.xpose.msra.mxu0 0
        %597 = vmatprep.subr.bf16.mxu0 0
        %598 = vmatpush1.bf16.xpose.msra.mxu0 0
        %599 = vmatprep.mubr.bf16.mxu0 0
        %600 = vmatmul.mubr.bf16.gmra.mrb[0].mxu0 %v518
        %v601 = vpop.f32.mrb[0].mxu0
        %v602 = vadd.f32 0.0, %v601
        %v603 = vpop.f32.mrb[0].mxu0
        %v604 = vpop.f32.mrb[0].mxu0
        %v605 = vpop.f32.mrb[0].mxu0
        %606 = vdwg.mxu0
        %v607 = vlaneseq
        %v608 = vshrl.u32 %v607, 7
        %v609 = vsub.s32 0, %v608
        %v610 = vrot.slane %v602, %v609
        %v611 = vadd.f32 %v487, %v610
        %v612 = vadd.f32 %v489, %v610
        %v613 = vadd.f32 %v491, %v610
        %v614 = vadd.f32 %v493, %v610
        %v615 = vadd.f32 %v495, %v610
        %v616 = vadd.f32 %v497, %v610
        %v617 = vadd.f32 %v499, %v610
        %v618 = vadd.f32 %v501, %v610
        %v619 = vadd.f32 %v503, %v610
        %v620 = vadd.f32 %v505, %v610
        %v621 = vadd.f32 %v507, %v610
        %v622 = vadd.f32 %v509, %v610
        %v623 = vadd.f32 %v511, %v610
        %v624 = vadd.f32 %v513, %v610
        %v625 = vadd.f32 %v515, %v610
        %v626 = vadd.f32 %v517, %v610
        %vm627 = vcmp.ge.f32.partialorder %v611, 0.0
        %vm628 = vcmp.ge.f32.partialorder %v612, 0.0
        %vm629 = vcmp.ge.f32.partialorder %v613, 0.0
        %vm630 = vcmp.ge.f32.partialorder %v614, 0.0
        %vm631 = vcmp.ge.f32.partialorder %v615, 0.0
        %vm632 = vcmp.ge.f32.partialorder %v616, 0.0
        %vm633 = vcmp.ge.f32.partialorder %v617, 0.0
        %vm634 = vcmp.ge.f32.partialorder %v618, 0.0
        %vm635 = vcmp.ge.f32.partialorder %v619, 0.0
        %vm636 = vcmp.ge.f32.partialorder %v620, 0.0
        %vm637 = vcmp.ge.f32.partialorder %v621, 0.0
        %vm638 = vcmp.ge.f32.partialorder %v622, 0.0
        %vm639 = vcmp.ge.f32.partialorder %v623, 0.0
        %vm640 = vcmp.ge.f32.partialorder %v624, 0.0
        %vm641 = vcmp.ge.f32.partialorder %v625, 0.0
        %vm642 = vcmp.ge.f32.partialorder %v626, 0.0
        %v643 = vmul.f32 %v611, 0.2
        %v644 = vmul.f32 %v612, 0.2
        %v645 = vmul.f32 %v613, 0.2
        %v646 = vmul.f32 %v614, 0.2
        %v647 = vmul.f32 %v615, 0.2
        %v648 = vmul.f32 %v616, 0.2
        %v649 = vmul.f32 %v617, 0.2
        %v650 = vmul.f32 %v618, 0.2
        %v651 = vmul.f32 %v619, 0.2
        %v652 = vmul.f32 %v620, 0.2
        %v653 = vmul.f32 %v621, 0.2
        %v654 = vmul.f32 %v622, 0.2
        %v655 = vmul.f32 %v623, 0.2
        %v656 = vmul.f32 %v624, 0.2
        %v657 = vmul.f32 %v625, 0.2
        %v658 = vmul.f32 %v626, 0.2
        %v659 = vsel %vm627, %v611, %v643
        %v660 = vsel %vm628, %v612, %v644
        %v661 = vsel %vm629, %v613, %v645
        %v662 = vsel %vm630, %v614, %v646
        %v663 = vsel %vm631, %v615, %v647
        %v664 = vsel %vm632, %v616, %v648
        %v665 = vsel %vm633, %v617, %v649
        %v666 = vsel %vm634, %v618, %v650
        %v667 = vsel %vm635, %v619, %v651
        %v668 = vsel %vm636, %v620, %v652
        %v669 = vsel %vm637, %v621, %v653
        %v670 = vsel %vm638, %v622, %v654
        %v671 = vsel %vm639, %v623, %v655
        %v672 = vsel %vm640, %v624, %v656
        %v673 = vsel %vm641, %v625, %v657
        %v674 = vsel %vm642, %v626, %v658
        %v675 = vld [vmem:[#allocation2] sm:$0xff]
        %v676 = vld [vmem:[#allocation2 + $0x8] sm:$0xff]
        %v677 = vld [vmem:[#allocation2 + $0x10] sm:$0xff]
        %v678 = vld [vmem:[#allocation2 + $0x18] sm:$0xff]
        %v679 = vld [vmem:[#allocation2 + $0x20] sm:$0xff]
        %v680 = vld [vmem:[#allocation2 + $0x28] sm:$0xff]
        %v681 = vld [vmem:[#allocation2 + $0x30] sm:$0xff]
        %v682 = vld [vmem:[#allocation2 + $0x38] sm:$0xff]
        %v683 = vld [vmem:[#allocation2 + $0x40] sm:$0xff]
        %v684 = vld [vmem:[#allocation2 + $0x48] sm:$0xff]
        %v685 = vld [vmem:[#allocation2 + $0x50] sm:$0xff]
        %v686 = vld [vmem:[#allocation2 + $0x58] sm:$0xff]
        %v687 = vld [vmem:[#allocation2 + $0x60] sm:$0xff]
        %v688 = vld [vmem:[#allocation2 + $0x68] sm:$0xff]
        %v689 = vld [vmem:[#allocation2 + $0x70] sm:$0xff]
        %v690 = vld [vmem:[#allocation2 + $0x78] sm:$0xff]
        %691 = vmax.xlane.f32.xlu0 %v659
        %v692 = vpop.xlane.xlu0 %691
        %693 = vmax.xlane.f32.xlu0 %v660
        %v694 = vpop.xlane.xlu0 %693
        %695 = vmax.xlane.f32.xlu0 %v661
        %v696 = vpop.xlane.xlu0 %695
        %697 = vmax.xlane.f32.xlu0 %v662
        %v698 = vpop.xlane.xlu0 %697
        %699 = vmax.xlane.f32.xlu0 %v663
        %v700 = vpop.xlane.xlu0 %699
        %701 = vmax.xlane.f32.xlu0 %v664
        %v702 = vpop.xlane.xlu0 %701
        %703 = vmax.xlane.f32.xlu0 %v665
        %v704 = vpop.xlane.xlu0 %703
        %705 = vmax.xlane.f32.xlu0 %v666
        %v706 = vpop.xlane.xlu0 %705
        %707 = vmax.xlane.f32.xlu0 %v667
        %v708 = vpop.xlane.xlu0 %707
        %709 = vmax.xlane.f32.xlu0 %v668
        %v710 = vpop.xlane.xlu0 %709
        %711 = vmax.xlane.f32.xlu0 %v669
        %v712 = vpop.xlane.xlu0 %711
        %713 = vmax.xlane.f32.xlu0 %v670
        %v714 = vpop.xlane.xlu0 %713
        %715 = vmax.xlane.f32.xlu0 %v671
        %v716 = vpop.xlane.xlu0 %715
        %717 = vmax.xlane.f32.xlu0 %v672
        %v718 = vpop.xlane.xlu0 %717
        %719 = vmax.xlane.f32.xlu0 %v673
        %v720 = vpop.xlane.xlu0 %719
        %721 = vmax.xlane.f32.xlu0 %v674
        %v722 = vpop.xlane.xlu0 %721
        %v723 = vmax.f32 %v675, %v692
        %v724 = vmax.f32 %v676, %v694
        %v725 = vmax.f32 %v677, %v696
        %v726 = vmax.f32 %v678, %v698
        %v727 = vmax.f32 %v679, %v700
        %v728 = vmax.f32 %v680, %v702
        %v729 = vmax.f32 %v681, %v704
        %v730 = vmax.f32 %v682, %v706
        %v731 = vmax.f32 %v683, %v708
        %v732 = vmax.f32 %v684, %v710
        %v733 = vmax.f32 %v685, %v712
        %v734 = vmax.f32 %v686, %v714
        %v735 = vmax.f32 %v687, %v716
        %v736 = vmax.f32 %v688, %v718
        %v737 = vmax.f32 %v689, %v720
        %v738 = vmax.f32 %v690, %v722
        %v739 = vsub.f32 %v675, %v723
        %v740 = vsub.f32 %v676, %v724
        %v741 = vsub.f32 %v677, %v725
        %v742 = vsub.f32 %v678, %v726
        %v743 = vsub.f32 %v679, %v727
        %v744 = vsub.f32 %v680, %v728
        %v745 = vsub.f32 %v681, %v729
        %v746 = vsub.f32 %v682, %v730
        %v747 = vsub.f32 %v683, %v731
        %v748 = vsub.f32 %v684, %v732
        %v749 = vsub.f32 %v685, %v733
        %v750 = vsub.f32 %v686, %v734
        %v751 = vsub.f32 %v687, %v735
        %v752 = vsub.f32 %v688, %v736
        %v753 = vsub.f32 %v689, %v737
        %v754 = vsub.f32 %v690, %v738
        %v755 = vmul.f32 %v739, 1.442695
        %v756 = vpow.pop %v755
        %v757 = vmul.f32 %v740, 1.442695
        %v758 = vpow.pop %v757
        %v759 = vmul.f32 %v741, 1.442695
        %v760 = vpow.pop %v759
        %v761 = vmul.f32 %v742, 1.442695
        %v762 = vpow.pop %v761
        %v763 = vmul.f32 %v743, 1.442695
        %v764 = vpow.pop %v763
        %v765 = vmul.f32 %v744, 1.442695
        %v766 = vpow.pop %v765
        %v767 = vmul.f32 %v745, 1.442695
        %v768 = vpow.pop %v767
        %v769 = vmul.f32 %v746, 1.442695
        %v770 = vpow.pop %v769
        %v771 = vmul.f32 %v747, 1.442695
        %v772 = vpow.pop %v771
        %v773 = vmul.f32 %v748, 1.442695
        %v774 = vpow.pop %v773
        %v775 = vmul.f32 %v749, 1.442695
        %v776 = vpow.pop %v775
        %v777 = vmul.f32 %v750, 1.442695
        %v778 = vpow.pop %v777
        %v779 = vmul.f32 %v751, 1.442695
        %v780 = vpow.pop %v779
        %v781 = vmul.f32 %v752, 1.442695
        %v782 = vpow.pop %v781
        %v783 = vmul.f32 %v753, 1.442695
        %v784 = vpow.pop %v783
        %v785 = vmul.f32 %v754, 1.442695
        %v786 = vpow.pop %v785
        %788 = vset.pattern.permute.xlu0 0
        %789 = vperm.xlu0 %788, %v723
        %v790 = vpop.permute.xlu0 %789
        %793 = vset.pattern.permute.xlu0 0
        %794 = vperm.xlu0 %793, %v724
        %v795 = vpop.permute.xlu0 %794
        %798 = vset.pattern.permute.xlu0 0
        %799 = vperm.xlu0 %798, %v725
        %v800 = vpop.permute.xlu0 %799
        %803 = vset.pattern.permute.xlu0 0
        %804 = vperm.xlu0 %803, %v726
        %v805 = vpop.permute.xlu0 %804
        %808 = vset.pattern.permute.xlu0 0
        %809 = vperm.xlu0 %808, %v727
        %v810 = vpop.permute.xlu0 %809
        %813 = vset.pattern.permute.xlu0 0
        %814 = vperm.xlu0 %813, %v728
        %v815 = vpop.permute.xlu0 %814
        %818 = vset.pattern.permute.xlu0 0
        %819 = vperm.xlu0 %818, %v729
        %v820 = vpop.permute.xlu0 %819
        %823 = vset.pattern.permute.xlu0 0
        %824 = vperm.xlu0 %823, %v730
        %v825 = vpop.permute.xlu0 %824
        %828 = vset.pattern.permute.xlu0 0
        %829 = vperm.xlu0 %828, %v731
        %v830 = vpop.permute.xlu0 %829
        %833 = vset.pattern.permute.xlu0 0
        %834 = vperm.xlu0 %833, %v732
        %v835 = vpop.permute.xlu0 %834
        %838 = vset.pattern.permute.xlu0 0
        %839 = vperm.xlu0 %838, %v733
        %v840 = vpop.permute.xlu0 %839
        %843 = vset.pattern.permute.xlu0 0
        %844 = vperm.xlu0 %843, %v734
        %v845 = vpop.permute.xlu0 %844
        %848 = vset.pattern.permute.xlu0 0
        %849 = vperm.xlu0 %848, %v735
        %v850 = vpop.permute.xlu0 %849
        %853 = vset.pattern.permute.xlu0 0
        %854 = vperm.xlu0 %853, %v736
        %v855 = vpop.permute.xlu0 %854
        %858 = vset.pattern.permute.xlu0 0
        %859 = vperm.xlu0 %858, %v737
        %v860 = vpop.permute.xlu0 %859
        %863 = vset.pattern.permute.xlu0 0
        %864 = vperm.xlu0 %863, %v738
        %v865 = vpop.permute.xlu0 %864
        %v867 = vsub.f32 %v659, %v790
        %v868 = vsub.f32 %v660, %v795
        %v869 = vsub.f32 %v661, %v800
        %v870 = vsub.f32 %v662, %v805
        %v871 = vsub.f32 %v663, %v810
        %v872 = vsub.f32 %v664, %v815
        %v873 = vsub.f32 %v665, %v820
        %v874 = vsub.f32 %v666, %v825
        %v875 = vsub.f32 %v667, %v830
        %v876 = vsub.f32 %v668, %v835
        %v877 = vsub.f32 %v669, %v840
        %v878 = vsub.f32 %v670, %v845
        %v879 = vsub.f32 %v671, %v850
        %v880 = vsub.f32 %v672, %v855
        %v881 = vsub.f32 %v673, %v860
        %v882 = vsub.f32 %v674, %v865
        %v883 = vmul.f32 %v867, 1.442695
        %v884 = vpow.pop %v883
        %v885 = vmul.f32 %v868, 1.442695
        %v886 = vpow.pop %v885
        %v887 = vmul.f32 %v869, 1.442695
        %v888 = vpow.pop %v887
        %v889 = vmul.f32 %v870, 1.442695
        %v890 = vpow.pop %v889
        %v891 = vmul.f32 %v871, 1.442695
        %v892 = vpow.pop %v891
        %v893 = vmul.f32 %v872, 1.442695
        %v894 = vpow.pop %v893
        %v895 = vmul.f32 %v873, 1.442695
        %v896 = vpow.pop %v895
        %v897 = vmul.f32 %v874, 1.442695
        %v898 = vpow.pop %v897
        %v899 = vmul.f32 %v875, 1.442695
        %v900 = vpow.pop %v899
        %v901 = vmul.f32 %v876, 1.442695
        %v902 = vpow.pop %v901
        %v903 = vmul.f32 %v877, 1.442695
        %v904 = vpow.pop %v903
        %v905 = vmul.f32 %v878, 1.442695
        %v906 = vpow.pop %v905
        %v907 = vmul.f32 %v879, 1.442695
        %v908 = vpow.pop %v907
        %v909 = vmul.f32 %v880, 1.442695
        %v910 = vpow.pop %v909
        %v911 = vmul.f32 %v881, 1.442695
        %v912 = vpow.pop %v911
        %v913 = vmul.f32 %v882, 1.442695
        %v914 = vpow.pop %v913
        %v915 = vld [vmem:[%s310] sm:$0xf]
        %v916 = vld [vmem:[%s310 + $0x4] sm:$0xf]
        %v917 = vld [vmem:[%s310 + $0x8] sm:$0xf]
        %v918 = vld [vmem:[%s310 + $0xc] sm:$0xf]
        %v919 = vld [vmem:[%s310 + $0x10] sm:$0xf]
        %v920 = vld [vmem:[%s310 + $0x14] sm:$0xf]
        %v921 = vld [vmem:[%s310 + $0x18] sm:$0xf]
        %v922 = vld [vmem:[%s310 + $0x1c] sm:$0xf]
        %v923 = vld [vmem:[%s310 + $0x20] sm:$0xf]
        %v924 = vld [vmem:[%s310 + $0x24] sm:$0xf]
        %v925 = vld [vmem:[%s310 + $0x28] sm:$0xf]
        %v926 = vld [vmem:[%s310 + $0x2c] sm:$0xf]
        %v927 = vld [vmem:[%s310 + $0x30] sm:$0xf]
        %v928 = vld [vmem:[%s310 + $0x34] sm:$0xf]
        %v929 = vld [vmem:[%s310 + $0x38] sm:$0xf]
        %v930 = vld [vmem:[%s310 + $0x3c] sm:$0xf]
        %v931 = vunpack.c.l.bf16 %v915
        %v932 = vunpack.c.l.bf16 %v916
        %v933 = vunpack.c.l.bf16 %v917
        %v934 = vunpack.c.l.bf16 %v918
        %v935 = vunpack.c.l.bf16 %v919
        %v936 = vunpack.c.l.bf16 %v920
        %v937 = vunpack.c.l.bf16 %v921
        %v938 = vunpack.c.l.bf16 %v922
        %v939 = vunpack.c.l.bf16 %v923
        %v940 = vunpack.c.l.bf16 %v924
        %v941 = vunpack.c.l.bf16 %v925
        %v942 = vunpack.c.l.bf16 %v926
        %v943 = vunpack.c.l.bf16 %v927
        %v944 = vunpack.c.l.bf16 %v928
        %v945 = vunpack.c.l.bf16 %v929
        %v946 = vunpack.c.l.bf16 %v930
        %v947 = vmul.f32 %v884, %v931
        %v948 = vmul.f32 %v886, %v932
        %v949 = vmul.f32 %v888, %v933
        %v950 = vmul.f32 %v890, %v934
        %v951 = vmul.f32 %v892, %v935
        %v952 = vmul.f32 %v894, %v936
        %v953 = vmul.f32 %v896, %v937
        %v954 = vmul.f32 %v898, %v938
        %v955 = vmul.f32 %v900, %v939
        %v956 = vmul.f32 %v902, %v940
        %v957 = vmul.f32 %v904, %v941
        %v958 = vmul.f32 %v906, %v942
        %v959 = vmul.f32 %v908, %v943
        %v960 = vmul.f32 %v910, %v944
        %v961 = vmul.f32 %v912, %v945
        %v962 = vmul.f32 %v914, %v946
        %v963 = vld [vmem:[#allocation3] sm:$0xff]
        %v964 = vld [vmem:[#allocation3 + $0x8] sm:$0xff]
        %v965 = vld [vmem:[#allocation3 + $0x10] sm:$0xff]
        %v966 = vld [vmem:[#allocation3 + $0x18] sm:$0xff]
        %v967 = vld [vmem:[#allocation3 + $0x20] sm:$0xff]
        %v968 = vld [vmem:[#allocation3 + $0x28] sm:$0xff]
        %v969 = vld [vmem:[#allocation3 + $0x30] sm:$0xff]
        %v970 = vld [vmem:[#allocation3 + $0x38] sm:$0xff]
        %v971 = vld [vmem:[#allocation3 + $0x40] sm:$0xff]
        %v972 = vld [vmem:[#allocation3 + $0x48] sm:$0xff]
        %v973 = vld [vmem:[#allocation3 + $0x50] sm:$0xff]
        %v974 = vld [vmem:[#allocation3 + $0x58] sm:$0xff]
        %v975 = vld [vmem:[#allocation3 + $0x60] sm:$0xff]
        %v976 = vld [vmem:[#allocation3 + $0x68] sm:$0xff]
        %v977 = vld [vmem:[#allocation3 + $0x70] sm:$0xff]
        %v978 = vld [vmem:[#allocation3 + $0x78] sm:$0xff]
        %v979 = vmul.f32 %v756, %v963
        %v980 = vmul.f32 %v758, %v964
        %v981 = vmul.f32 %v760, %v965
        %v982 = vmul.f32 %v762, %v966
        %v983 = vmul.f32 %v764, %v967
        %v984 = vmul.f32 %v766, %v968
        %v985 = vmul.f32 %v768, %v969
        %v986 = vmul.f32 %v770, %v970
        %v987 = vmul.f32 %v772, %v971
        %v988 = vmul.f32 %v774, %v972
        %v989 = vmul.f32 %v776, %v973
        %v990 = vmul.f32 %v778, %v974
        %v991 = vmul.f32 %v780, %v975
        %v992 = vmul.f32 %v782, %v976
        %v993 = vmul.f32 %v784, %v977
        %v994 = vmul.f32 %v786, %v978
        %995 = vadd.xlane.f32.xlu0 %v947
        %v996 = vpop.xlane.xlu0 %995
        %997 = vadd.xlane.f32.xlu0 %v948
        %v998 = vpop.xlane.xlu0 %997
        %999 = vadd.xlane.f32.xlu0 %v949
        %v1000 = vpop.xlane.xlu0 %999
        %1001 = vadd.xlane.f32.xlu0 %v950
        %v1002 = vpop.xlane.xlu0 %1001
        %1003 = vadd.xlane.f32.xlu0 %v951
        %v1004 = vpop.xlane.xlu0 %1003
        %1005 = vadd.xlane.f32.xlu0 %v952
        %v1006 = vpop.xlane.xlu0 %1005
        %1007 = vadd.xlane.f32.xlu0 %v953
        %v1008 = vpop.xlane.xlu0 %1007
        %1009 = vadd.xlane.f32.xlu0 %v954
        %v1010 = vpop.xlane.xlu0 %1009
        %1011 = vadd.xlane.f32.xlu0 %v955
        %v1012 = vpop.xlane.xlu0 %1011
        %1013 = vadd.xlane.f32.xlu0 %v956
        %v1014 = vpop.xlane.xlu0 %1013
        %1015 = vadd.xlane.f32.xlu0 %v957
        %v1016 = vpop.xlane.xlu0 %1015
        %1017 = vadd.xlane.f32.xlu0 %v958
        %v1018 = vpop.xlane.xlu0 %1017
        %1019 = vadd.xlane.f32.xlu0 %v959
        %v1020 = vpop.xlane.xlu0 %1019
        %1021 = vadd.xlane.f32.xlu0 %v960
        %v1022 = vpop.xlane.xlu0 %1021
        %1023 = vadd.xlane.f32.xlu0 %v961
        %v1024 = vpop.xlane.xlu0 %1023
        %1025 = vadd.xlane.f32.xlu0 %v962
        %v1026 = vpop.xlane.xlu0 %1025
        %v1027 = vadd.f32 %v979, %v996
        %v1028 = vadd.f32 %v980, %v998
        %v1029 = vadd.f32 %v981, %v1000
        %v1030 = vadd.f32 %v982, %v1002
        %v1031 = vadd.f32 %v983, %v1004
        %v1032 = vadd.f32 %v984, %v1006
        %v1033 = vadd.f32 %v985, %v1008
        %v1034 = vadd.f32 %v986, %v1010
        %v1035 = vadd.f32 %v987, %v1012
        %v1036 = vadd.f32 %v988, %v1014
        %v1037 = vadd.f32 %v989, %v1016
        %v1038 = vadd.f32 %v990, %v1018
        %v1039 = vadd.f32 %v991, %v1020
        %v1040 = vadd.f32 %v992, %v1022
        %v1041 = vadd.f32 %v993, %v1024
        %v1042 = vadd.f32 %v994, %v1026
        %vm1043 = vcmask 7168
        %1044 = vst.msk [vmem:[#allocation3] sm:$0xff] %vm1043, %v1027
        %1045 = vst.msk [vmem:[#allocation3 + $0x8] sm:$0xff] %vm1043, %v1028
        %1046 = vst.msk [vmem:[#allocation3 + $0x10] sm:$0xff] %vm1043, %v1029
        %1047 = vst.msk [vmem:[#allocation3 + $0x18] sm:$0xff] %vm1043, %v1030
        %1048 = vst.msk [vmem:[#allocation3 + $0x20] sm:$0xff] %vm1043, %v1031
        %1049 = vst.msk [vmem:[#allocation3 + $0x28] sm:$0xff] %vm1043, %v1032
        %1050 = vst.msk [vmem:[#allocation3 + $0x30] sm:$0xff] %vm1043, %v1033
        %1051 = vst.msk [vmem:[#allocation3 + $0x38] sm:$0xff] %vm1043, %v1034
        %1052 = vst.msk [vmem:[#allocation3 + $0x40] sm:$0xff] %vm1043, %v1035
        %1053 = vst.msk [vmem:[#allocation3 + $0x48] sm:$0xff] %vm1043, %v1036
        %1054 = vst.msk [vmem:[#allocation3 + $0x50] sm:$0xff] %vm1043, %v1037
        %1055 = vst.msk [vmem:[#allocation3 + $0x58] sm:$0xff] %vm1043, %v1038
        %1056 = vst.msk [vmem:[#allocation3 + $0x60] sm:$0xff] %vm1043, %v1039
        %1057 = vst.msk [vmem:[#allocation3 + $0x68] sm:$0xff] %vm1043, %v1040
        %1058 = vst.msk [vmem:[#allocation3 + $0x70] sm:$0xff] %vm1043, %v1041
        %1059 = vst.msk [vmem:[#allocation3 + $0x78] sm:$0xff] %vm1043, %v1042
        %v1060 = vld [vmem:[#allocation4] sm:$0xff]
        %v1061 = vld [vmem:[#allocation4 + $0x8] sm:$0xff]
        %v1062 = vld [vmem:[#allocation4 + $0x10] sm:$0xff]
        %v1063 = vld [vmem:[#allocation4 + $0x18] sm:$0xff]
        %v1064 = vld [vmem:[#allocation4 + $0x20] sm:$0xff]
        %v1065 = vld [vmem:[#allocation4 + $0x28] sm:$0xff]
        %v1066 = vld [vmem:[#allocation4 + $0x30] sm:$0xff]
        %v1067 = vld [vmem:[#allocation4 + $0x38] sm:$0xff]
        %v1068 = vld [vmem:[#allocation4 + $0x40] sm:$0xff]
        %v1069 = vld [vmem:[#allocation4 + $0x48] sm:$0xff]
        %v1070 = vld [vmem:[#allocation4 + $0x50] sm:$0xff]
        %v1071 = vld [vmem:[#allocation4 + $0x58] sm:$0xff]
        %v1072 = vld [vmem:[#allocation4 + $0x60] sm:$0xff]
        %v1073 = vld [vmem:[#allocation4 + $0x68] sm:$0xff]
        %v1074 = vld [vmem:[#allocation4 + $0x70] sm:$0xff]
        %v1075 = vld [vmem:[#allocation4 + $0x78] sm:$0xff]
        %1077 = vset.pattern.permute.xlu0 0
        %1078 = vperm.xlu0 %1077, %v756
        %v1079 = vpop.permute.xlu0 %1078
        %1082 = vset.pattern.permute.xlu0 0
        %1083 = vperm.xlu0 %1082, %v758
        %v1084 = vpop.permute.xlu0 %1083
        %1087 = vset.pattern.permute.xlu0 0
        %1088 = vperm.xlu0 %1087, %v760
        %v1089 = vpop.permute.xlu0 %1088
        %1092 = vset.pattern.permute.xlu0 0
        %1093 = vperm.xlu0 %1092, %v762
        %v1094 = vpop.permute.xlu0 %1093
        %1097 = vset.pattern.permute.xlu0 0
        %1098 = vperm.xlu0 %1097, %v764
        %v1099 = vpop.permute.xlu0 %1098
        %1102 = vset.pattern.permute.xlu0 0
        %1103 = vperm.xlu0 %1102, %v766
        %v1104 = vpop.permute.xlu0 %1103
        %1107 = vset.pattern.permute.xlu0 0
        %1108 = vperm.xlu0 %1107, %v768
        %v1109 = vpop.permute.xlu0 %1108
        %1112 = vset.pattern.permute.xlu0 0
        %1113 = vperm.xlu0 %1112, %v770
        %v1114 = vpop.permute.xlu0 %1113
        %1117 = vset.pattern.permute.xlu0 0
        %1118 = vperm.xlu0 %1117, %v772
        %v1119 = vpop.permute.xlu0 %1118
        %1122 = vset.pattern.permute.xlu0 0
        %1123 = vperm.xlu0 %1122, %v774
        %v1124 = vpop.permute.xlu0 %1123
        %1127 = vset.pattern.permute.xlu0 0
        %1128 = vperm.xlu0 %1127, %v776
        %v1129 = vpop.permute.xlu0 %1128
        %1132 = vset.pattern.permute.xlu0 0
        %1133 = vperm.xlu0 %1132, %v778
        %v1134 = vpop.permute.xlu0 %1133
        %1137 = vset.pattern.permute.xlu0 0
        %1138 = vperm.xlu0 %1137, %v780
        %v1139 = vpop.permute.xlu0 %1138
        %1142 = vset.pattern.permute.xlu0 0
        %1143 = vperm.xlu0 %1142, %v782
        %v1144 = vpop.permute.xlu0 %1143
        %1147 = vset.pattern.permute.xlu0 0
        %1148 = vperm.xlu0 %1147, %v784
        %v1149 = vpop.permute.xlu0 %1148
        %1152 = vset.pattern.permute.xlu0 0
        %1153 = vperm.xlu0 %1152, %v786
        %v1154 = vpop.permute.xlu0 %1153
        %v1156 = vmul.f32 %v1079, %v1060
        %v1157 = vmul.f32 %v1084, %v1061
        %v1158 = vmul.f32 %v1089, %v1062
        %v1159 = vmul.f32 %v1094, %v1063
        %v1160 = vmul.f32 %v1099, %v1064
        %v1161 = vmul.f32 %v1104, %v1065
        %v1162 = vmul.f32 %v1109, %v1066
        %v1163 = vmul.f32 %v1114, %v1067
        %v1164 = vmul.f32 %v1119, %v1068
        %v1165 = vmul.f32 %v1124, %v1069
        %v1166 = vmul.f32 %v1129, %v1070
        %v1167 = vmul.f32 %v1134, %v1071
        %v1168 = vmul.f32 %v1139, %v1072
        %v1169 = vmul.f32 %v1144, %v1073
        %v1170 = vmul.f32 %v1149, %v1074
        %v1171 = vmul.f32 %v1154, %v1075
        %v1172 = vpack.c.bf16 %v948, %v947
        %v1173 = vpack.c.bf16 %v950, %v949
        %v1174 = vpack.c.bf16 %v952, %v951
        %v1175 = vpack.c.bf16 %v954, %v953
        %v1176 = vpack.c.bf16 %v956, %v955
        %v1177 = vpack.c.bf16 %v958, %v957
        %v1178 = vpack.c.bf16 %v960, %v959
        %v1179 = vpack.c.bf16 %v962, %v961
        %1180 = vmatprep.subr.bf16.mxu0 0
        %1181 = vmatpush1.bf16.msra.mxu0 %v551
        %1182 = vmatprep.subr.bf16.mxu0 0
        %1183 = vmatpush1.bf16.msra.mxu0 %v552
        %1184 = vmatprep.subr.bf16.mxu0 0
        %1185 = vmatpush1.bf16.msra.mxu0 %v553
        %1186 = vmatprep.subr.bf16.mxu0 0
        %1187 = vmatpush1.bf16.msra.mxu0 %v554
        %1188 = vmatprep.subr.bf16.mxu0 0
        %1189 = vmatpush1.bf16.msra.mxu0 %v555
        %1190 = vmatprep.subr.bf16.mxu0 0
        %1191 = vmatpush1.bf16.msra.mxu0 %v556
        %1192 = vmatprep.subr.bf16.mxu0 0
        %1193 = vmatpush1.bf16.msra.mxu0 %v557
        %1194 = vmatprep.subr.bf16.mxu0 0
        %1195 = vmatpush1.bf16.msra.mxu0 %v558
        %1196 = vmatprep.subr.bf16.mxu0 0
        %1197 = vmatpush1.bf16.msra.mxu0 0
        %1198 = vmatprep.subr.bf16.mxu0 0
        %1199 = vmatpush1.bf16.msra.mxu0 0
        %1200 = vmatprep.subr.bf16.mxu0 0
        %1201 = vmatpush1.bf16.msra.mxu0 0
        %1202 = vmatprep.subr.bf16.mxu0 0
        %1203 = vmatpush1.bf16.msra.mxu0 0
        %1204 = vmatprep.subr.bf16.mxu0 0
        %1205 = vmatpush1.bf16.msra.mxu0 0
        %1206 = vmatprep.subr.bf16.mxu0 0
        %1207 = vmatpush1.bf16.msra.mxu0 0
        %1208 = vmatprep.subr.bf16.mxu0 0
        %1209 = vmatpush1.bf16.msra.mxu0 0
        %1210 = vmatprep.subr.bf16.mxu0 0
        %1211 = vmatpush1.bf16.msra.mxu0 0
        %1212 = vmatprep.mubr.bf16.mxu0 0
        %1213 = vmatmul.mubr.bf16.gmra.mrb[0].mxu0 %v1172
        %v1214 = vpop.f32.mrb[0].mxu0
        %v1215 = vadd.f32 0.0, %v1214
        %v1216 = vpop.f32.mrb[0].mxu0
        %v1217 = vpop.f32.mrb[0].mxu0
        %v1218 = vadd.f32 0.0, %v1217
        %v1219 = vpop.f32.mrb[0].mxu0
        %1220 = vmatprep.mubr.bf16.mxu0 0
        %1221 = vmatmul.mubr.bf16.gmra.mrb[0].mxu0 %v1173
        %v1222 = vpop.f32.mrb[0].mxu0
        %v1223 = vadd.f32 0.0, %v1222
        %v1224 = vpop.f32.mrb[0].mxu0
        %v1225 = vpop.f32.mrb[0].mxu0
        %v1226 = vadd.f32 0.0, %v1225
        %v1227 = vpop.f32.mrb[0].mxu0
        %1228 = vmatprep.mubr.bf16.mxu0 0
        %1229 = vmatmul.mubr.bf16.gmra.mrb[0].mxu0 %v1174
        %v1230 = vpop.f32.mrb[0].mxu0
        %v1231 = vadd.f32 0.0, %v1230
        %v1232 = vpop.f32.mrb[0].mxu0
        %v1233 = vpop.f32.mrb[0].mxu0
        %v1234 = vadd.f32 0.0, %v1233
        %v1235 = vpop.f32.mrb[0].mxu0
        %1236 = vmatprep.mubr.bf16.mxu0 0
        %1237 = vmatmul.mubr.bf16.gmra.mrb[0].mxu0 %v1175
        %v1238 = vpop.f32.mrb[0].mxu0
        %v1239 = vadd.f32 0.0, %v1238
        %v1240 = vpop.f32.mrb[0].mxu0
        %v1241 = vpop.f32.mrb[0].mxu0
        %v1242 = vadd.f32 0.0, %v1241
        %v1243 = vpop.f32.mrb[0].mxu0
        %1244 = vmatprep.mubr.bf16.mxu0 0
        %1245 = vmatmul.mubr.bf16.gmra.mrb[0].mxu0 %v1176
        %v1246 = vpop.f32.mrb[0].mxu0
        %v1247 = vadd.f32 0.0, %v1246
        %v1248 = vpop.f32.mrb[0].mxu0
        %v1249 = vpop.f32.mrb[0].mxu0
        %v1250 = vadd.f32 0.0, %v1249
        %v1251 = vpop.f32.mrb[0].mxu0
        %1252 = vmatprep.mubr.bf16.mxu0 0
        %1253 = vmatmul.mubr.bf16.gmra.mrb[0].mxu0 %v1177
        %v1254 = vpop.f32.mrb[0].mxu0
        %v1255 = vadd.f32 0.0, %v1254
        %v1256 = vpop.f32.mrb[0].mxu0
        %v1257 = vpop.f32.mrb[0].mxu0
        %v1258 = vadd.f32 0.0, %v1257
        %v1259 = vpop.f32.mrb[0].mxu0
        %1260 = vmatprep.mubr.bf16.mxu0 0
        %1261 = vmatmul.mubr.bf16.gmra.mrb[0].mxu0 %v1178
        %v1262 = vpop.f32.mrb[0].mxu0
        %v1263 = vadd.f32 0.0, %v1262
        %v1264 = vpop.f32.mrb[0].mxu0
        %v1265 = vpop.f32.mrb[0].mxu0
        %v1266 = vadd.f32 0.0, %v1265
        %v1267 = vpop.f32.mrb[0].mxu0
        %1268 = vmatprep.mubr.bf16.mxu0 0
        %1269 = vmatmul.mubr.bf16.gmra.mrb[0].mxu0 %v1179
        %v1270 = vpop.f32.mrb[0].mxu0
        %v1271 = vadd.f32 0.0, %v1270
        %v1272 = vpop.f32.mrb[0].mxu0
        %v1273 = vpop.f32.mrb[0].mxu0
        %v1274 = vadd.f32 0.0, %v1273
        %v1275 = vpop.f32.mrb[0].mxu0
        %1276 = vdwg.mxu0
        %v1277 = vadd.f32 %v1156, %v1215
        %v1278 = vadd.f32 %v1157, %v1218
        %v1279 = vadd.f32 %v1158, %v1223
        %v1280 = vadd.f32 %v1159, %v1226
        %v1281 = vadd.f32 %v1160, %v1231
        %v1282 = vadd.f32 %v1161, %v1234
        %v1283 = vadd.f32 %v1162, %v1239
        %v1284 = vadd.f32 %v1163, %v1242
        %v1285 = vadd.f32 %v1164, %v1247
        %v1286 = vadd.f32 %v1165, %v1250
        %v1287 = vadd.f32 %v1166, %v1255
        %v1288 = vadd.f32 %v1167, %v1258
        %v1289 = vadd.f32 %v1168, %v1263
        %v1290 = vadd.f32 %v1169, %v1266
        %v1291 = vadd.f32 %v1170, %v1271
        %v1292 = vadd.f32 %v1171, %v1274
        %1293 = vst [vmem:[#allocation4] sm:$0xff] %v1277
        %1294 = vst [vmem:[#allocation4 + $0x8] sm:$0xff] %v1278
        %1295 = vst [vmem:[#allocation4 + $0x10] sm:$0xff] %v1279
        %1296 = vst [vmem:[#allocation4 + $0x18] sm:$0xff] %v1280
        %1297 = vst [vmem:[#allocation4 + $0x20] sm:$0xff] %v1281
        %1298 = vst [vmem:[#allocation4 + $0x28] sm:$0xff] %v1282
        %1299 = vst [vmem:[#allocation4 + $0x30] sm:$0xff] %v1283
        %1300 = vst [vmem:[#allocation4 + $0x38] sm:$0xff] %v1284
        %1301 = vst [vmem:[#allocation4 + $0x40] sm:$0xff] %v1285
        %1302 = vst [vmem:[#allocation4 + $0x48] sm:$0xff] %v1286
        %1303 = vst [vmem:[#allocation4 + $0x50] sm:$0xff] %v1287
        %1304 = vst [vmem:[#allocation4 + $0x58] sm:$0xff] %v1288
        %1305 = vst [vmem:[#allocation4 + $0x60] sm:$0xff] %v1289
        %1306 = vst [vmem:[#allocation4 + $0x68] sm:$0xff] %v1290
        %1307 = vst [vmem:[#allocation4 + $0x70] sm:$0xff] %v1291
        %1308 = vst [vmem:[#allocation4 + $0x78] sm:$0xff] %v1292
        %1309 = vst.msk [vmem:[#allocation2] sm:$0xff] %vm1043, %v723
        %1310 = vst.msk [vmem:[#allocation2 + $0x8] sm:$0xff] %vm1043, %v724
        %1311 = vst.msk [vmem:[#allocation2 + $0x10] sm:$0xff] %vm1043, %v725
        %1312 = vst.msk [vmem:[#allocation2 + $0x18] sm:$0xff] %vm1043, %v726
        %1313 = vst.msk [vmem:[#allocation2 + $0x20] sm:$0xff] %vm1043, %v727
        %1314 = vst.msk [vmem:[#allocation2 + $0x28] sm:$0xff] %vm1043, %v728
        %1315 = vst.msk [vmem:[#allocation2 + $0x30] sm:$0xff] %vm1043, %v729
        %1316 = vst.msk [vmem:[#allocation2 + $0x38] sm:$0xff] %vm1043, %v730
        %1317 = vst.msk [vmem:[#allocation2 + $0x40] sm:$0xff] %vm1043, %v731
        %1318 = vst.msk [vmem:[#allocation2 + $0x48] sm:$0xff] %vm1043, %v732
        %1319 = vst.msk [vmem:[#allocation2 + $0x50] sm:$0xff] %vm1043, %v733
        %1320 = vst.msk [vmem:[#allocation2 + $0x58] sm:$0xff] %vm1043, %v734
        %1321 = vst.msk [vmem:[#allocation2 + $0x60] sm:$0xff] %vm1043, %v735
        %1322 = vst.msk [vmem:[#allocation2 + $0x68] sm:$0xff] %vm1043, %v736
        %1323 = vst.msk [vmem:[#allocation2 + $0x70] sm:$0xff] %vm1043, %v737
        %1324 = vst.msk [vmem:[#allocation2 + $0x78] sm:$0xff] %vm1043, %v738
        %p1325 = scmp.eq.s32.totalorder %s20, 1
        // Predicated region
        $region82: #{graph_autoencoder.9} parent=72 // pred_check
          %p1326 = pneg %p1325
        $region83: #{graph_autoencoder.9} parent=72 // pred_check_branch
          %1328 = sbr.rel (%p1326) target = $region85
        $region84: #{graph_autoencoder.9} parent=72 // pred_region
          %v1329 = vld [vmem:[%s3 + $0x2] sm:$0x1]
          %v1330 = vld [vmem:[#allocation4] sm:$0xff]
          %v1331 = vld [vmem:[#allocation4 + $0x8] sm:$0xff]
          %v1332 = vld [vmem:[#allocation4 + $0x10] sm:$0xff]
          %v1333 = vld [vmem:[#allocation4 + $0x18] sm:$0xff]
          %v1334 = vld [vmem:[#allocation4 + $0x20] sm:$0xff]
          %v1335 = vld [vmem:[#allocation4 + $0x28] sm:$0xff]
          %v1336 = vld [vmem:[#allocation4 + $0x30] sm:$0xff]
          %v1337 = vld [vmem:[#allocation4 + $0x38] sm:$0xff]
          %v1338 = vld [vmem:[#allocation4 + $0x40] sm:$0xff]
          %v1339 = vld [vmem:[#allocation4 + $0x48] sm:$0xff]
          %v1340 = vld [vmem:[#allocation4 + $0x50] sm:$0xff]
          %v1341 = vld [vmem:[#allocation4 + $0x58] sm:$0xff]
          %v1342 = vld [vmem:[#allocation4 + $0x60] sm:$0xff]
          %v1343 = vld [vmem:[#allocation4 + $0x68] sm:$0xff]
          %v1344 = vld [vmem:[#allocation4 + $0x70] sm:$0xff]
          %v1345 = vld [vmem:[#allocation4 + $0x78] sm:$0xff]
          %v1346 = vld [vmem:[#allocation3] sm:$0xff]
          %v1347 = vld [vmem:[#allocation3 + $0x8] sm:$0xff]
          %v1348 = vld [vmem:[#allocation3 + $0x10] sm:$0xff]
          %v1349 = vld [vmem:[#allocation3 + $0x18] sm:$0xff]
          %v1350 = vld [vmem:[#allocation3 + $0x20] sm:$0xff]
          %v1351 = vld [vmem:[#allocation3 + $0x28] sm:$0xff]
          %v1352 = vld [vmem:[#allocation3 + $0x30] sm:$0xff]
          %v1353 = vld [vmem:[#allocation3 + $0x38] sm:$0xff]
          %v1354 = vld [vmem:[#allocation3 + $0x40] sm:$0xff]
          %v1355 = vld [vmem:[#allocation3 + $0x48] sm:$0xff]
          %v1356 = vld [vmem:[#allocation3 + $0x50] sm:$0xff]
          %v1357 = vld [vmem:[#allocation3 + $0x58] sm:$0xff]
          %v1358 = vld [vmem:[#allocation3 + $0x60] sm:$0xff]
          %v1359 = vld [vmem:[#allocation3 + $0x68] sm:$0xff]
          %v1360 = vld [vmem:[#allocation3 + $0x70] sm:$0xff]
          %v1361 = vld [vmem:[#allocation3 + $0x78] sm:$0xff]
          %v1362 = vrcp.pop %v1346
          %v1363 = vrcp.pop %v1347
          %v1364 = vrcp.pop %v1348
          %v1365 = vrcp.pop %v1349
          %v1366 = vrcp.pop %v1350
          %v1367 = vrcp.pop %v1351
          %v1368 = vrcp.pop %v1352
          %v1369 = vrcp.pop %v1353
          %v1370 = vrcp.pop %v1354
          %v1371 = vrcp.pop %v1355
          %v1372 = vrcp.pop %v1356
          %v1373 = vrcp.pop %v1357
          %v1374 = vrcp.pop %v1358
          %v1375 = vrcp.pop %v1359
          %v1376 = vrcp.pop %v1360
          %v1377 = vrcp.pop %v1361
          %1379 = vset.pattern.permute.xlu0 0
          %1380 = vperm.xlu0 %1379, %v1362
          %v1381 = vpop.permute.xlu0 %1380
          %1384 = vset.pattern.permute.xlu0 0
          %1385 = vperm.xlu0 %1384, %v1363
          %v1386 = vpop.permute.xlu0 %1385
          %1389 = vset.pattern.permute.xlu0 0
          %1390 = vperm.xlu0 %1389, %v1364
          %v1391 = vpop.permute.xlu0 %1390
          %1394 = vset.pattern.permute.xlu0 0
          %1395 = vperm.xlu0 %1394, %v1365
          %v1396 = vpop.permute.xlu0 %1395
          %1399 = vset.pattern.permute.xlu0 0
          %1400 = vperm.xlu0 %1399, %v1366
          %v1401 = vpop.permute.xlu0 %1400
          %1404 = vset.pattern.permute.xlu0 0
          %1405 = vperm.xlu0 %1404, %v1367
          %v1406 = vpop.permute.xlu0 %1405
          %1409 = vset.pattern.permute.xlu0 0
          %1410 = vperm.xlu0 %1409, %v1368
          %v1411 = vpop.permute.xlu0 %1410
          %1414 = vset.pattern.permute.xlu0 0
          %1415 = vperm.xlu0 %1414, %v1369
          %v1416 = vpop.permute.xlu0 %1415
          %1419 = vset.pattern.permute.xlu0 0
          %1420 = vperm.xlu0 %1419, %v1370
          %v1421 = vpop.permute.xlu0 %1420
          %1424 = vset.pattern.permute.xlu0 0
          %1425 = vperm.xlu0 %1424, %v1371
          %v1426 = vpop.permute.xlu0 %1425
          %1429 = vset.pattern.permute.xlu0 0
          %1430 = vperm.xlu0 %1429, %v1372
          %v1431 = vpop.permute.xlu0 %1430
          %1434 = vset.pattern.permute.xlu0 0
          %1435 = vperm.xlu0 %1434, %v1373
          %v1436 = vpop.permute.xlu0 %1435
          %1439 = vset.pattern.permute.xlu0 0
          %1440 = vperm.xlu0 %1439, %v1374
          %v1441 = vpop.permute.xlu0 %1440
          %1444 = vset.pattern.permute.xlu0 0
          %1445 = vperm.xlu0 %1444, %v1375
          %v1446 = vpop.permute.xlu0 %1445
          %1449 = vset.pattern.permute.xlu0 0
          %1450 = vperm.xlu0 %1449, %v1376
          %v1451 = vpop.permute.xlu0 %1450
          %1454 = vset.pattern.permute.xlu0 0
          %1455 = vperm.xlu0 %1454, %v1377
          %v1456 = vpop.permute.xlu0 %1455
          %v1458 = vmul.f32 %v1330, %v1381
          %v1459 = vmul.f32 %v1331, %v1386
          %v1460 = vmul.f32 %v1332, %v1391
          %v1461 = vmul.f32 %v1333, %v1396
          %v1462 = vmul.f32 %v1334, %v1401
          %v1463 = vmul.f32 %v1335, %v1406
          %v1464 = vmul.f32 %v1336, %v1411
          %v1465 = vmul.f32 %v1337, %v1416
          %v1466 = vmul.f32 %v1338, %v1421
          %v1467 = vmul.f32 %v1339, %v1426
          %v1468 = vmul.f32 %v1340, %v1431
          %v1469 = vmul.f32 %v1341, %v1436
          %v1470 = vmul.f32 %v1342, %v1441
          %v1471 = vmul.f32 %v1343, %v1446
          %v1472 = vmul.f32 %v1344, %v1451
          %v1473 = vmul.f32 %v1345, %v1456
          %v1474 = vlaneseq
          %v1475 = vshrl.u32 %v1474, 7
          %v1476 = vsub.s32 0, %v1475
          %v1477 = vrot.slane %v1329, %v1476
          %v1478 = vadd.f32 %v1458, %v1477
          %v1479 = vadd.f32 %v1459, %v1477
          %v1480 = vadd.f32 %v1460, %v1477
          %v1481 = vadd.f32 %v1461, %v1477
          %v1482 = vadd.f32 %v1462, %v1477
          %v1483 = vadd.f32 %v1463, %v1477
          %v1484 = vadd.f32 %v1464, %v1477
          %v1485 = vadd.f32 %v1465, %v1477
          %v1486 = vadd.f32 %v1466, %v1477
          %v1487 = vadd.f32 %v1467, %v1477
          %v1488 = vadd.f32 %v1468, %v1477
          %v1489 = vadd.f32 %v1469, %v1477
          %v1490 = vadd.f32 %v1470, %v1477
          %v1491 = vadd.f32 %v1471, %v1477
          %v1492 = vadd.f32 %v1472, %v1477
          %v1493 = vadd.f32 %v1473, %v1477
          %1494 = vst [vmem:[%s360] sm:$0xff] %v1478
          %1495 = vst [vmem:[%s360 + $0x8] sm:$0xff] %v1479
          %1496 = vst [vmem:[%s360 + $0x10] sm:$0xff] %v1480
          %1497 = vst [vmem:[%s360 + $0x18] sm:$0xff] %v1481
          %1498 = vst [vmem:[%s360 + $0x20] sm:$0xff] %v1482
          %1499 = vst [vmem:[%s360 + $0x28] sm:$0xff] %v1483
          %1500 = vst [vmem:[%s360 + $0x30] sm:$0xff] %v1484
          %1501 = vst [vmem:[%s360 + $0x38] sm:$0xff] %v1485
          %1502 = vst [vmem:[%s360 + $0x40] sm:$0xff] %v1486
          %1503 = vst [vmem:[%s360 + $0x48] sm:$0xff] %v1487
          %1504 = vst [vmem:[%s360 + $0x50] sm:$0xff] %v1488
          %1505 = vst [vmem:[%s360 + $0x58] sm:$0xff] %v1489
          %1506 = vst [vmem:[%s360 + $0x60] sm:$0xff] %v1490
          %1507 = vst [vmem:[%s360 + $0x68] sm:$0xff] %v1491
          %1508 = vst [vmem:[%s360 + $0x70] sm:$0xff] %v1492
          %1509 = vst [vmem:[%s360 + $0x78] sm:$0xff] %v1493
        $region85: #{graph_autoencoder.9} parent=72 // pred_fallthru
          _
        %s1510 = smul.u32 16, %s19
        %p1511 = scmp.lt.s32.totalorder %s1510, 31
        %s1512 = scalar_select %p1511, %s1510, 31
        %s1513 = smul.addr %s1512, 8
        %s1514 = scalar_lea.vmem %s4, %s1513
        // Predicated region
        $region86: #{graph_autoencoder.9} parent=72 // pred_check
          %p1515 = pneg %p146
        $region87: #{graph_autoencoder.9} parent=72 // pred_check_branch
          %1517 = sbr.rel (%p1515) target = $region89
        $region88: #{graph_autoencoder.9} parent=72 // pred_region
          %s1518 = smul.u32 16, %s19
        $region89: #{graph_autoencoder.9} parent=72 // pred_fallthru
          _
      $region73: #{graph_autoencoder.9} parent=5 // pred_fallthru
        _
      %p1519 = scmp.le.s32.totalorder 2, %s10
      // Predicated region
      $region90: #{graph_autoencoder.9} parent=5 // pred_check
        %p1520 = pneg %p1519
      $region91: #{graph_autoencoder.9} parent=5 // pred_check_branch
        %1522 = sbr.rel (%p1520) target = $region93
      $region92: #{graph_autoencoder.9} parent=5 // pred_region
        %s1523 = ssub.s32 %s10, 2
        // Predicated region
        $region94: #{graph_autoencoder.9} parent=92 // pred_check
          %p1524 = pneg %p152
        $region95: #{graph_autoencoder.9} parent=92 // pred_check_branch
          %1526 = sbr.rel (%p1524) target = $region97
        $region96: #{graph_autoencoder.9} parent=92 // pred_region
          %s1527 = smul.u32 16, %s21
          %p1528 = scmp.lt.s32.totalorder %s1527, 31
          %s1529 = scalar_select %p1528, %s1527, 31
          %s1530 = smul.addr %s1529, 8
          %s1531 = scalar_lea.vmem %s4, %s1530
        $region97: #{graph_autoencoder.9} parent=92 // pred_fallthru
          _
      $region93: #{graph_autoencoder.9} parent=5 // pred_fallthru
        _
    $region6: #{graph_autoencoder.9} parent=1 // loop_footer
      %s14 = sadd.s32 1, %s10
    $region7: #{graph_autoencoder.9} parent=1 // loop_footer_branch
      %9 = sbr.rel target = $region3
    $region8: #{graph_autoencoder.9} parent=1 // loop_exit
      _

// kernel: graph_autoencoder.15
$region0: #{graph_autoencoder.15}
  #allocation0 [shape = 'u32[]', space=smem, size = 0x4, offset = 0x4, fixed_abs, tag = 'smem constant byte address 0x4 - core index']
  #allocation1 [shape = 'u32[144,128]{1,0:T(1,128)}', space=vmem, size = 0x12000, scoped, tag = 'internal scratch']
  #allocation2 [shape = 'f32[128,1]{1,0:T(8,128)}', space=vmem, size = 0x10000, scoped, tag = 'scratch operand']
  #allocation3 [shape = 'f32[128,1]{1,0:T(8,128)}', space=vmem, size = 0x10000, scoped, tag = 'scratch operand']
  #allocation4 [shape = 'f32[128,128]{1,0:T(8,128)}', space=vmem, size = 0x10000, scoped, tag = 'scratch operand']
  %s0 = inlined_call_operand.vmem [shape: bf16[256,128], index: 0, kind: input, shape index: {}, may-alias: {0,1}]
  %s1 = inlined_call_operand.vmem [shape: bf16[256,128], index: 1, kind: input, shape index: {}, may-alias: {0,1}]
  %s2 = inlined_call_operand.vmem [shape: bf16[256,256], index: 2, kind: input, shape index: {}]
  %s3 = inlined_call_operand.vmem [shape: f32[8,128], index: 3, kind: input, shape index: {}]
  %s4 = inlined_call_operand.hbm [shape: f32[256,128], index: 4, kind: output, shape index: {}]
  %s5 = sld [smem:[#allocation0]]
  $region98: #{graph_autoencoder.15} parent=0
    _
  %s7 = ssub.s32 1, %s5
  %s8 = scalar_select 0, %s7, %s5
  $region1: #{graph_autoencoder.15} parent=0
    #allocation5 [shape = 'u8[65536]{0}', space=vmem, size = 0x10000, scoped, tag = 'input window, operand 2']
    #allocation6 [shape = 'u8[131072]{0}', space=vmem, size = 0x20000, scoped, tag = 'output window, operand 0']
    #allocation7 [shape = 's32[2]{0}', space=sflag, size = 0x8, scoped, tag = 'scoped memory for graph_autoencoder.15']
    %9 = vsyncpa [#allocation7], 0
    %s10 = scalar_lea.sflag [#allocation7], 1
    %11 = vsyncpa %s10, 0
    loop: start=0, step=1, limit=6
    $region2: #{graph_autoencoder.15} parent=1 // loop_pre_header
      _
    $region3: #{graph_autoencoder.15} parent=1 // loop_header
      %s13 = sphi 0, %s17
      %p14 = scmp.ge.s32.totalorder %s13, 6
      %s20 = sphi 0, %s32
      %s21 = sphi 0, %s28
      %s22 = sphi 0, %s20
      %s23 = sphi 0, %s21
      %s24 = sphi 0, %s22
      %s25 = sphi 0, %s23
      %s35 = sphi 0, %s37
      %s38 = sphi 0, %s35
      %s39 = sphi 0, %s38
      %s55 = sphi 0, %s39
      %s61 = sphi 0, %s63
      %s64 = sphi 0, %s61
      %s65 = sphi 0, %s64
      %s81 = sphi 0, %s65
      %s89 = sphi 0, %s91
      %s92 = sphi 0, %s89
      %s93 = sphi 0, %s92
      %s109 = sphi 0, %s93
      %s113 = sphi 0, %s113
      %s115 = sphi 0, %s113
      %s116 = sphi 0, %s115
      %s130 = sphi 0, %s116
      %s136 = sphi 0, %s138
      %s139 = sphi 0, %s136
      %s140 = sphi 0, %s139
      %s156 = sphi 0, %s140
    $region4: #{graph_autoencoder.15} parent=1 // loop_header_branch
      %16 = sbr.rel (%p14) target = $region8
    $region5: #{graph_autoencoder.15} parent=1 // loop_body
      %s18 = ssub.s32 %s13, 1
      %s19 = ssub.s32 %s13, 2
      %s26 = sadd.s32 1, %s21
      %p27 = scmp.ge.s32.totalorder %s26, 2
      %s28 = scalar_select %p27, 0, %s26
      %s29 = sadd.s32 1, %s20
      %s30 = scalar_select %p27, %s29, %s20
      %p31 = scmp.ge.s32.totalorder %s30, 2
      %s32 = scalar_select %p31, 0, %s30
      %s33 = ssub.s32 %s20, %s32
      %p34 = scmp.eq.s32.totalorder %s33, 0
      %s36 = sadd.s32 %s35, 1
      %s37 = scalar_select %p34, %s35, %s36
      %p40 = pneg %p34
      %p41 = scmp.eq.s32.totalorder %s13, 3
      %p42 = por %p40, %p41
      %p43 = scmp.ne.s32.totalorder %s35, %s38
      %p44 = scmp.eq.s32.totalorder %s13, 0
      %p45 = por %p43, %p44
      %p46 = scmp.ne.s32.totalorder %s35, %s38
      %p47 = scmp.eq.s32.totalorder %s18, 3
      %p48 = por %p46, %p47
      %p49 = scmp.ne.s32.totalorder %s38, %s39
      %p50 = scmp.eq.s32.totalorder %s18, 0
      %p51 = por %p49, %p50
      %p52 = scmp.ne.s32.totalorder %s38, %s39
      %p53 = scmp.eq.s32.totalorder %s19, 3
      %p54 = por %p52, %p53
      %p56 = scmp.ne.s32.totalorder %s39, %s55
      %p57 = scmp.eq.s32.totalorder %s19, 0
      %p58 = por %p56, %p57
      %s59 = ssub.s32 %s21, %s28
      %p60 = scmp.eq.s32.totalorder %s59, 0
      %s62 = sadd.s32 %s61, 1
      %s63 = scalar_select %p60, %s61, %s62
      %p66 = pneg %p60
      %p67 = scmp.eq.s32.totalorder %s13, 3
      %p68 = por %p66, %p67
      %p69 = scmp.ne.s32.totalorder %s61, %s64
      %p70 = scmp.eq.s32.totalorder %s13, 0
      %p71 = por %p69, %p70
      %p72 = scmp.ne.s32.totalorder %s61, %s64
      %p73 = scmp.eq.s32.totalorder %s18, 3
      %p74 = por %p72, %p73
      %p75 = scmp.ne.s32.totalorder %s64, %s65
      %p76 = scmp.eq.s32.totalorder %s18, 0
      %p77 = por %p75, %p76
      %p78 = scmp.ne.s32.totalorder %s64, %s65
      %p79 = scmp.eq.s32.totalorder %s19, 3
      %p80 = por %p78, %p79
      %p82 = scmp.ne.s32.totalorder %s65, %s81
      %p83 = scmp.eq.s32.totalorder %s19, 0
      %p84 = por %p82, %p83
      %s85 = ssub.s32 %s20, %s32
      %s86 = ssub.s32 %s21, %s28
      %s87 = sor.u32 %s85, %s86
      %p88 = scmp.eq.s32.totalorder %s87, 0
      %s90 = sadd.s32 %s89, 1
      %s91 = scalar_select %p88, %s89, %s90
      %p94 = pneg %p88
      %p95 = scmp.eq.s32.totalorder %s13, 3
      %p96 = por %p94, %p95
      %p97 = scmp.ne.s32.totalorder %s89, %s92
      %p98 = scmp.eq.s32.totalorder %s13, 0
      %p99 = por %p97, %p98
      %p100 = scmp.ne.s32.totalorder %s89, %s92
      %p101 = scmp.eq.s32.totalorder %s18, 3
      %p102 = por %p100, %p101
      %p103 = scmp.ne.s32.totalorder %s92, %s93
      %p104 = scmp.eq.s32.totalorder %s18, 0
      %p105 = por %p103, %p104
      %p106 = scmp.ne.s32.totalorder %s92, %s93
      %p107 = scmp.eq.s32.totalorder %s19, 3
      %p108 = por %p106, %p107
      %p110 = scmp.ne.s32.totalorder %s93, %s109
      %p111 = scmp.eq.s32.totalorder %s19, 0
      %p112 = por %p110, %p111
      %s114 = sadd.s32 %s113, 1
      %p117 = scmp.eq.s32.totalorder %s13, 3
      %p118 = scmp.ne.s32.totalorder %s113, %s115
      %p119 = scmp.eq.s32.totalorder %s13, 0
      %p120 = por %p118, %p119
      %p121 = scmp.ne.s32.totalorder %s113, %s115
      %p122 = scmp.eq.s32.totalorder %s18, 3
      %p123 = por %p121, %p122
      %p124 = scmp.ne.s32.totalorder %s115, %s116
      %p125 = scmp.eq.s32.totalorder %s18, 0
      %p126 = por %p124, %p125
      %p127 = scmp.ne.s32.totalorder %s115, %s116
      %p128 = scmp.eq.s32.totalorder %s19, 3
      %p129 = por %p127, %p128
      %p131 = scmp.ne.s32.totalorder %s116, %s130
      %p132 = scmp.eq.s32.totalorder %s19, 0
      %p133 = por %p131, %p132
      %s134 = ssub.s32 %s20, %s32
      %p135 = scmp.eq.s32.totalorder %s134, 0
      %s137 = sadd.s32 %s136, 1
      %s138 = scalar_select %p135, %s136, %s137
      %p141 = pneg %p135
      %p142 = scmp.eq.s32.totalorder %s13, 3
      %p143 = por %p141, %p142
      %p144 = scmp.ne.s32.totalorder %s136, %s139
      %p145 = scmp.eq.s32.totalorder %s13, 0
      %p146 = por %p144, %p145
      %p147 = scmp.ne.s32.totalorder %s136, %s139
      %p148 = scmp.eq.s32.totalorder %s18, 3
      %p149 = por %p147, %p148
      %p150 = scmp.ne.s32.totalorder %s139, %s140
      %p151 = scmp.eq.s32.totalorder %s18, 0
      %p152 = por %p150, %p151
      %p153 = scmp.ne.s32.totalorder %s139, %s140
      %p154 = scmp.eq.s32.totalorder %s19, 3
      %p155 = por %p153, %p154
      %p157 = scmp.ne.s32.totalorder %s140, %s156
      %p158 = scmp.eq.s32.totalorder %s19, 0
      %p159 = por %p157, %p158
      %p160 = scmp.le.s32.totalorder 1, %s13
      %p161 = scmp.lt.s32.totalorder %s13, 5
      %p162 = pnand %p160, %p161
      %p163 = pneg %p162
      // Predicated region
      $region9: #{graph_autoencoder.15} parent=5 // pred_check
        _
      $region10: #{graph_autoencoder.15} parent=5 // pred_check_branch
        %165 = sbr.rel (%p162) target = $region12
      $region11: #{graph_autoencoder.15} parent=5 // pred_region
        %s166 = ssub.s32 %s13, 1
        // Predicated region
        $region13: #{graph_autoencoder.15} parent=11 // pred_check
          %p167 = pneg %p126
        $region14: #{graph_autoencoder.15} parent=11 // pred_check_branch
          %169 = sbr.rel (%p167) target = $region16
        $region15: #{graph_autoencoder.15} parent=11 // pred_region
          _
        $region16: #{graph_autoencoder.15} parent=11 // pred_fallthru
          _
      $region12: #{graph_autoencoder.15} parent=5 // pred_fallthru
        _
      %p170 = scmp.lt.s32.totalorder %s13, 4
      // Predicated region
      $region17: #{graph_autoencoder.15} parent=5 // pred_check
        %p171 = pneg %p170
      $region18: #{graph_autoencoder.15} parent=5 // pred_check_branch
        %173 = sbr.rel (%p171) target = $region20
      $region19: #{graph_autoencoder.15} parent=5 // pred_region
        // Predicated region
        $region21: #{graph_autoencoder.15} parent=19 // pred_check
          %p174 = pneg %p45
        $region22: #{graph_autoencoder.15} parent=19 // pred_check_branch
          %176 = sbr.rel (%p174) target = $region24
        $region23: #{graph_autoencoder.15} parent=19 // pred_region
          %s177 = smul.u32 16, %s20
          %p178 = scmp.lt.s32.totalorder %s177, 31
          %s179 = scalar_select %p178, %s177, 31
          %s180 = smul.addr %s179, 4
          %s181 = scalar_lea.vmem %s0, %s180
          %s182 = smul.u32 16, %s20
        $region24: #{graph_autoencoder.15} parent=19 // pred_fallthru
          _
        // Predicated region
        $region25: #{graph_autoencoder.15} parent=19 // pred_check
          %p183 = pneg %p71
        $region26: #{graph_autoencoder.15} parent=19 // pred_check_branch
          %185 = sbr.rel (%p183) target = $region28
        $region27: #{graph_autoencoder.15} parent=19 // pred_region
          %s186 = smul.u32 16, %s21
          %p187 = scmp.lt.s32.totalorder %s186, 31
          %s188 = scalar_select %p187, %s186, 31
          %s189 = smul.addr %s188, 4
          %s190 = scalar_lea.vmem %s1, %s189
          %s191 = smul.u32 16, %s21
        $region28: #{graph_autoencoder.15} parent=19 // pred_fallthru
          _
        // Predicated region
        $region29: #{graph_autoencoder.15} parent=19 // pred_check
          %p192 = pneg %p99
        $region30: #{graph_autoencoder.15} parent=19 // pred_check_branch
          %194 = sbr.rel (%p192) target = $region32
        $region31: #{graph_autoencoder.15} parent=19 // pred_region
          %s195 = sand.u32 %s89, 1
          %s196 = sand.u32 %s89, 1
          %s197 = smul.addr %s196, 64
          %s198 = scalar_lea.vmem [#allocation5], %s197
          %s199 = smul.u32 16, %s20
          %s200 = smul.addr %s199, 2
          %s201 = sadd.s32 %s21, %s200
          %s202 = smul.addr %s201, 4
          %s203 = scalar_lea.vmem %s2, %s202
          // Predicated region
          $region33: #{graph_autoencoder.15} parent=31 // pred_check
            _
          $region34: #{graph_autoencoder.15} parent=31 // pred_check_branch
            %205 = sbr.rel (0) target = $region36
          $region35: #{graph_autoencoder.15} parent=31 // pred_region
            // Predicated region
            $region37: #{graph_autoencoder.15} parent=35 // pred_check
              _
            $region38: #{graph_autoencoder.15} parent=35 // pred_check_branch
              %207 = sbr.rel target = $region40
            $region39: #{graph_autoencoder.15} parent=35 // pred_region
              // Predicated region
              $region52: #{graph_autoencoder.15} parent=39 // pred_check
                _
              $region53: #{graph_autoencoder.15} parent=39 // pred_check_branch
                %252 = sbr.rel (0) target = $region55
              $region54: #{graph_autoencoder.15} parent=39 // pred_region
                loop: start=0, step=1, limit=1
                $region56: #{graph_autoencoder.15} parent=54 // loop_pre_header
                  _
                $region57: #{graph_autoencoder.15} parent=54 // loop_header
                  %s254 = sphi 0, %s258
                  %p255 = scmp.ge.s32.totalorder %s254, 1
                  %s259 = sphi %s203, %s203
                  %s260 = sphi %s198, %s198
                $region58: #{graph_autoencoder.15} parent=54 // loop_header_branch
                  %257 = sbr.rel (%p255) target = $region62
                $region59: #{graph_autoencoder.15} parent=54 // loop_body
                  _
                $region60: #{graph_autoencoder.15} parent=54 // loop_footer
                  %s258 = sadd.s32 1, %s254
                $region61: #{graph_autoencoder.15} parent=54 // loop_footer_branch
                  %253 = sbr.rel target = $region57
                $region62: #{graph_autoencoder.15} parent=54 // loop_exit
                  _
                loop: start=0, step=1, limit=1
                $region63: #{graph_autoencoder.15} parent=54 // loop_pre_header
                  _
                $region64: #{graph_autoencoder.15} parent=54 // loop_header
                  %s263 = sphi 0, %s267
                  %p264 = scmp.ge.s32.totalorder %s263, 1
                  %s268 = sphi %s203, %s203
                  %s269 = sphi %s198, %s198
                $region65: #{graph_autoencoder.15} parent=54 // loop_header_branch
                  %266 = sbr.rel (%p264) target = $region69
                $region66: #{graph_autoencoder.15} parent=54 // loop_body
                  %v270 = vld [vmem:[%s268] sm:$0xf]
                  %271 = vst [vmem:[%s269] sm:$0xf] %v270
                  %v272 = vld [vmem:[%s268 + $0x8] sm:$0xf]
                  %273 = vst [vmem:[%s269 + $0x4] sm:$0xf] %v272
                  %v274 = vld [vmem:[%s268 + $0x10] sm:$0xf]
                  %275 = vst [vmem:[%s269 + $0x8] sm:$0xf] %v274
                  %v276 = vld [vmem:[%s268 + $0x18] sm:$0xf]
                  %277 = vst [vmem:[%s269 + $0xc] sm:$0xf] %v276
                  %v278 = vld [vmem:[%s268 + $0x20] sm:$0xf]
                  %279 = vst [vmem:[%s269 + $0x10] sm:$0xf] %v278
                  %v280 = vld [vmem:[%s268 + $0x28] sm:$0xf]
                  %281 = vst [vmem:[%s269 + $0x14] sm:$0xf] %v280
                  %v282 = vld [vmem:[%s268 + $0x30] sm:$0xf]
                  %283 = vst [vmem:[%s269 + $0x18] sm:$0xf] %v282
                  %v284 = vld [vmem:[%s268 + $0x38] sm:$0xf]
                  %285 = vst [vmem:[%s269 + $0x1c] sm:$0xf] %v284
                  %v286 = vld [vmem:[%s268 + $0x40] sm:$0xf]
                  %287 = vst [vmem:[%s269 + $0x20] sm:$0xf] %v286
                  %v288 = vld [vmem:[%s268 + $0x48] sm:$0xf]
                  %289 = vst [vmem:[%s269 + $0x24] sm:$0xf] %v288
                  %v290 = vld [vmem:[%s268 + $0x50] sm:$0xf]
                  %291 = vst [vmem:[%s269 + $0x28] sm:$0xf] %v290
                  %v292 = vld [vmem:[%s268 + $0x58] sm:$0xf]
                  %293 = vst [vmem:[%s269 + $0x2c] sm:$0xf] %v292
                  %v294 = vld [vmem:[%s268 + $0x60] sm:$0xf]
                  %295 = vst [vmem:[%s269 + $0x30] sm:$0xf] %v294
                  %v296 = vld [vmem:[%s268 + $0x68] sm:$0xf]
                  %297 = vst [vmem:[%s269 + $0x34] sm:$0xf] %v296
                  %v298 = vld [vmem:[%s268 + $0x70] sm:$0xf]
                  %299 = vst [vmem:[%s269 + $0x38] sm:$0xf] %v298
                  %v300 = vld [vmem:[%s268 + $0x78] sm:$0xf]
                  %301 = vst [vmem:[%s269 + $0x3c] sm:$0xf] %v300
                $region67: #{graph_autoencoder.15} parent=54 // loop_footer
                  %s267 = sadd.s32 1, %s263
                $region68: #{graph_autoencoder.15} parent=54 // loop_footer_branch
                  %262 = sbr.rel target = $region64
                $region69: #{graph_autoencoder.15} parent=54 // loop_exit
                  _
              $region55: #{graph_autoencoder.15} parent=39 // pred_fallthru
                _
            $region40: #{graph_autoencoder.15} parent=35 // pred_fallthru
              _
            // Predicated region
            $region41: #{graph_autoencoder.15} parent=35 // pred_check
              _
            $region42: #{graph_autoencoder.15} parent=35 // pred_check_branch
              %209 = sbr.rel (0) target = $region44
            $region43: #{graph_autoencoder.15} parent=35 // pred_region
              loop: start=0, step=1, limit=1
              $region45: #{graph_autoencoder.15} parent=43 // loop_pre_header
                _
              $region46: #{graph_autoencoder.15} parent=43 // loop_header
                %s212 = sphi 0, %s216
                %p213 = scmp.ge.s32.totalorder %s212, 1
                %s217 = sphi %s203, %s203
                %s218 = sphi %s198, %s198
              $region47: #{graph_autoencoder.15} parent=43 // loop_header_branch
                %215 = sbr.rel (%p213) target = $region51
              $region48: #{graph_autoencoder.15} parent=43 // loop_body
                %v219 = vld [vmem:[%s217] sm:$0xf]
                %220 = vst [vmem:[%s218] sm:$0xf] %v219
                %v221 = vld [vmem:[%s217 + $0x8] sm:$0xf]
                %222 = vst [vmem:[%s218 + $0x4] sm:$0xf] %v221
                %v223 = vld [vmem:[%s217 + $0x10] sm:$0xf]
                %224 = vst [vmem:[%s218 + $0x8] sm:$0xf] %v223
                %v225 = vld [vmem:[%s217 + $0x18] sm:$0xf]
                %226 = vst [vmem:[%s218 + $0xc] sm:$0xf] %v225
                %v227 = vld [vmem:[%s217 + $0x20] sm:$0xf]
                %228 = vst [vmem:[%s218 + $0x10] sm:$0xf] %v227
                %v229 = vld [vmem:[%s217 + $0x28] sm:$0xf]
                %230 = vst [vmem:[%s218 + $0x14] sm:$0xf] %v229
                %v231 = vld [vmem:[%s217 + $0x30] sm:$0xf]
                %232 = vst [vmem:[%s218 + $0x18] sm:$0xf] %v231
                %v233 = vld [vmem:[%s217 + $0x38] sm:$0xf]
                %234 = vst [vmem:[%s218 + $0x1c] sm:$0xf] %v233
                %v235 = vld [vmem:[%s217 + $0x40] sm:$0xf]
                %236 = vst [vmem:[%s218 + $0x20] sm:$0xf] %v235
                %v237 = vld [vmem:[%s217 + $0x48] sm:$0xf]
                %238 = vst [vmem:[%s218 + $0x24] sm:$0xf] %v237
                %v239 = vld [vmem:[%s217 + $0x50] sm:$0xf]
                %240 = vst [vmem:[%s218 + $0x28] sm:$0xf] %v239
                %v241 = vld [vmem:[%s217 + $0x58] sm:$0xf]
                %242 = vst [vmem:[%s218 + $0x2c] sm:$0xf] %v241
                %v243 = vld [vmem:[%s217 + $0x60] sm:$0xf]
                %244 = vst [vmem:[%s218 + $0x30] sm:$0xf] %v243
                %v245 = vld [vmem:[%s217 + $0x68] sm:$0xf]
                %246 = vst [vmem:[%s218 + $0x34] sm:$0xf] %v245
                %v247 = vld [vmem:[%s217 + $0x70] sm:$0xf]
                %248 = vst [vmem:[%s218 + $0x38] sm:$0xf] %v247
                %v249 = vld [vmem:[%s217 + $0x78] sm:$0xf]
                %250 = vst [vmem:[%s218 + $0x3c] sm:$0xf] %v249
              $region49: #{graph_autoencoder.15} parent=43 // loop_footer
                %s216 = sadd.s32 1, %s212
              $region50: #{graph_autoencoder.15} parent=43 // loop_footer_branch
                %211 = sbr.rel target = $region46
              $region51: #{graph_autoencoder.15} parent=43 // loop_exit
                _
            $region44: #{graph_autoencoder.15} parent=35 // pred_fallthru
              _
          $region36: #{graph_autoencoder.15} parent=31 // pred_fallthru
            _
          %302 = vnop
        $region32: #{graph_autoencoder.15} parent=19 // pred_fallthru
          _
      $region20: #{graph_autoencoder.15} parent=5 // pred_fallthru
        _
      %p303 = scmp.le.s32.totalorder 1, %s13
      %p304 = scmp.lt.s32.totalorder %s13, 5
      %p305 = pnand %p303, %p304
      %p306 = pneg %p305
      // Predicated region
      $region70: #{graph_autoencoder.15} parent=5 // pred_check
        _
      $region71: #{graph_autoencoder.15} parent=5 // pred_check_branch
        %308 = sbr.rel (%p305) target = $region73
      $region72: #{graph_autoencoder.15} parent=5 // pred_region
        %s309 = ssub.s32 %s13, 1
        %s310 = sand.u32 %s92, 1
        %s311 = sand.u32 %s92, 1
        %s312 = smul.addr %s311, 64
        %s313 = scalar_lea.vmem [#allocation5], %s312
        // Predicated region
        $region74: #{graph_autoencoder.15} parent=72 // pred_check
          %p314 = pneg %p105
        $region75: #{graph_autoencoder.15} parent=72 // pred_check_branch
          %316 = sbr.rel (%p314) target = $region77
        $region76: #{graph_autoencoder.15} parent=72 // pred_region
          _
        $region77: #{graph_autoencoder.15} parent=72 // pred_fallthru
          _
        %s317 = smul.u32 16, %s22
        %p318 = scmp.lt.s32.totalorder %s317, 31
        %s319 = scalar_select %p318, %s317, 31
        %s320 = smul.addr %s319, 4
        %s321 = scalar_lea.vmem %s0, %s320
        %p322 = pneg %p51
        %p323 = pneg %p48
        %s324 = smul.u32 16, %s23
        %p325 = scmp.lt.s32.totalorder %s324, 31
        %s326 = scalar_select %p325, %s324, 31
        %s327 = smul.addr %s326, 4
        %s328 = scalar_lea.vmem %s1, %s327
        %p329 = pneg %p77
        %p330 = pneg %p74
        %s331 = sand.u32 %s92, 1
        %s332 = sand.u32 %s92, 1
        %s333 = smul.addr %s332, 64
        %s334 = scalar_lea.vmem [#allocation5], %s333
        %p335 = pneg %p105
        %p336 = pneg %p102
        %p337 = pneg %p126
        %p338 = pneg %p123
        %p339 = pneg %p152
        %p340 = pneg %p149
        %s341 = sand.u32 %s139, 1
        %s342 = scalar_lea.sflag [#allocation7], %s341
        %s343 = sand.u32 %s139, 1
        %s344 = smul.addr %s343, 128
        %s345 = scalar_lea.vmem [#allocation6], %s344
        %s346 = smul.u32 16, %s22
        %p347 = scmp.lt.s32.totalorder %s346, 31
        %s348 = scalar_select %p347, %s346, 31
        %s349 = smul.addr %s348, 4
        %s350 = scalar_lea.vmem %s0, %s349
        %s351 = smul.u32 16, %s22
        %s352 = smul.u32 16, %s23
        %p353 = scmp.lt.s32.totalorder %s352, 31
        %s354 = scalar_select %p353, %s352, 31
        %s355 = smul.addr %s354, 4
        %s356 = scalar_lea.vmem %s1, %s355
        %s357 = smul.u32 16, %s23
        %s358 = smul.u32 16, %s22
        %s359 = smul.u32 16, %s22
        %p361 = scmp.eq.s32.totalorder %s23, 0
        // Predicated region
        $region78: #{graph_autoencoder.15} parent=72 // pred_check
          %p362 = pneg %p361
        $region79: #{graph_autoencoder.15} parent=72 // pred_check_branch
          %364 = sbr.rel (%p362) target = $region81
        $region80: #{graph_autoencoder.15} parent=72 // pred_region
          %vm365 = vcmask 7168
          %366 = vst.msk [vmem:[#allocation2] sm:$0xff] %vm365, -1e+30
          %367 = vst.msk [vmem:[#allocation2 + $0x8] sm:$0xff] %vm365, -1e+30
          %368 = vst.msk [vmem:[#allocation2 + $0x10] sm:$0xff] %vm365, -1e+30
          %369 = vst.msk [vmem:[#allocation2 + $0x18] sm:$0xff] %vm365, -1e+30
          %370 = vst.msk [vmem:[#allocation2 + $0x20] sm:$0xff] %vm365, -1e+30
          %371 = vst.msk [vmem:[#allocation2 + $0x28] sm:$0xff] %vm365, -1e+30
          %372 = vst.msk [vmem:[#allocation2 + $0x30] sm:$0xff] %vm365, -1e+30
          %373 = vst.msk [vmem:[#allocation2 + $0x38] sm:$0xff] %vm365, -1e+30
          %374 = vst.msk [vmem:[#allocation2 + $0x40] sm:$0xff] %vm365, -1e+30
          %375 = vst.msk [vmem:[#allocation2 + $0x48] sm:$0xff] %vm365, -1e+30
          %376 = vst.msk [vmem:[#allocation2 + $0x50] sm:$0xff] %vm365, -1e+30
          %377 = vst.msk [vmem:[#allocation2 + $0x58] sm:$0xff] %vm365, -1e+30
          %378 = vst.msk [vmem:[#allocation2 + $0x60] sm:$0xff] %vm365, -1e+30
          %379 = vst.msk [vmem:[#allocation2 + $0x68] sm:$0xff] %vm365, -1e+30
          %380 = vst.msk [vmem:[#allocation2 + $0x70] sm:$0xff] %vm365, -1e+30
          %381 = vst.msk [vmem:[#allocation2 + $0x78] sm:$0xff] %vm365, -1e+30
          %382 = vst.msk [vmem:[#allocation3] sm:$0xff] %vm365, 0.0
          %383 = vst.msk [vmem:[#allocation3 + $0x8] sm:$0xff] %vm365, 0.0
          %384 = vst.msk [vmem:[#allocation3 + $0x10] sm:$0xff] %vm365, 0.0
          %385 = vst.msk [vmem:[#allocation3 + $0x18] sm:$0xff] %vm365, 0.0
          %386 = vst.msk [vmem:[#allocation3 + $0x20] sm:$0xff] %vm365, 0.0
          %387 = vst.msk [vmem:[#allocation3 + $0x28] sm:$0xff] %vm365, 0.0
          %388 = vst.msk [vmem:[#allocation3 + $0x30] sm:$0xff] %vm365, 0.0
          %389 = vst.msk [vmem:[#allocation3 + $0x38] sm:$0xff] %vm365, 0.0
          %390 = vst.msk [vmem:[#allocation3 + $0x40] sm:$0xff] %vm365, 0.0
          %391 = vst.msk [vmem:[#allocation3 + $0x48] sm:$0xff] %vm365, 0.0
          %392 = vst.msk [vmem:[#allocation3 + $0x50] sm:$0xff] %vm365, 0.0
          %393 = vst.msk [vmem:[#allocation3 + $0x58] sm:$0xff] %vm365, 0.0
          %394 = vst.msk [vmem:[#allocation3 + $0x60] sm:$0xff] %vm365, 0.0
          %395 = vst.msk [vmem:[#allocation3 + $0x68] sm:$0xff] %vm365, 0.0
          %396 = vst.msk [vmem:[#allocation3 + $0x70] sm:$0xff] %vm365, 0.0
          %397 = vst.msk [vmem:[#allocation3 + $0x78] sm:$0xff] %vm365, 0.0
          %398 = vst [vmem:[#allocation4] sm:$0xff] 0.0
          %399 = vst [vmem:[#allocation4 + $0x8] sm:$0xff] 0.0
          %400 = vst [vmem:[#allocation4 + $0x10] sm:$0xff] 0.0
          %401 = vst [vmem:[#allocation4 + $0x18] sm:$0xff] 0.0
          %402 = vst [vmem:[#allocation4 + $0x20] sm:$0xff] 0.0
          %403 = vst [vmem:[#allocation4 + $0x28] sm:$0xff] 0.0
          %404 = vst [vmem:[#allocation4 + $0x30] sm:$0xff] 0.0
          %405 = vst [vmem:[#allocation4 + $0x38] sm:$0xff] 0.0
          %406 = vst [vmem:[#allocation4 + $0x40] sm:$0xff] 0.0
          %407 = vst [vmem:[#allocation4 + $0x48] sm:$0xff] 0.0
          %408 = vst [vmem:[#allocation4 + $0x50] sm:$0xff] 0.0
          %409 = vst [vmem:[#allocation4 + $0x58] sm:$0xff] 0.0
          %410 = vst [vmem:[#allocation4 + $0x60] sm:$0xff] 0.0
          %411 = vst [vmem:[#allocation4 + $0x68] sm:$0xff] 0.0
          %412 = vst [vmem:[#allocation4 + $0x70] sm:$0xff] 0.0
          %413 = vst [vmem:[#allocation4 + $0x78] sm:$0xff] 0.0
        $region81: #{graph_autoencoder.15} parent=72 // pred_fallthru
          _
        %v414 = vld [vmem:[%s350] sm:$0xf]
        %v415 = vld [vmem:[%s350 + $0x4] sm:$0xf]
        %v416 = vld [vmem:[%s350 + $0x8] sm:$0xf]
        %v417 = vld [vmem:[%s350 + $0xc] sm:$0xf]
        %v418 = vld [vmem:[%s350 + $0x10] sm:$0xf]
        %v419 = vld [vmem:[%s350 + $0x14] sm:$0xf]
        %v420 = vld [vmem:[%s350 + $0x18] sm:$0xf]
        %v421 = vld [vmem:[%s350 + $0x1c] sm:$0xf]
        %v422 = vld [vmem:[%s350 + $0x20] sm:$0xf]
        %v423 = vld [vmem:[%s350 + $0x24] sm:$0xf]
        %v424 = vld [vmem:[%s350 + $0x28] sm:$0xf]
        %v425 = vld [vmem:[%s350 + $0x2c] sm:$0xf]
        %v426 = vld [vmem:[%s350 + $0x30] sm:$0xf]
        %v427 = vld [vmem:[%s350 + $0x34] sm:$0xf]
        %v428 = vld [vmem:[%s350 + $0x38] sm:$0xf]
        %v429 = vld [vmem:[%s350 + $0x3c] sm:$0xf]
        %v430 = vld [vmem:[%s356] sm:$0xf]
        %v431 = vld [vmem:[%s356 + $0x4] sm:$0xf]
        %v432 = vld [vmem:[%s356 + $0x8] sm:$0xf]
        %v433 = vld [vmem:[%s356 + $0xc] sm:$0xf]
        %v434 = vld [vmem:[%s356 + $0x10] sm:$0xf]
        %v435 = vld [vmem:[%s356 + $0x14] sm:$0xf]
        %v436 = vld [vmem:[%s356 + $0x18] sm:$0xf]
        %v437 = vld [vmem:[%s356 + $0x1c] sm:$0xf]
        %v438 = vld [vmem:[%s356 + $0x20] sm:$0xf]
        %v439 = vld [vmem:[%s356 + $0x24] sm:$0xf]
        %v440 = vld [vmem:[%s356 + $0x28] sm:$0xf]
        %v441 = vld [vmem:[%s356 + $0x2c] sm:$0xf]
        %v442 = vld [vmem:[%s356 + $0x30] sm:$0xf]
        %v443 = vld [vmem:[%s356 + $0x34] sm:$0xf]
        %v444 = vld [vmem:[%s356 + $0x38] sm:$0xf]
        %v445 = vld [vmem:[%s356 + $0x3c] sm:$0xf]
        %v446 = vld [vmem:[%s3] sm:$0x1]
        %v447 = vld [vmem:[%s3 + $0x1] sm:$0x1]
        %v448 = vunpack.c.l.bf16 %v414
        %v449 = vunpack.c.l.bf16 %v415
        %v450 = vunpack.c.l.bf16 %v416
        %v451 = vunpack.c.l.bf16 %v417
        %v452 = vunpack.c.l.bf16 %v418
        %v453 = vunpack.c.l.bf16 %v419
        %v454 = vunpack.c.l.bf16 %v420
        %v455 = vunpack.c.l.bf16 %v421
        %v456 = vunpack.c.l.bf16 %v422
        %v457 = vunpack.c.l.bf16 %v423
        %v458 = vunpack.c.l.bf16 %v424
        %v459 = vunpack.c.l.bf16 %v425
        %v460 = vunpack.c.l.bf16 %v426
        %v461 = vunpack.c.l.bf16 %v427
        %v462 = vunpack.c.l.bf16 %v428
        %v463 = vunpack.c.l.bf16 %v429
        %v464 = vlaneseq
        %v465 = vshrl.u32 %v464, 7
        %v466 = vsub.s32 0, %v465
        %v467 = vrot.slane %v446, %v466
        %v468 = vmul.f32 %v448, %v467
        %v469 = vmul.f32 %v449, %v467
        %v470 = vmul.f32 %v450, %v467
        %v471 = vmul.f32 %v451, %v467
        %v472 = vmul.f32 %v452, %v467
        %v473 = vmul.f32 %v453, %v467
        %v474 = vmul.f32 %v454, %v467
        %v475 = vmul.f32 %v455, %v467
        %v476 = vmul.f32 %v456, %v467
        %v477 = vmul.f32 %v457, %v467
        %v478 = vmul.f32 %v458, %v467
        %v479 = vmul.f32 %v459, %v467
        %v480 = vmul.f32 %v460, %v467
        %v481 = vmul.f32 %v461, %v467
        %v482 = vmul.f32 %v462, %v467
        %v483 = vmul.f32 %v463, %v467
        %484 = vadd.xlane.f32.xlu0 %v468
        %v485 = vpop.xlane.xlu0 %484
        %486 = vadd.xlane.f32.xlu0 %v469
        %v487 = vpop.xlane.xlu0 %486
        %488 = vadd.xlane.f32.xlu0 %v470
        %v489 = vpop.xlane.xlu0 %488
        %490 = vadd.xlane.f32.xlu0 %v471
        %v491 = vpop.xlane.xlu0 %490
        %492 = vadd.xlane.f32.xlu0 %v472
        %v493 = vpop.xlane.xlu0 %492
        %494 = vadd.xlane.f32.xlu0 %v473
        %v495 = vpop.xlane.xlu0 %494
        %496 = vadd.xlane.f32.xlu0 %v474
        %v497 = vpop.xlane.xlu0 %496
        %498 = vadd.xlane.f32.xlu0 %v475
        %v499 = vpop.xlane.xlu0 %498
        %500 = vadd.xlane.f32.xlu0 %v476
        %v501 = vpop.xlane.xlu0 %500
        %502 = vadd.xlane.f32.xlu0 %v477
        %v503 = vpop.xlane.xlu0 %502
        %504 = vadd.xlane.f32.xlu0 %v478
        %v505 = vpop.xlane.xlu0 %504
        %506 = vadd.xlane.f32.xlu0 %v479
        %v507 = vpop.xlane.xlu0 %506
        %508 = vadd.xlane.f32.xlu0 %v480
        %v509 = vpop.xlane.xlu0 %508
        %510 = vadd.xlane.f32.xlu0 %v481
        %v511 = vpop.xlane.xlu0 %510
        %512 = vadd.xlane.f32.xlu0 %v482
        %v513 = vpop.xlane.xlu0 %512
        %514 = vadd.xlane.f32.xlu0 %v483
        %v515 = vpop.xlane.xlu0 %514
        %v516 = vpack.c.bf16 %v447, %v447
        %v533 = vunpack.c.l.b16 %v430
        %v534 = vunpack.c.l.b16 %v431
        %v535 = vunpack.c.l.b16 %v432
        %v536 = vunpack.c.l.b16 %v433
        %v537 = vunpack.c.l.b16 %v434
        %v538 = vunpack.c.l.b16 %v435
        %v539 = vunpack.c.l.b16 %v436
        %v540 = vunpack.c.l.b16 %v437
        %v541 = vunpack.c.l.b16 %v438
        %v542 = vunpack.c.l.b16 %v439
        %v543 = vunpack.c.l.b16 %v440
        %v544 = vunpack.c.l.b16 %v441
        %v545 = vunpack.c.l.b16 %v442
        %v546 = vunpack.c.l.b16 %v443
        %v547 = vunpack.c.l.b16 %v444
        %v548 = vunpack.c.l.b16 %v445
        %v549 = vpack.c.b16 %v534, %v533
        %v550 = vpack.c.b16 %v536, %v535
        %v551 = vpack.c.b16 %v538, %v537
        %v552 = vpack.c.b16 %v540, %v539
        %v553 = vpack.c.b16 %v542, %v541
        %v554 = vpack.c.b16 %v544, %v543
        %v555 = vpack.c.b16 %v546, %v545
        %v556 = vpack.c.b16 %v548, %v547
        %565 = vmatprep.subr.bf16.mxu0 0
        %566 = vmatpush1.bf16.xpose.msra.mxu0 %v549
        %567 = vmatprep.subr.bf16.mxu0 0
        %568 = vmatpush1.bf16.xpose.msra.mxu0 %v550
        %569 = vmatprep.subr.bf16.mxu0 0
        %570 = vmatpush1.bf16.xpose.msra.mxu0 %v551
        %571 = vmatprep.subr.bf16.mxu0 0
        %572 = vmatpush1.bf16.xpose.msra.mxu0 %v552
        %573 = vmatprep.subr.bf16.mxu0 0
        %574 = vmatpush1.bf16.xpose.msra.mxu0 %v553
        %575 = vmatprep.subr.bf16.mxu0 0
        %576 = vmatpush1.bf16.xpose.msra.mxu0 %v554
        %577 = vmatprep.subr.bf16.mxu0 0
        %578 = vmatpush1.bf16.xpose.msra.mxu0 %v555
        %579 = vmatprep.subr.bf16.mxu0 0
        %580 = vmatpush1.bf16.xpose.msra.mxu0 %v556
        %581 = vmatprep.subr.bf16.mxu0 0
        %582 = vmatpush1.bf16.xpose.msra.mxu0 0
        %583 = vmatprep.subr.bf16.mxu0 0
        %584 = vmatpush1.bf16.xpose.msra.mxu0 0
        %585 = vmatprep.subr.bf16.mxu0 0
        %586 = vmatpush1.bf16.xpose.msra.mxu0 0
        %587 = vmatprep.subr.bf16.mxu0 0
        %588 = vmatpush1.bf16.xpose.msra.mxu0 0
        %589 = vmatprep.subr.bf16.mxu0 0
        %590 = vmatpush1.bf16.xpose.msra.mxu0 0
        %591 = vmatprep.subr.bf16.mxu0 0
        %592 = vmatpush1.bf16.xpose.msra.mxu0 0
        %593 = vmatprep.subr.bf16.mxu0 0
        %594 = vmatpush1.bf16.xpose.msra.mxu0 0
        %595 = vmatprep.subr.bf16.mxu0 0
        %596 = vmatpush1.bf16.xpose.msra.mxu0 0
        %597 = vmatprep.mubr.bf16.mxu0 0
        %598 = vmatmul.mubr.bf16.gmra.mrb[0].mxu0 %v516
        %v599 = vpop.f32.mrb[0].mxu0
        %v600 = vadd.f32 0.0, %v599
        %v601 = vpop.f32.mrb[0].mxu0
        %v602 = vpop.f32.mrb[0].mxu0
        %v603 = vpop.f32.mrb[0].mxu0
        %604 = vdwg.mxu0
        %v605 = vlaneseq
        %v606 = vshrl.u32 %v605, 7
        %v607 = vsub.s32 0, %v606
        %v608 = vrot.slane %v600, %v607
        %v609 = vadd.f32 %v485, %v608
        %v610 = vadd.f32 %v487, %v608
        %v611 = vadd.f32 %v489, %v608
        %v612 = vadd.f32 %v491, %v608
        %v613 = vadd.f32 %v493, %v608
        %v614 = vadd.f32 %v495, %v608
        %v615 = vadd.f32 %v497, %v608
        %v616 = vadd.f32 %v499, %v608
        %v617 = vadd.f32 %v501, %v608
        %v618 = vadd.f32 %v503, %v608
        %v619 = vadd.f32 %v505, %v608
        %v620 = vadd.f32 %v507, %v608
        %v621 = vadd.f32 %v509, %v608
        %v622 = vadd.f32 %v511, %v608
        %v623 = vadd.f32 %v513, %v608
        %v624 = vadd.f32 %v515, %v608
        %vm625 = vcmp.ge.f32.partialorder %v609, 0.0
        %vm626 = vcmp.ge.f32.partialorder %v610, 0.0
        %vm627 = vcmp.ge.f32.partialorder %v611, 0.0
        %vm628 = vcmp.ge.f32.partialorder %v612, 0.0
        %vm629 = vcmp.ge.f32.partialorder %v613, 0.0
        %vm630 = vcmp.ge.f32.partialorder %v614, 0.0
        %vm631 = vcmp.ge.f32.partialorder %v615, 0.0
        %vm632 = vcmp.ge.f32.partialorder %v616, 0.0
        %vm633 = vcmp.ge.f32.partialorder %v617, 0.0
        %vm634 = vcmp.ge.f32.partialorder %v618, 0.0
        %vm635 = vcmp.ge.f32.partialorder %v619, 0.0
        %vm636 = vcmp.ge.f32.partialorder %v620, 0.0
        %vm637 = vcmp.ge.f32.partialorder %v621, 0.0
        %vm638 = vcmp.ge.f32.partialorder %v622, 0.0
        %vm639 = vcmp.ge.f32.partialorder %v623, 0.0
        %vm640 = vcmp.ge.f32.partialorder %v624, 0.0
        %v641 = vmul.f32 %v609, 0.2
        %v642 = vmul.f32 %v610, 0.2
        %v643 = vmul.f32 %v611, 0.2
        %v644 = vmul.f32 %v612, 0.2
        %v645 = vmul.f32 %v613, 0.2
        %v646 = vmul.f32 %v614, 0.2
        %v647 = vmul.f32 %v615, 0.2
        %v648 = vmul.f32 %v616, 0.2
        %v649 = vmul.f32 %v617, 0.2
        %v650 = vmul.f32 %v618, 0.2
        %v651 = vmul.f32 %v619, 0.2
        %v652 = vmul.f32 %v620, 0.2
        %v653 = vmul.f32 %v621, 0.2
        %v654 = vmul.f32 %v622, 0.2
        %v655 = vmul.f32 %v623, 0.2
        %v656 = vmul.f32 %v624, 0.2
        %v657 = vsel %vm625, %v609, %v641
        %v658 = vsel %vm626, %v610, %v642
        %v659 = vsel %vm627, %v611, %v643
        %v660 = vsel %vm628, %v612, %v644
        %v661 = vsel %vm629, %v613, %v645
        %v662 = vsel %vm630, %v614, %v646
        %v663 = vsel %vm631, %v615, %v647
        %v664 = vsel %vm632, %v616, %v648
        %v665 = vsel %vm633, %v617, %v649
        %v666 = vsel %vm634, %v618, %v650
        %v667 = vsel %vm635, %v619, %v651
        %v668 = vsel %vm636, %v620, %v652
        %v669 = vsel %vm637, %v621, %v653
        %v670 = vsel %vm638, %v622, %v654
        %v671 = vsel %vm639, %v623, %v655
        %v672 = vsel %vm640, %v624, %v656
        %v673 = vld [vmem:[#allocation2] sm:$0xff]
        %v674 = vld [vmem:[#allocation2 + $0x8] sm:$0xff]
        %v675 = vld [vmem:[#allocation2 + $0x10] sm:$0xff]
        %v676 = vld [vmem:[#allocation2 + $0x18] sm:$0xff]
        %v677 = vld [vmem:[#allocation2 + $0x20] sm:$0xff]
        %v678 = vld [vmem:[#allocation2 + $0x28] sm:$0xff]
        %v679 = vld [vmem:[#allocation2 + $0x30] sm:$0xff]
        %v680 = vld [vmem:[#allocation2 + $0x38] sm:$0xff]
        %v681 = vld [vmem:[#allocation2 + $0x40] sm:$0xff]
        %v682 = vld [vmem:[#allocation2 + $0x48] sm:$0xff]
        %v683 = vld [vmem:[#allocation2 + $0x50] sm:$0xff]
        %v684 = vld [vmem:[#allocation2 + $0x58] sm:$0xff]
        %v685 = vld [vmem:[#allocation2 + $0x60] sm:$0xff]
        %v686 = vld [vmem:[#allocation2 + $0x68] sm:$0xff]
        %v687 = vld [vmem:[#allocation2 + $0x70] sm:$0xff]
        %v688 = vld [vmem:[#allocation2 + $0x78] sm:$0xff]
        %689 = vmax.xlane.f32.xlu0 %v657
        %v690 = vpop.xlane.xlu0 %689
        %691 = vmax.xlane.f32.xlu0 %v658
        %v692 = vpop.xlane.xlu0 %691
        %693 = vmax.xlane.f32.xlu0 %v659
        %v694 = vpop.xlane.xlu0 %693
        %695 = vmax.xlane.f32.xlu0 %v660
        %v696 = vpop.xlane.xlu0 %695
        %697 = vmax.xlane.f32.xlu0 %v661
        %v698 = vpop.xlane.xlu0 %697
        %699 = vmax.xlane.f32.xlu0 %v662
        %v700 = vpop.xlane.xlu0 %699
        %701 = vmax.xlane.f32.xlu0 %v663
        %v702 = vpop.xlane.xlu0 %701
        %703 = vmax.xlane.f32.xlu0 %v664
        %v704 = vpop.xlane.xlu0 %703
        %705 = vmax.xlane.f32.xlu0 %v665
        %v706 = vpop.xlane.xlu0 %705
        %707 = vmax.xlane.f32.xlu0 %v666
        %v708 = vpop.xlane.xlu0 %707
        %709 = vmax.xlane.f32.xlu0 %v667
        %v710 = vpop.xlane.xlu0 %709
        %711 = vmax.xlane.f32.xlu0 %v668
        %v712 = vpop.xlane.xlu0 %711
        %713 = vmax.xlane.f32.xlu0 %v669
        %v714 = vpop.xlane.xlu0 %713
        %715 = vmax.xlane.f32.xlu0 %v670
        %v716 = vpop.xlane.xlu0 %715
        %717 = vmax.xlane.f32.xlu0 %v671
        %v718 = vpop.xlane.xlu0 %717
        %719 = vmax.xlane.f32.xlu0 %v672
        %v720 = vpop.xlane.xlu0 %719
        %v721 = vmax.f32 %v673, %v690
        %v722 = vmax.f32 %v674, %v692
        %v723 = vmax.f32 %v675, %v694
        %v724 = vmax.f32 %v676, %v696
        %v725 = vmax.f32 %v677, %v698
        %v726 = vmax.f32 %v678, %v700
        %v727 = vmax.f32 %v679, %v702
        %v728 = vmax.f32 %v680, %v704
        %v729 = vmax.f32 %v681, %v706
        %v730 = vmax.f32 %v682, %v708
        %v731 = vmax.f32 %v683, %v710
        %v732 = vmax.f32 %v684, %v712
        %v733 = vmax.f32 %v685, %v714
        %v734 = vmax.f32 %v686, %v716
        %v735 = vmax.f32 %v687, %v718
        %v736 = vmax.f32 %v688, %v720
        %v737 = vsub.f32 %v673, %v721
        %v738 = vsub.f32 %v674, %v722
        %v739 = vsub.f32 %v675, %v723
        %v740 = vsub.f32 %v676, %v724
        %v741 = vsub.f32 %v677, %v725
        %v742 = vsub.f32 %v678, %v726
        %v743 = vsub.f32 %v679, %v727
        %v744 = vsub.f32 %v680, %v728
        %v745 = vsub.f32 %v681, %v729
        %v746 = vsub.f32 %v682, %v730
        %v747 = vsub.f32 %v683, %v731
        %v748 = vsub.f32 %v684, %v732
        %v749 = vsub.f32 %v685, %v733
        %v750 = vsub.f32 %v686, %v734
        %v751 = vsub.f32 %v687, %v735
        %v752 = vsub.f32 %v688, %v736
        %v753 = vmul.f32 %v737, 1.442695
        %v754 = vpow.pop %v753
        %v755 = vmul.f32 %v738, 1.442695
        %v756 = vpow.pop %v755
        %v757 = vmul.f32 %v739, 1.442695
        %v758 = vpow.pop %v757
        %v759 = vmul.f32 %v740, 1.442695
        %v760 = vpow.pop %v759
        %v761 = vmul.f32 %v741, 1.442695
        %v762 = vpow.pop %v761
        %v763 = vmul.f32 %v742, 1.442695
        %v764 = vpow.pop %v763
        %v765 = vmul.f32 %v743, 1.442695
        %v766 = vpow.pop %v765
        %v767 = vmul.f32 %v744, 1.442695
        %v768 = vpow.pop %v767
        %v769 = vmul.f32 %v745, 1.442695
        %v770 = vpow.pop %v769
        %v771 = vmul.f32 %v746, 1.442695
        %v772 = vpow.pop %v771
        %v773 = vmul.f32 %v747, 1.442695
        %v774 = vpow.pop %v773
        %v775 = vmul.f32 %v748, 1.442695
        %v776 = vpow.pop %v775
        %v777 = vmul.f32 %v749, 1.442695
        %v778 = vpow.pop %v777
        %v779 = vmul.f32 %v750, 1.442695
        %v780 = vpow.pop %v779
        %v781 = vmul.f32 %v751, 1.442695
        %v782 = vpow.pop %v781
        %v783 = vmul.f32 %v752, 1.442695
        %v784 = vpow.pop %v783
        %786 = vset.pattern.permute.xlu0 0
        %787 = vperm.xlu0 %786, %v721
        %v788 = vpop.permute.xlu0 %787
        %791 = vset.pattern.permute.xlu0 0
        %792 = vperm.xlu0 %791, %v722
        %v793 = vpop.permute.xlu0 %792
        %796 = vset.pattern.permute.xlu0 0
        %797 = vperm.xlu0 %796, %v723
        %v798 = vpop.permute.xlu0 %797
        %801 = vset.pattern.permute.xlu0 0
        %802 = vperm.xlu0 %801, %v724
        %v803 = vpop.permute.xlu0 %802
        %806 = vset.pattern.permute.xlu0 0
        %807 = vperm.xlu0 %806, %v725
        %v808 = vpop.permute.xlu0 %807
        %811 = vset.pattern.permute.xlu0 0
        %812 = vperm.xlu0 %811, %v726
        %v813 = vpop.permute.xlu0 %812
        %816 = vset.pattern.permute.xlu0 0
        %817 = vperm.xlu0 %816, %v727
        %v818 = vpop.permute.xlu0 %817
        %821 = vset.pattern.permute.xlu0 0
        %822 = vperm.xlu0 %821, %v728
        %v823 = vpop.permute.xlu0 %822
        %826 = vset.pattern.permute.xlu0 0
        %827 = vperm.xlu0 %826, %v729
        %v828 = vpop.permute.xlu0 %827
        %831 = vset.pattern.permute.xlu0 0
        %832 = vperm.xlu0 %831, %v730
        %v833 = vpop.permute.xlu0 %832
        %836 = vset.pattern.permute.xlu0 0
        %837 = vperm.xlu0 %836, %v731
        %v838 = vpop.permute.xlu0 %837
        %841 = vset.pattern.permute.xlu0 0
        %842 = vperm.xlu0 %841, %v732
        %v843 = vpop.permute.xlu0 %842
        %846 = vset.pattern.permute.xlu0 0
        %847 = vperm.xlu0 %846, %v733
        %v848 = vpop.permute.xlu0 %847
        %851 = vset.pattern.permute.xlu0 0
        %852 = vperm.xlu0 %851, %v734
        %v853 = vpop.permute.xlu0 %852
        %856 = vset.pattern.permute.xlu0 0
        %857 = vperm.xlu0 %856, %v735
        %v858 = vpop.permute.xlu0 %857
        %861 = vset.pattern.permute.xlu0 0
        %862 = vperm.xlu0 %861, %v736
        %v863 = vpop.permute.xlu0 %862
        %v865 = vsub.f32 %v657, %v788
        %v866 = vsub.f32 %v658, %v793
        %v867 = vsub.f32 %v659, %v798
        %v868 = vsub.f32 %v660, %v803
        %v869 = vsub.f32 %v661, %v808
        %v870 = vsub.f32 %v662, %v813
        %v871 = vsub.f32 %v663, %v818
        %v872 = vsub.f32 %v664, %v823
        %v873 = vsub.f32 %v665, %v828
        %v874 = vsub.f32 %v666, %v833
        %v875 = vsub.f32 %v667, %v838
        %v876 = vsub.f32 %v668, %v843
        %v877 = vsub.f32 %v669, %v848
        %v878 = vsub.f32 %v670, %v853
        %v879 = vsub.f32 %v671, %v858
        %v880 = vsub.f32 %v672, %v863
        %v881 = vmul.f32 %v865, 1.442695
        %v882 = vpow.pop %v881
        %v883 = vmul.f32 %v866, 1.442695
        %v884 = vpow.pop %v883
        %v885 = vmul.f32 %v867, 1.442695
        %v886 = vpow.pop %v885
        %v887 = vmul.f32 %v868, 1.442695
        %v888 = vpow.pop %v887
        %v889 = vmul.f32 %v869, 1.442695
        %v890 = vpow.pop %v889
        %v891 = vmul.f32 %v870, 1.442695
        %v892 = vpow.pop %v891
        %v893 = vmul.f32 %v871, 1.442695
        %v894 = vpow.pop %v893
        %v895 = vmul.f32 %v872, 1.442695
        %v896 = vpow.pop %v895
        %v897 = vmul.f32 %v873, 1.442695
        %v898 = vpow.pop %v897
        %v899 = vmul.f32 %v874, 1.442695
        %v900 = vpow.pop %v899
        %v901 = vmul.f32 %v875, 1.442695
        %v902 = vpow.pop %v901
        %v903 = vmul.f32 %v876, 1.442695
        %v904 = vpow.pop %v903
        %v905 = vmul.f32 %v877, 1.442695
        %v906 = vpow.pop %v905
        %v907 = vmul.f32 %v878, 1.442695
        %v908 = vpow.pop %v907
        %v909 = vmul.f32 %v879, 1.442695
        %v910 = vpow.pop %v909
        %v911 = vmul.f32 %v880, 1.442695
        %v912 = vpow.pop %v911
        %v913 = vld [vmem:[%s313] sm:$0xf]
        %v914 = vld [vmem:[%s313 + $0x4] sm:$0xf]
        %v915 = vld [vmem:[%s313 + $0x8] sm:$0xf]
        %v916 = vld [vmem:[%s313 + $0xc] sm:$0xf]
        %v917 = vld [vmem:[%s313 + $0x10] sm:$0xf]
        %v918 = vld [vmem:[%s313 + $0x14] sm:$0xf]
        %v919 = vld [vmem:[%s313 + $0x18] sm:$0xf]
        %v920 = vld [vmem:[%s313 + $0x1c] sm:$0xf]
        %v921 = vld [vmem:[%s313 + $0x20] sm:$0xf]
        %v922 = vld [vmem:[%s313 + $0x24] sm:$0xf]
        %v923 = vld [vmem:[%s313 + $0x28] sm:$0xf]
        %v924 = vld [vmem:[%s313 + $0x2c] sm:$0xf]
        %v925 = vld [vmem:[%s313 + $0x30] sm:$0xf]
        %v926 = vld [vmem:[%s313 + $0x34] sm:$0xf]
        %v927 = vld [vmem:[%s313 + $0x38] sm:$0xf]
        %v928 = vld [vmem:[%s313 + $0x3c] sm:$0xf]
        %v929 = vunpack.c.l.bf16 %v913
        %v930 = vunpack.c.l.bf16 %v914
        %v931 = vunpack.c.l.bf16 %v915
        %v932 = vunpack.c.l.bf16 %v916
        %v933 = vunpack.c.l.bf16 %v917
        %v934 = vunpack.c.l.bf16 %v918
        %v935 = vunpack.c.l.bf16 %v919
        %v936 = vunpack.c.l.bf16 %v920
        %v937 = vunpack.c.l.bf16 %v921
        %v938 = vunpack.c.l.bf16 %v922
        %v939 = vunpack.c.l.bf16 %v923
        %v940 = vunpack.c.l.bf16 %v924
        %v941 = vunpack.c.l.bf16 %v925
        %v942 = vunpack.c.l.bf16 %v926
        %v943 = vunpack.c.l.bf16 %v927
        %v944 = vunpack.c.l.bf16 %v928
        %v945 = vmul.f32 %v882, %v929
        %v946 = vmul.f32 %v884, %v930
        %v947 = vmul.f32 %v886, %v931
        %v948 = vmul.f32 %v888, %v932
        %v949 = vmul.f32 %v890, %v933
        %v950 = vmul.f32 %v892, %v934
        %v951 = vmul.f32 %v894, %v935
        %v952 = vmul.f32 %v896, %v936
        %v953 = vmul.f32 %v898, %v937
        %v954 = vmul.f32 %v900, %v938
        %v955 = vmul.f32 %v902, %v939
        %v956 = vmul.f32 %v904, %v940
        %v957 = vmul.f32 %v906, %v941
        %v958 = vmul.f32 %v908, %v942
        %v959 = vmul.f32 %v910, %v943
        %v960 = vmul.f32 %v912, %v944
        %v961 = vld [vmem:[#allocation3] sm:$0xff]
        %v962 = vld [vmem:[#allocation3 + $0x8] sm:$0xff]
        %v963 = vld [vmem:[#allocation3 + $0x10] sm:$0xff]
        %v964 = vld [vmem:[#allocation3 + $0x18] sm:$0xff]
        %v965 = vld [vmem:[#allocation3 + $0x20] sm:$0xff]
        %v966 = vld [vmem:[#allocation3 + $0x28] sm:$0xff]
        %v967 = vld [vmem:[#allocation3 + $0x30] sm:$0xff]
        %v968 = vld [vmem:[#allocation3 + $0x38] sm:$0xff]
        %v969 = vld [vmem:[#allocation3 + $0x40] sm:$0xff]
        %v970 = vld [vmem:[#allocation3 + $0x48] sm:$0xff]
        %v971 = vld [vmem:[#allocation3 + $0x50] sm:$0xff]
        %v972 = vld [vmem:[#allocation3 + $0x58] sm:$0xff]
        %v973 = vld [vmem:[#allocation3 + $0x60] sm:$0xff]
        %v974 = vld [vmem:[#allocation3 + $0x68] sm:$0xff]
        %v975 = vld [vmem:[#allocation3 + $0x70] sm:$0xff]
        %v976 = vld [vmem:[#allocation3 + $0x78] sm:$0xff]
        %v977 = vmul.f32 %v754, %v961
        %v978 = vmul.f32 %v756, %v962
        %v979 = vmul.f32 %v758, %v963
        %v980 = vmul.f32 %v760, %v964
        %v981 = vmul.f32 %v762, %v965
        %v982 = vmul.f32 %v764, %v966
        %v983 = vmul.f32 %v766, %v967
        %v984 = vmul.f32 %v768, %v968
        %v985 = vmul.f32 %v770, %v969
        %v986 = vmul.f32 %v772, %v970
        %v987 = vmul.f32 %v774, %v971
        %v988 = vmul.f32 %v776, %v972
        %v989 = vmul.f32 %v778, %v973
        %v990 = vmul.f32 %v780, %v974
        %v991 = vmul.f32 %v782, %v975
        %v992 = vmul.f32 %v784, %v976
        %993 = vadd.xlane.f32.xlu0 %v945
        %v994 = vpop.xlane.xlu0 %993
        %995 = vadd.xlane.f32.xlu0 %v946
        %v996 = vpop.xlane.xlu0 %995
        %997 = vadd.xlane.f32.xlu0 %v947
        %v998 = vpop.xlane.xlu0 %997
        %999 = vadd.xlane.f32.xlu0 %v948
        %v1000 = vpop.xlane.xlu0 %999
        %1001 = vadd.xlane.f32.xlu0 %v949
        %v1002 = vpop.xlane.xlu0 %1001
        %1003 = vadd.xlane.f32.xlu0 %v950
        %v1004 = vpop.xlane.xlu0 %1003
        %1005 = vadd.xlane.f32.xlu0 %v951
        %v1006 = vpop.xlane.xlu0 %1005
        %1007 = vadd.xlane.f32.xlu0 %v952
        %v1008 = vpop.xlane.xlu0 %1007
        %1009 = vadd.xlane.f32.xlu0 %v953
        %v1010 = vpop.xlane.xlu0 %1009
        %1011 = vadd.xlane.f32.xlu0 %v954
        %v1012 = vpop.xlane.xlu0 %1011
        %1013 = vadd.xlane.f32.xlu0 %v955
        %v1014 = vpop.xlane.xlu0 %1013
        %1015 = vadd.xlane.f32.xlu0 %v956
        %v1016 = vpop.xlane.xlu0 %1015
        %1017 = vadd.xlane.f32.xlu0 %v957
        %v1018 = vpop.xlane.xlu0 %1017
        %1019 = vadd.xlane.f32.xlu0 %v958
        %v1020 = vpop.xlane.xlu0 %1019
        %1021 = vadd.xlane.f32.xlu0 %v959
        %v1022 = vpop.xlane.xlu0 %1021
        %1023 = vadd.xlane.f32.xlu0 %v960
        %v1024 = vpop.xlane.xlu0 %1023
        %v1025 = vadd.f32 %v977, %v994
        %v1026 = vadd.f32 %v978, %v996
        %v1027 = vadd.f32 %v979, %v998
        %v1028 = vadd.f32 %v980, %v1000
        %v1029 = vadd.f32 %v981, %v1002
        %v1030 = vadd.f32 %v982, %v1004
        %v1031 = vadd.f32 %v983, %v1006
        %v1032 = vadd.f32 %v984, %v1008
        %v1033 = vadd.f32 %v985, %v1010
        %v1034 = vadd.f32 %v986, %v1012
        %v1035 = vadd.f32 %v987, %v1014
        %v1036 = vadd.f32 %v988, %v1016
        %v1037 = vadd.f32 %v989, %v1018
        %v1038 = vadd.f32 %v990, %v1020
        %v1039 = vadd.f32 %v991, %v1022
        %v1040 = vadd.f32 %v992, %v1024
        %vm1041 = vcmask 7168
        %1042 = vst.msk [vmem:[#allocation3] sm:$0xff] %vm1041, %v1025
        %1043 = vst.msk [vmem:[#allocation3 + $0x8] sm:$0xff] %vm1041, %v1026
        %1044 = vst.msk [vmem:[#allocation3 + $0x10] sm:$0xff] %vm1041, %v1027
        %1045 = vst.msk [vmem:[#allocation3 + $0x18] sm:$0xff] %vm1041, %v1028
        %1046 = vst.msk [vmem:[#allocation3 + $0x20] sm:$0xff] %vm1041, %v1029
        %1047 = vst.msk [vmem:[#allocation3 + $0x28] sm:$0xff] %vm1041, %v1030
        %1048 = vst.msk [vmem:[#allocation3 + $0x30] sm:$0xff] %vm1041, %v1031
        %1049 = vst.msk [vmem:[#allocation3 + $0x38] sm:$0xff] %vm1041, %v1032
        %1050 = vst.msk [vmem:[#allocation3 + $0x40] sm:$0xff] %vm1041, %v1033
        %1051 = vst.msk [vmem:[#allocation3 + $0x48] sm:$0xff] %vm1041, %v1034
        %1052 = vst.msk [vmem:[#allocation3 + $0x50] sm:$0xff] %vm1041, %v1035
        %1053 = vst.msk [vmem:[#allocation3 + $0x58] sm:$0xff] %vm1041, %v1036
        %1054 = vst.msk [vmem:[#allocation3 + $0x60] sm:$0xff] %vm1041, %v1037
        %1055 = vst.msk [vmem:[#allocation3 + $0x68] sm:$0xff] %vm1041, %v1038
        %1056 = vst.msk [vmem:[#allocation3 + $0x70] sm:$0xff] %vm1041, %v1039
        %1057 = vst.msk [vmem:[#allocation3 + $0x78] sm:$0xff] %vm1041, %v1040
        %v1058 = vld [vmem:[#allocation4] sm:$0xff]
        %v1059 = vld [vmem:[#allocation4 + $0x8] sm:$0xff]
        %v1060 = vld [vmem:[#allocation4 + $0x10] sm:$0xff]
        %v1061 = vld [vmem:[#allocation4 + $0x18] sm:$0xff]
        %v1062 = vld [vmem:[#allocation4 + $0x20] sm:$0xff]
        %v1063 = vld [vmem:[#allocation4 + $0x28] sm:$0xff]
        %v1064 = vld [vmem:[#allocation4 + $0x30] sm:$0xff]
        %v1065 = vld [vmem:[#allocation4 + $0x38] sm:$0xff]
        %v1066 = vld [vmem:[#allocation4 + $0x40] sm:$0xff]
        %v1067 = vld [vmem:[#allocation4 + $0x48] sm:$0xff]
        %v1068 = vld [vmem:[#allocation4 + $0x50] sm:$0xff]
        %v1069 = vld [vmem:[#allocation4 + $0x58] sm:$0xff]
        %v1070 = vld [vmem:[#allocation4 + $0x60] sm:$0xff]
        %v1071 = vld [vmem:[#allocation4 + $0x68] sm:$0xff]
        %v1072 = vld [vmem:[#allocation4 + $0x70] sm:$0xff]
        %v1073 = vld [vmem:[#allocation4 + $0x78] sm:$0xff]
        %1075 = vset.pattern.permute.xlu0 0
        %1076 = vperm.xlu0 %1075, %v754
        %v1077 = vpop.permute.xlu0 %1076
        %1080 = vset.pattern.permute.xlu0 0
        %1081 = vperm.xlu0 %1080, %v756
        %v1082 = vpop.permute.xlu0 %1081
        %1085 = vset.pattern.permute.xlu0 0
        %1086 = vperm.xlu0 %1085, %v758
        %v1087 = vpop.permute.xlu0 %1086
        %1090 = vset.pattern.permute.xlu0 0
        %1091 = vperm.xlu0 %1090, %v760
        %v1092 = vpop.permute.xlu0 %1091
        %1095 = vset.pattern.permute.xlu0 0
        %1096 = vperm.xlu0 %1095, %v762
        %v1097 = vpop.permute.xlu0 %1096
        %1100 = vset.pattern.permute.xlu0 0
        %1101 = vperm.xlu0 %1100, %v764
        %v1102 = vpop.permute.xlu0 %1101
        %1105 = vset.pattern.permute.xlu0 0
        %1106 = vperm.xlu0 %1105, %v766
        %v1107 = vpop.permute.xlu0 %1106
        %1110 = vset.pattern.permute.xlu0 0
        %1111 = vperm.xlu0 %1110, %v768
        %v1112 = vpop.permute.xlu0 %1111
        %1115 = vset.pattern.permute.xlu0 0
        %1116 = vperm.xlu0 %1115, %v770
        %v1117 = vpop.permute.xlu0 %1116
        %1120 = vset.pattern.permute.xlu0 0
        %1121 = vperm.xlu0 %1120, %v772
        %v1122 = vpop.permute.xlu0 %1121
        %1125 = vset.pattern.permute.xlu0 0
        %1126 = vperm.xlu0 %1125, %v774
        %v1127 = vpop.permute.xlu0 %1126
        %1130 = vset.pattern.permute.xlu0 0
        %1131 = vperm.xlu0 %1130, %v776
        %v1132 = vpop.permute.xlu0 %1131
        %1135 = vset.pattern.permute.xlu0 0
        %1136 = vperm.xlu0 %1135, %v778
        %v1137 = vpop.permute.xlu0 %1136
        %1140 = vset.pattern.permute.xlu0 0
        %1141 = vperm.xlu0 %1140, %v780
        %v1142 = vpop.permute.xlu0 %1141
        %1145 = vset.pattern.permute.xlu0 0
        %1146 = vperm.xlu0 %1145, %v782
        %v1147 = vpop.permute.xlu0 %1146
        %1150 = vset.pattern.permute.xlu0 0
        %1151 = vperm.xlu0 %1150, %v784
        %v1152 = vpop.permute.xlu0 %1151
        %v1154 = vmul.f32 %v1077, %v1058
        %v1155 = vmul.f32 %v1082, %v1059
        %v1156 = vmul.f32 %v1087, %v1060
        %v1157 = vmul.f32 %v1092, %v1061
        %v1158 = vmul.f32 %v1097, %v1062
        %v1159 = vmul.f32 %v1102, %v1063
        %v1160 = vmul.f32 %v1107, %v1064
        %v1161 = vmul.f32 %v1112, %v1065
        %v1162 = vmul.f32 %v1117, %v1066
        %v1163 = vmul.f32 %v1122, %v1067
        %v1164 = vmul.f32 %v1127, %v1068
        %v1165 = vmul.f32 %v1132, %v1069
        %v1166 = vmul.f32 %v1137, %v1070
        %v1167 = vmul.f32 %v1142, %v1071
        %v1168 = vmul.f32 %v1147, %v1072
        %v1169 = vmul.f32 %v1152, %v1073
        %v1170 = vpack.c.bf16 %v946, %v945
        %v1171 = vpack.c.bf16 %v948, %v947
        %v1172 = vpack.c.bf16 %v950, %v949
        %v1173 = vpack.c.bf16 %v952, %v951
        %v1174 = vpack.c.bf16 %v954, %v953
        %v1175 = vpack.c.bf16 %v956, %v955
        %v1176 = vpack.c.bf16 %v958, %v957
        %v1177 = vpack.c.bf16 %v960, %v959
        %1178 = vmatprep.subr.bf16.mxu0 0
        %1179 = vmatpush1.bf16.msra.mxu0 %v549
        %1180 = vmatprep.subr.bf16.mxu0 0
        %1181 = vmatpush1.bf16.msra.mxu0 %v550
        %1182 = vmatprep.subr.bf16.mxu0 0
        %1183 = vmatpush1.bf16.msra.mxu0 %v551
        %1184 = vmatprep.subr.bf16.mxu0 0
        %1185 = vmatpush1.bf16.msra.mxu0 %v552
        %1186 = vmatprep.subr.bf16.mxu0 0
        %1187 = vmatpush1.bf16.msra.mxu0 %v553
        %1188 = vmatprep.subr.bf16.mxu0 0
        %1189 = vmatpush1.bf16.msra.mxu0 %v554
        %1190 = vmatprep.subr.bf16.mxu0 0
        %1191 = vmatpush1.bf16.msra.mxu0 %v555
        %1192 = vmatprep.subr.bf16.mxu0 0
        %1193 = vmatpush1.bf16.msra.mxu0 %v556
        %1194 = vmatprep.subr.bf16.mxu0 0
        %1195 = vmatpush1.bf16.msra.mxu0 0
        %1196 = vmatprep.subr.bf16.mxu0 0
        %1197 = vmatpush1.bf16.msra.mxu0 0
        %1198 = vmatprep.subr.bf16.mxu0 0
        %1199 = vmatpush1.bf16.msra.mxu0 0
        %1200 = vmatprep.subr.bf16.mxu0 0
        %1201 = vmatpush1.bf16.msra.mxu0 0
        %1202 = vmatprep.subr.bf16.mxu0 0
        %1203 = vmatpush1.bf16.msra.mxu0 0
        %1204 = vmatprep.subr.bf16.mxu0 0
        %1205 = vmatpush1.bf16.msra.mxu0 0
        %1206 = vmatprep.subr.bf16.mxu0 0
        %1207 = vmatpush1.bf16.msra.mxu0 0
        %1208 = vmatprep.subr.bf16.mxu0 0
        %1209 = vmatpush1.bf16.msra.mxu0 0
        %1210 = vmatprep.mubr.bf16.mxu0 0
        %1211 = vmatmul.mubr.bf16.gmra.mrb[0].mxu0 %v1170
        %v1212 = vpop.f32.mrb[0].mxu0
        %v1213 = vadd.f32 0.0, %v1212
        %v1214 = vpop.f32.mrb[0].mxu0
        %v1215 = vpop.f32.mrb[0].mxu0
        %v1216 = vadd.f32 0.0, %v1215
        %v1217 = vpop.f32.mrb[0].mxu0
        %1218 = vmatprep.mubr.bf16.mxu0 0
        %1219 = vmatmul.mubr.bf16.gmra.mrb[0].mxu0 %v1171
        %v1220 = vpop.f32.mrb[0].mxu0
        %v1221 = vadd.f32 0.0, %v1220
        %v1222 = vpop.f32.mrb[0].mxu0
        %v1223 = vpop.f32.mrb[0].mxu0
        %v1224 = vadd.f32 0.0, %v1223
        %v1225 = vpop.f32.mrb[0].mxu0
        %1226 = vmatprep.mubr.bf16.mxu0 0
        %1227 = vmatmul.mubr.bf16.gmra.mrb[0].mxu0 %v1172
        %v1228 = vpop.f32.mrb[0].mxu0
        %v1229 = vadd.f32 0.0, %v1228
        %v1230 = vpop.f32.mrb[0].mxu0
        %v1231 = vpop.f32.mrb[0].mxu0
        %v1232 = vadd.f32 0.0, %v1231
        %v1233 = vpop.f32.mrb[0].mxu0
        %1234 = vmatprep.mubr.bf16.mxu0 0
        %1235 = vmatmul.mubr.bf16.gmra.mrb[0].mxu0 %v1173
        %v1236 = vpop.f32.mrb[0].mxu0
        %v1237 = vadd.f32 0.0, %v1236
        %v1238 = vpop.f32.mrb[0].mxu0
        %v1239 = vpop.f32.mrb[0].mxu0
        %v1240 = vadd.f32 0.0, %v1239
        %v1241 = vpop.f32.mrb[0].mxu0
        %1242 = vmatprep.mubr.bf16.mxu0 0
        %1243 = vmatmul.mubr.bf16.gmra.mrb[0].mxu0 %v1174
        %v1244 = vpop.f32.mrb[0].mxu0
        %v1245 = vadd.f32 0.0, %v1244
        %v1246 = vpop.f32.mrb[0].mxu0
        %v1247 = vpop.f32.mrb[0].mxu0
        %v1248 = vadd.f32 0.0, %v1247
        %v1249 = vpop.f32.mrb[0].mxu0
        %1250 = vmatprep.mubr.bf16.mxu0 0
        %1251 = vmatmul.mubr.bf16.gmra.mrb[0].mxu0 %v1175
        %v1252 = vpop.f32.mrb[0].mxu0
        %v1253 = vadd.f32 0.0, %v1252
        %v1254 = vpop.f32.mrb[0].mxu0
        %v1255 = vpop.f32.mrb[0].mxu0
        %v1256 = vadd.f32 0.0, %v1255
        %v1257 = vpop.f32.mrb[0].mxu0
        %1258 = vmatprep.mubr.bf16.mxu0 0
        %1259 = vmatmul.mubr.bf16.gmra.mrb[0].mxu0 %v1176
        %v1260 = vpop.f32.mrb[0].mxu0
        %v1261 = vadd.f32 0.0, %v1260
        %v1262 = vpop.f32.mrb[0].mxu0
        %v1263 = vpop.f32.mrb[0].mxu0
        %v1264 = vadd.f32 0.0, %v1263
        %v1265 = vpop.f32.mrb[0].mxu0
        %1266 = vmatprep.mubr.bf16.mxu0 0
        %1267 = vmatmul.mubr.bf16.gmra.mrb[0].mxu0 %v1177
        %v1268 = vpop.f32.mrb[0].mxu0
        %v1269 = vadd.f32 0.0, %v1268
        %v1270 = vpop.f32.mrb[0].mxu0
        %v1271 = vpop.f32.mrb[0].mxu0
        %v1272 = vadd.f32 0.0, %v1271
        %v1273 = vpop.f32.mrb[0].mxu0
        %1274 = vdwg.mxu0
        %v1275 = vadd.f32 %v1154, %v1213
        %v1276 = vadd.f32 %v1155, %v1216
        %v1277 = vadd.f32 %v1156, %v1221
        %v1278 = vadd.f32 %v1157, %v1224
        %v1279 = vadd.f32 %v1158, %v1229
        %v1280 = vadd.f32 %v1159, %v1232
        %v1281 = vadd.f32 %v1160, %v1237
        %v1282 = vadd.f32 %v1161, %v1240
        %v1283 = vadd.f32 %v1162, %v1245
        %v1284 = vadd.f32 %v1163, %v1248
        %v1285 = vadd.f32 %v1164, %v1253
        %v1286 = vadd.f32 %v1165, %v1256
        %v1287 = vadd.f32 %v1166, %v1261
        %v1288 = vadd.f32 %v1167, %v1264
        %v1289 = vadd.f32 %v1168, %v1269
        %v1290 = vadd.f32 %v1169, %v1272
        %1291 = vst [vmem:[#allocation4] sm:$0xff] %v1275
        %1292 = vst [vmem:[#allocation4 + $0x8] sm:$0xff] %v1276
        %1293 = vst [vmem:[#allocation4 + $0x10] sm:$0xff] %v1277
        %1294 = vst [vmem:[#allocation4 + $0x18] sm:$0xff] %v1278
        %1295 = vst [vmem:[#allocation4 + $0x20] sm:$0xff] %v1279
        %1296 = vst [vmem:[#allocation4 + $0x28] sm:$0xff] %v1280
        %1297 = vst [vmem:[#allocation4 + $0x30] sm:$0xff] %v1281
        %1298 = vst [vmem:[#allocation4 + $0x38] sm:$0xff] %v1282
        %1299 = vst [vmem:[#allocation4 + $0x40] sm:$0xff] %v1283
        %1300 = vst [vmem:[#allocation4 + $0x48] sm:$0xff] %v1284
        %1301 = vst [vmem:[#allocation4 + $0x50] sm:$0xff] %v1285
        %1302 = vst [vmem:[#allocation4 + $0x58] sm:$0xff] %v1286
        %1303 = vst [vmem:[#allocation4 + $0x60] sm:$0xff] %v1287
        %1304 = vst [vmem:[#allocation4 + $0x68] sm:$0xff] %v1288
        %1305 = vst [vmem:[#allocation4 + $0x70] sm:$0xff] %v1289
        %1306 = vst [vmem:[#allocation4 + $0x78] sm:$0xff] %v1290
        %1307 = vst.msk [vmem:[#allocation2] sm:$0xff] %vm1041, %v721
        %1308 = vst.msk [vmem:[#allocation2 + $0x8] sm:$0xff] %vm1041, %v722
        %1309 = vst.msk [vmem:[#allocation2 + $0x10] sm:$0xff] %vm1041, %v723
        %1310 = vst.msk [vmem:[#allocation2 + $0x18] sm:$0xff] %vm1041, %v724
        %1311 = vst.msk [vmem:[#allocation2 + $0x20] sm:$0xff] %vm1041, %v725
        %1312 = vst.msk [vmem:[#allocation2 + $0x28] sm:$0xff] %vm1041, %v726
        %1313 = vst.msk [vmem:[#allocation2 + $0x30] sm:$0xff] %vm1041, %v727
        %1314 = vst.msk [vmem:[#allocation2 + $0x38] sm:$0xff] %vm1041, %v728
        %1315 = vst.msk [vmem:[#allocation2 + $0x40] sm:$0xff] %vm1041, %v729
        %1316 = vst.msk [vmem:[#allocation2 + $0x48] sm:$0xff] %vm1041, %v730
        %1317 = vst.msk [vmem:[#allocation2 + $0x50] sm:$0xff] %vm1041, %v731
        %1318 = vst.msk [vmem:[#allocation2 + $0x58] sm:$0xff] %vm1041, %v732
        %1319 = vst.msk [vmem:[#allocation2 + $0x60] sm:$0xff] %vm1041, %v733
        %1320 = vst.msk [vmem:[#allocation2 + $0x68] sm:$0xff] %vm1041, %v734
        %1321 = vst.msk [vmem:[#allocation2 + $0x70] sm:$0xff] %vm1041, %v735
        %1322 = vst.msk [vmem:[#allocation2 + $0x78] sm:$0xff] %vm1041, %v736
        %p1323 = scmp.eq.s32.totalorder %s23, 1
        // Predicated region
        $region82: #{graph_autoencoder.15} parent=72 // pred_check
          %p1324 = pneg %p1323
        $region83: #{graph_autoencoder.15} parent=72 // pred_check_branch
          %1326 = sbr.rel (%p1324) target = $region85
        $region84: #{graph_autoencoder.15} parent=72 // pred_region
          %v1327 = vld [vmem:[%s3 + $0x2] sm:$0x1]
          %v1328 = vld [vmem:[#allocation4] sm:$0xff]
          %v1329 = vld [vmem:[#allocation4 + $0x8] sm:$0xff]
          %v1330 = vld [vmem:[#allocation4 + $0x10] sm:$0xff]
          %v1331 = vld [vmem:[#allocation4 + $0x18] sm:$0xff]
          %v1332 = vld [vmem:[#allocation4 + $0x20] sm:$0xff]
          %v1333 = vld [vmem:[#allocation4 + $0x28] sm:$0xff]
          %v1334 = vld [vmem:[#allocation4 + $0x30] sm:$0xff]
          %v1335 = vld [vmem:[#allocation4 + $0x38] sm:$0xff]
          %v1336 = vld [vmem:[#allocation4 + $0x40] sm:$0xff]
          %v1337 = vld [vmem:[#allocation4 + $0x48] sm:$0xff]
          %v1338 = vld [vmem:[#allocation4 + $0x50] sm:$0xff]
          %v1339 = vld [vmem:[#allocation4 + $0x58] sm:$0xff]
          %v1340 = vld [vmem:[#allocation4 + $0x60] sm:$0xff]
          %v1341 = vld [vmem:[#allocation4 + $0x68] sm:$0xff]
          %v1342 = vld [vmem:[#allocation4 + $0x70] sm:$0xff]
          %v1343 = vld [vmem:[#allocation4 + $0x78] sm:$0xff]
          %v1344 = vld [vmem:[#allocation3] sm:$0xff]
          %v1345 = vld [vmem:[#allocation3 + $0x8] sm:$0xff]
          %v1346 = vld [vmem:[#allocation3 + $0x10] sm:$0xff]
          %v1347 = vld [vmem:[#allocation3 + $0x18] sm:$0xff]
          %v1348 = vld [vmem:[#allocation3 + $0x20] sm:$0xff]
          %v1349 = vld [vmem:[#allocation3 + $0x28] sm:$0xff]
          %v1350 = vld [vmem:[#allocation3 + $0x30] sm:$0xff]
          %v1351 = vld [vmem:[#allocation3 + $0x38] sm:$0xff]
          %v1352 = vld [vmem:[#allocation3 + $0x40] sm:$0xff]
          %v1353 = vld [vmem:[#allocation3 + $0x48] sm:$0xff]
          %v1354 = vld [vmem:[#allocation3 + $0x50] sm:$0xff]
          %v1355 = vld [vmem:[#allocation3 + $0x58] sm:$0xff]
          %v1356 = vld [vmem:[#allocation3 + $0x60] sm:$0xff]
          %v1357 = vld [vmem:[#allocation3 + $0x68] sm:$0xff]
          %v1358 = vld [vmem:[#allocation3 + $0x70] sm:$0xff]
          %v1359 = vld [vmem:[#allocation3 + $0x78] sm:$0xff]
          %v1360 = vrcp.pop %v1344
          %v1361 = vrcp.pop %v1345
          %v1362 = vrcp.pop %v1346
          %v1363 = vrcp.pop %v1347
          %v1364 = vrcp.pop %v1348
          %v1365 = vrcp.pop %v1349
          %v1366 = vrcp.pop %v1350
          %v1367 = vrcp.pop %v1351
          %v1368 = vrcp.pop %v1352
          %v1369 = vrcp.pop %v1353
          %v1370 = vrcp.pop %v1354
          %v1371 = vrcp.pop %v1355
          %v1372 = vrcp.pop %v1356
          %v1373 = vrcp.pop %v1357
          %v1374 = vrcp.pop %v1358
          %v1375 = vrcp.pop %v1359
          %1377 = vset.pattern.permute.xlu0 0
          %1378 = vperm.xlu0 %1377, %v1360
          %v1379 = vpop.permute.xlu0 %1378
          %1382 = vset.pattern.permute.xlu0 0
          %1383 = vperm.xlu0 %1382, %v1361
          %v1384 = vpop.permute.xlu0 %1383
          %1387 = vset.pattern.permute.xlu0 0
          %1388 = vperm.xlu0 %1387, %v1362
          %v1389 = vpop.permute.xlu0 %1388
          %1392 = vset.pattern.permute.xlu0 0
          %1393 = vperm.xlu0 %1392, %v1363
          %v1394 = vpop.permute.xlu0 %1393
          %1397 = vset.pattern.permute.xlu0 0
          %1398 = vperm.xlu0 %1397, %v1364
          %v1399 = vpop.permute.xlu0 %1398
          %1402 = vset.pattern.permute.xlu0 0
          %1403 = vperm.xlu0 %1402, %v1365
          %v1404 = vpop.permute.xlu0 %1403
          %1407 = vset.pattern.permute.xlu0 0
          %1408 = vperm.xlu0 %1407, %v1366
          %v1409 = vpop.permute.xlu0 %1408
          %1412 = vset.pattern.permute.xlu0 0
          %1413 = vperm.xlu0 %1412, %v1367
          %v1414 = vpop.permute.xlu0 %1413
          %1417 = vset.pattern.permute.xlu0 0
          %1418 = vperm.xlu0 %1417, %v1368
          %v1419 = vpop.permute.xlu0 %1418
          %1422 = vset.pattern.permute.xlu0 0
          %1423 = vperm.xlu0 %1422, %v1369
          %v1424 = vpop.permute.xlu0 %1423
          %1427 = vset.pattern.permute.xlu0 0
          %1428 = vperm.xlu0 %1427, %v1370
          %v1429 = vpop.permute.xlu0 %1428
          %1432 = vset.pattern.permute.xlu0 0
          %1433 = vperm.xlu0 %1432, %v1371
          %v1434 = vpop.permute.xlu0 %1433
          %1437 = vset.pattern.permute.xlu0 0
          %1438 = vperm.xlu0 %1437, %v1372
          %v1439 = vpop.permute.xlu0 %1438
          %1442 = vset.pattern.permute.xlu0 0
          %1443 = vperm.xlu0 %1442, %v1373
          %v1444 = vpop.permute.xlu0 %1443
          %1447 = vset.pattern.permute.xlu0 0
          %1448 = vperm.xlu0 %1447, %v1374
          %v1449 = vpop.permute.xlu0 %1448
          %1452 = vset.pattern.permute.xlu0 0
          %1453 = vperm.xlu0 %1452, %v1375
          %v1454 = vpop.permute.xlu0 %1453
          %v1456 = vmul.f32 %v1328, %v1379
          %v1457 = vmul.f32 %v1329, %v1384
          %v1458 = vmul.f32 %v1330, %v1389
          %v1459 = vmul.f32 %v1331, %v1394
          %v1460 = vmul.f32 %v1332, %v1399
          %v1461 = vmul.f32 %v1333, %v1404
          %v1462 = vmul.f32 %v1334, %v1409
          %v1463 = vmul.f32 %v1335, %v1414
          %v1464 = vmul.f32 %v1336, %v1419
          %v1465 = vmul.f32 %v1337, %v1424
          %v1466 = vmul.f32 %v1338, %v1429
          %v1467 = vmul.f32 %v1339, %v1434
          %v1468 = vmul.f32 %v1340, %v1439
          %v1469 = vmul.f32 %v1341, %v1444
          %v1470 = vmul.f32 %v1342, %v1449
          %v1471 = vmul.f32 %v1343, %v1454
          %v1472 = vlaneseq
          %v1473 = vshrl.u32 %v1472, 7
          %v1474 = vsub.s32 0, %v1473
          %v1475 = vrot.slane %v1327, %v1474
          %v1476 = vadd.f32 %v1456, %v1475
          %v1477 = vadd.f32 %v1457, %v1475
          %v1478 = vadd.f32 %v1458, %v1475
          %v1479 = vadd.f32 %v1459, %v1475
          %v1480 = vadd.f32 %v1460, %v1475
          %v1481 = vadd.f32 %v1461, %v1475
          %v1482 = vadd.f32 %v1462, %v1475
          %v1483 = vadd.f32 %v1463, %v1475
          %v1484 = vadd.f32 %v1464, %v1475
          %v1485 = vadd.f32 %v1465, %v1475
          %v1486 = vadd.f32 %v1466, %v1475
          %v1487 = vadd.f32 %v1467, %v1475
          %v1488 = vadd.f32 %v1468, %v1475
          %v1489 = vadd.f32 %v1469, %v1475
          %v1490 = vadd.f32 %v1470, %v1475
          %v1491 = vadd.f32 %v1471, %v1475
          %1492 = vst [vmem:[%s345] sm:$0xff] %v1476
          %1493 = vst [vmem:[%s345 + $0x8] sm:$0xff] %v1477
          %1494 = vst [vmem:[%s345 + $0x10] sm:$0xff] %v1478
          %1495 = vst [vmem:[%s345 + $0x18] sm:$0xff] %v1479
          %1496 = vst [vmem:[%s345 + $0x20] sm:$0xff] %v1480
          %1497 = vst [vmem:[%s345 + $0x28] sm:$0xff] %v1481
          %1498 = vst [vmem:[%s345 + $0x30] sm:$0xff] %v1482
          %1499 = vst [vmem:[%s345 + $0x38] sm:$0xff] %v1483
          %1500 = vst [vmem:[%s345 + $0x40] sm:$0xff] %v1484
          %1501 = vst [vmem:[%s345 + $0x48] sm:$0xff] %v1485
          %1502 = vst [vmem:[%s345 + $0x50] sm:$0xff] %v1486
          %1503 = vst [vmem:[%s345 + $0x58] sm:$0xff] %v1487
          %1504 = vst [vmem:[%s345 + $0x60] sm:$0xff] %v1488
          %1505 = vst [vmem:[%s345 + $0x68] sm:$0xff] %v1489
          %1506 = vst [vmem:[%s345 + $0x70] sm:$0xff] %v1490
          %1507 = vst [vmem:[%s345 + $0x78] sm:$0xff] %v1491
        $region85: #{graph_autoencoder.15} parent=72 // pred_fallthru
          _
        %s1508 = sand.u32 %s139, 1
        %s1509 = scalar_lea.sflag [#allocation7], %s1508
        %s1510 = sand.u32 %s139, 1
        %s1511 = smul.addr %s1510, 128
        %s1512 = scalar_lea.vmem [#allocation6], %s1511
        // Predicated region
        $region86: #{graph_autoencoder.15} parent=72 // pred_check
          %p1513 = pneg %p149
        $region87: #{graph_autoencoder.15} parent=72 // pred_check_branch
          %1515 = sbr.rel (%p1513) target = $region89
        $region88: #{graph_autoencoder.15} parent=72 // pred_region
          %s1516 = smul.u32 16, %s22
          %s1518 = ssub.s32 2048, 2048
          %1519 = vsyncadd %s1509, %s1518
          %s1520 = smul.addr %s1516, 128
          %s1521 = scalar_lea.hbm %s4, %s1520
          %s1522 = sshll.u32 %s1512, 4
          %s1523 = int_to_ptr.vmem [resolvable:$true] %s1522
          %1528 = dma.vmem_to_hbm [thread:$0]  %s1523, 2048, %s1521, %s1509, 128, 128, 8
        $region89: #{graph_autoencoder.15} parent=72 // pred_fallthru
          _
      $region73: #{graph_autoencoder.15} parent=5 // pred_fallthru
        _
      %p1529 = scmp.le.s32.totalorder 2, %s13
      // Predicated region
      $region90: #{graph_autoencoder.15} parent=5 // pred_check
        %p1530 = pneg %p1529
      $region91: #{graph_autoencoder.15} parent=5 // pred_check_branch
        %1532 = sbr.rel (%p1530) target = $region93
      $region92: #{graph_autoencoder.15} parent=5 // pred_region
        %s1533 = ssub.s32 %s13, 2
        // Predicated region
        $region94: #{graph_autoencoder.15} parent=92 // pred_check
          %p1534 = pneg %p155
        $region95: #{graph_autoencoder.15} parent=92 // pred_check_branch
          %1536 = sbr.rel (%p1534) target = $region97
        $region96: #{graph_autoencoder.15} parent=92 // pred_region
          %s1537 = sand.u32 %s140, 1
          %s1538 = scalar_lea.sflag [#allocation7], %s1537
          %s1539 = sand.u32 %s140, 1
          %s1540 = smul.addr %s1539, 128
          %s1541 = scalar_lea.vmem [#allocation6], %s1540
          %1542 = dma.done %s1538, 2048
        $region97: #{graph_autoencoder.15} parent=92 // pred_fallthru
          _
      $region93: #{graph_autoencoder.15} parent=5 // pred_fallthru
        _
    $region6: #{graph_autoencoder.15} parent=1 // loop_footer
      %s17 = sadd.s32 1, %s13
    $region7: #{graph_autoencoder.15} parent=1 // loop_footer_branch
      %12 = sbr.rel target = $region3
    $region8: #{graph_autoencoder.15} parent=1 // loop_exit
      _
    %1543 = vsyncpa [#allocation7], 1
    %s1544 = scalar_lea.sflag [#allocation7], 1
    %1545 = vsyncpa %s1544, 1

</llo_original>
